<compile_context>
chip_gen: v7x
topology: tpu7x:2x2x1
jax: 0.10.0
libtpu: 0.0.40
codegen_flags: <defaults>
</compile_context>

<pallas_src>
import functools

import jax
import jax.numpy as jnp
from jax.experimental import pallas as pl
from jax.experimental.pallas import tpu as pltpu

HIDDEN = 64                 # GRU hidden size per direction
GATE = 128                  # each gate padded to one full 128-lane tile
NGATES = 3                  # r | z | n  (PyTorch gate order)
GW = NGATES * GATE          # fused (padded) gate width = 384
ONEHOT_DIM = 22             # implied by F.one_hot(num_classes=22)
SUBLANE = 8                 # f32 sublane tile


def gru_kernel(oh_ref,        # (L*BP, 22)    bf16  time-major one-hot (batch padded)
               wih_f_ref,     # (22, 384)     bf16  fused/padded W_ih^T (fwd)
               whh_f_ref,     # (128, 384)    bf16  fused/padded W_hh^T (fwd)
               bias_f_ref,    # (1, 384)      f32   b_ih + [b_hr, b_hz, 0] (padded)
               bhhn_f_ref,    # (1, 128)      f32   b_hn (fwd, padded)
               wih_r_ref,     # (22, 384)     bf16  fused/padded W_ih^T (rev)
               bias_r_ref,    # (1, 384)      f32
               bhhn_r_ref,    # (1, 128)      f32
               w1_ref,        # (2, 128, 32)  bf16  head Linear1: [0]=fwd half, [1]=rev half
               b1_ref,        # (1, 32)       f32
               w2_ref,        # (32, classes) bf16  head Linear2
               b2_ref,        # (1, classes)  f32
               out_ref,       # (BP, classes) f32
               gx_ref,        # scratch (L*BP, 384) f32
               *, seq_len, bp):
  oh = oh_ref[...]                                             # bf16 one-hot (exact)

  # ---- Hoisted input projection: one MXU pass, b_ih (+ b_hr, b_hz) pre-folded.
  gx_ref[...] = (jnp.dot(oh, wih_f_ref[...], preferred_element_type=jnp.float32)
                 + bias_f_ref[...])

  whh_f = whh_f_ref[...]                                       # hoisted load
  bhhn_f = jnp.broadcast_to(bhhn_f_ref[...], (bp, GATE))       # hoisted broadcast

  # ---- Forward recurrence, fully unrolled.  Only h @ W_hh is serial; with
  # bp == 8 each gx read is a whole-sublane-tile, lane-tile-aligned load and
  # each gate slice below is a free 128-lane vreg selection.
  h = jnp.zeros((bp, GATE), jnp.float32)
  for t in range(seq_len):
    gx_t = gx_ref[t * bp:(t + 1) * bp, :]                      # (BP, 384), aligned
    gh = jnp.dot(h.astype(jnp.bfloat16), whh_f,
                 preferred_element_type=jnp.float32)           # (BP, 384)
    r = jax.nn.sigmoid(gx_t[:, 0:GATE] + gh[:, 0:GATE])
    z = jax.nn.sigmoid(gx_t[:, GATE:2 * GATE] + gh[:, GATE:2 * GATE])
    n = jnp.tanh(gx_t[:, 2 * GATE:] + r * (gh[:, 2 * GATE:] + bhhn_f))
    h = (1.0 - z) * n + z * h                                  # upper 64 lanes stay 0
  h_fwd = h

  # ---- Reverse direction: output at the last time index == one GRU step on
  # x[L-1] from a zero state, so h @ W_hh_rev vanishes (only b_hh_rev survives).
  x_last = oh[(seq_len - 1) * bp:, :]                          # (BP, 22)
  gx_rev = (jnp.dot(x_last, wih_r_ref[...], preferred_element_type=jnp.float32)
            + bias_r_ref[...])                                 # (BP, 384)
  r_r = jax.nn.sigmoid(gx_rev[:, 0:GATE])
  z_r = jax.nn.sigmoid(gx_rev[:, GATE:2 * GATE])
  n_r = jnp.tanh(gx_rev[:, 2 * GATE:]
                 + r_r * jnp.broadcast_to(bhhn_r_ref[...], (bp, GATE)))
  h_rev = (1.0 - z_r) * n_r                                    # + z_r * 0

  # ---- MLP head: Linear(128, 32) -> ReLU -> Linear(32, classes).
  # w1 is split per direction and zero-padded to 128 rows, so the zero upper
  # lanes of h_fwd / h_rev contribute nothing (== concat(h_fwd, h_rev) @ W1^T).
  hid = (jnp.dot(h_fwd.astype(jnp.bfloat16), w1_ref[0],
                 preferred_element_type=jnp.float32)
         + jnp.dot(h_rev.astype(jnp.bfloat16), w1_ref[1],
                   preferred_element_type=jnp.float32)
         + b1_ref[...])
  hid = jnp.maximum(hid, 0.0)
  out_ref[...] = (jnp.dot(hid.astype(jnp.bfloat16), w2_ref[...],
                          preferred_element_type=jnp.float32)
                  + b2_ref[...])


def init_params(key, input_dim, classes):
  """Deterministic synthetic parameters in native PyTorch shapes (gate order r|z|n)."""
  k = 1.0 / jnp.sqrt(jnp.float32(HIDDEN))
  keys = jax.random.split(key, 12)
  u = lambda kk, shape: jax.random.uniform(kk, shape, jnp.float32, -k, k)
  return dict(
      weight_ih_l0=u(keys[0], (3 * HIDDEN, input_dim)),
      weight_hh_l0=u(keys[1], (3 * HIDDEN, HIDDEN)),
      bias_ih_l0=u(keys[2], (3 * HIDDEN,)),
      bias_hh_l0=u(keys[3], (3 * HIDDEN,)),
      weight_ih_l0_reverse=u(keys[4], (3 * HIDDEN, input_dim)),
      weight_hh_l0_reverse=u(keys[5], (3 * HIDDEN, HIDDEN)),  # unused: only r_out[:,-1,:] consumed
      bias_ih_l0_reverse=u(keys[6], (3 * HIDDEN,)),
      bias_hh_l0_reverse=u(keys[7], (3 * HIDDEN,)),
      out0_weight=u(keys[8], (32, 2 * HIDDEN)),
      out0_bias=u(keys[9], (32,)),
      out2_weight=u(keys[10], (classes, 32)),
      out2_bias=u(keys[11], (classes,)),
  )


def _pad_gate_cols(w):
  """(rows, 3*H) gate order r|z|n -> (rows, 3*128): each gate at its own
  128-lane tile, padding lanes zeroed."""
  rows = w.shape[0]
  out = jnp.zeros((rows, GW), w.dtype)
  for g in range(NGATES):
    out = out.at[:, g * GATE:g * GATE + HIDDEN].set(
        w[:, g * HIDDEN:(g + 1) * HIDDEN])
  return out


def _pad_rows(w, rows):
  out = jnp.zeros((rows,) + w.shape[1:], w.dtype)
  return out.at[:w.shape[0]].set(w)


def fuse_params(p):
  """Restack PyTorch-shaped params into the fused / lane-tile-padded kernel layout."""
  H = HIDDEN

  def fuse_dir(wih, whh, bih, bhh):
    wih_cat = _pad_gate_cols(wih.T).astype(jnp.bfloat16)                 # (in, 384)
    whh_cat = _pad_gate_cols(_pad_rows(whh.T, GATE)).astype(jnp.bfloat16)  # (128, 384)
    bias_fold = bih + jnp.concatenate([bhh[:2 * H], jnp.zeros((H,), jnp.float32)])
    bias_pad = _pad_gate_cols(bias_fold[None, :])                        # (1, 384) f32
    bhh_n = jnp.zeros((1, GATE), jnp.float32).at[0, :H].set(bhh[2 * H:])  # (1, 128)
    return wih_cat, whh_cat, bias_pad, bhh_n

  wih_f, whh_f, bias_f, bhhn_f = fuse_dir(p["weight_ih_l0"], p["weight_hh_l0"],
                                          p["bias_ih_l0"], p["bias_hh_l0"])
  # W_hh_reverse is mathematically unused for r_out[:, -1, :] (zero reverse h0).
  wih_r, _unused, bias_r, bhhn_r = fuse_dir(p["weight_ih_l0_reverse"],
                                            p["weight_hh_l0_reverse"],
                                            p["bias_ih_l0_reverse"],
                                            p["bias_hh_l0_reverse"])
  w1t = p["out0_weight"].T                                               # (128, 32)
  w1 = jnp.stack([_pad_rows(w1t[:H], GATE),
                  _pad_rows(w1t[H:], GATE)], axis=0).astype(jnp.bfloat16)  # (2, 128, 32)
  return dict(
      wih_f=wih_f, whh_f=whh_f, bias_f=bias_f, bhhn_f=bhhn_f,
      wih_r=wih_r, bias_r=bias_r, bhhn_r=bhhn_r,
      w1=w1, b1=p["out0_bias"][None, :],
      w2=p["out2_weight"].T.astype(jnp.bfloat16), b2=p["out2_bias"][None, :],
  )


def gru_forward(x, params, classes):
  """x: (B, 1, L) integer token ids (PyTorch NCL layout)."""
  batch, _, seq_len = x.shape
  bp = ((batch + SUBLANE - 1) // SUBLANE) * SUBLANE     # pad batch to sublane tile
  fp = fuse_params(params)

  seq = x[:, 0, :].astype(jnp.int32)                                     # (B, L)
  onehot = jax.nn.one_hot(seq, ONEHOT_DIM, dtype=jnp.bfloat16)           # exact in bf16
  onehot = jnp.transpose(onehot, (1, 0, 2))                              # (L, B, 22)
  onehot = jnp.pad(onehot, ((0, 0), (0, bp - batch), (0, 0)))            # (L, BP, 22)
  oh_flat = onehot.reshape(seq_len * bp, ONEHOT_DIM)                     # time-major

  kernel = functools.partial(gru_kernel, seq_len=seq_len, bp=bp)
  vmem = pl.BlockSpec(memory_space=pltpu.MemorySpace.VMEM)
  args = (oh_flat,
          fp["wih_f"], fp["whh_f"], fp["bias_f"], fp["bhhn_f"],
          fp["wih_r"], fp["bias_r"], fp["bhhn_r"],
          fp["w1"], fp["b1"], fp["w2"], fp["b2"])

  out = pl.pallas_call(
      kernel,
      out_shape=jax.ShapeDtypeStruct((bp, classes), jnp.float32),
      in_specs=[vmem] * len(args),
      out_specs=vmem,
      scratch_shapes=[pltpu.VMEM((seq_len * bp, GW), jnp.float32)],
  )(*args)
  return out[:batch]


def reference_forward(x, p, classes, emulate_bf16=False):
  """Pure-JAX reference matching the PyTorch module semantics.

  With emulate_bf16=True, the MXU-facing operands (W_ih, W_hh, h, head weights
  and activations) are rounded to bf16 exactly as the kernel does, allowing a
  tight-tolerance check.
  """
  batch, _, seq_len = x.shape
  cast = ((lambda a: a.astype(jnp.bfloat16).astype(jnp.float32))
          if emulate_bf16 else (lambda a: a))
  seq = x[:, 0, :].astype(jnp.int32)
  oh = jax.nn.one_hot(seq, ONEHOT_DIM, dtype=jnp.float32)                # (B, L, 22)

  def cell(x_t, h, wih, whh, bih, bhh):
    gi = x_t @ cast(wih).T + bih
    gh = cast(h) @ cast(whh).T + bhh
    i_r, i_z, i_n = jnp.split(gi, 3, axis=-1)
    h_r, h_z, h_n = jnp.split(gh, 3, axis=-1)
    r = jax.nn.sigmoid(i_r + h_r)
    z = jax.nn.sigmoid(i_z + h_z)
    n = jnp.tanh(i_n + r * h_n)
    return (1.0 - z) * n + z * h

  h = jnp.zeros((batch, HIDDEN), jnp.float32)
  for t in range(seq_len):
    h = cell(oh[:, t], h, p["weight_ih_l0"], p["weight_hh_l0"],
             p["bias_ih_l0"], p["bias_hh_l0"])
  h_fwd = h
  # Backward output at the last time index == one cell step from a zero state.
  h0 = jnp.zeros((batch, HIDDEN), jnp.float32)
  h_rev = cell(oh[:, seq_len - 1], h0, p["weight_ih_l0_reverse"],
               p["weight_hh_l0_reverse"], p["bias_ih_l0_reverse"],
               p["bias_hh_l0_reverse"])
  feat = jnp.concatenate([h_fwd, h_rev], axis=-1)                        # (B, 128)
  hid = jnp.maximum(cast(feat) @ cast(p["out0_weight"]).T + p["out0_bias"], 0.0)
  return cast(hid) @ cast(p["out2_weight"]).T + p["out2_bias"]


if __name__ == "__main__":
  key = jax.random.PRNGKey(0)
  k_tok, k_par = jax.random.split(key)

  BATCH, SEQ_LEN, CLASSES = 2, 16, 5
  INPUT_DIM = ONEHOT_DIM  # 22, implied by F.one_hot(num_classes=22)

  # Input: (B, 1, L) integer token ids in [0, 22), PyTorch NCL layout.
  x = jax.random.randint(k_tok, (BATCH, 1, SEQ_LEN), 0, ONEHOT_DIM, dtype=jnp.int32)
  params = init_params(k_par, INPUT_DIM, CLASSES)

  out = jax.block_until_ready(gru_forward(x, params, CLASSES))
  assert out.shape == (BATCH, CLASSES)

  ref_bf16 = jax.block_until_ready(
      reference_forward(x, params, CLASSES, emulate_bf16=True))
  ref_f32 = jax.block_until_ready(
      reference_forward(x, params, CLASSES, emulate_bf16=False))

  # Tight check vs bf16-weight-emulating reference; loose check vs pure-f32 ref.
  assert jnp.allclose(out, ref_bf16, atol=5e-3), (out, ref_bf16)
  assert jnp.allclose(out, ref_f32, atol=2e-2), (out, ref_f32)

  print("KERNEL_OK")
</pallas_src>

<mosaic_0001>
module attributes {stable_mosaic.version = 11 : i64} {
  func.func @gru_kernel(%arg0: memref<128x22xbf16, #tpu.memory_space<vmem>>, %arg1: memref<22x384xbf16, #tpu.memory_space<vmem>>, %arg2: memref<128x384xbf16, #tpu.memory_space<vmem>>, %arg3: memref<1x384xf32, #tpu.memory_space<vmem>>, %arg4: memref<1x128xf32, #tpu.memory_space<vmem>>, %arg5: memref<22x384xbf16, #tpu.memory_space<vmem>>, %arg6: memref<1x384xf32, #tpu.memory_space<vmem>>, %arg7: memref<1x128xf32, #tpu.memory_space<vmem>>, %arg8: memref<2x128x32xbf16, #tpu.memory_space<vmem>>, %arg9: memref<1x32xf32, #tpu.memory_space<vmem>>, %arg10: memref<32x5xbf16, #tpu.memory_space<vmem>>, %arg11: memref<1x5xf32, #tpu.memory_space<vmem>>, %arg12: memref<8x5xf32, #tpu.memory_space<vmem>>, %arg13: memref<128x384xf32, #tpu.memory_space<vmem>>) attributes {dimension_semantics = [], scalar_prefetch = 0 : i64, scratch_operands = 1 : i64, tpu.core_type = #tpu.core_type<tc>} {
    %c0 = arith.constant 0 : index
    %c0_0 = arith.constant 0 : index
    %0 = vector.load %arg0[%c0, %c0_0] : memref<128x22xbf16, #tpu.memory_space<vmem>>, vector<128x22xbf16>
    %c0_1 = arith.constant 0 : index
    %c0_2 = arith.constant 0 : index
    %1 = vector.load %arg1[%c0_1, %c0_2] : memref<22x384xbf16, #tpu.memory_space<vmem>>, vector<22x384xbf16>
    %cst = arith.constant dense<0.000000e+00> : vector<128x384xf32>
    %2 = tpu.matmul %0, %1, %cst {dimension_numbers = #tpu.dot_dimension_numbers<[1], [0], [0], [1], [0, 0, 1, 1], [], []>} : vector<128x22xbf16>, vector<22x384xbf16>, vector<128x384xf32> -> vector<128x384xf32>
    %c0_3 = arith.constant 0 : index
    %c0_4 = arith.constant 0 : index
    %3 = vector.load %arg3[%c0_3, %c0_4] : memref<1x384xf32, #tpu.memory_space<vmem>>, vector<1x384xf32>
    %4 = vector.broadcast %3 : vector<1x384xf32> to vector<128x384xf32>
    %5 = arith.addf %2, %4 : vector<128x384xf32>
    %c0_5 = arith.constant 0 : index
    %c0_6 = arith.constant 0 : index
    %6 = vector.load %arg13[%c0_5, %c0_6] : memref<128x384xf32, #tpu.memory_space<vmem>>, vector<128x384xf32>
    tpu.vector_store %arg13[%c0_5, %c0_6], %5 {strides = array<i32>} : memref<128x384xf32, #tpu.memory_space<vmem>>, vector<128x384xf32>,
    %c0_7 = arith.constant 0 : index
    %c0_8 = arith.constant 0 : index
    %7 = vector.load %arg2[%c0_7, %c0_8] : memref<128x384xbf16, #tpu.memory_space<vmem>>, vector<128x384xbf16>
    %c0_9 = arith.constant 0 : index
    %c0_10 = arith.constant 0 : index
    %8 = vector.load %arg4[%c0_9, %c0_10] : memref<1x128xf32, #tpu.memory_space<vmem>>, vector<1x128xf32>
    %9 = vector.shape_cast %8 : vector<1x128xf32> to vector<1x128xf32>
    %10 = vector.broadcast %9 : vector<1x128xf32> to vector<8x128xf32>
    %cst_11 = arith.constant 0.000000e+00 : f32
    %11 = vector.broadcast %cst_11 : f32 to vector<8x128xf32>
    %c0_12 = arith.constant 0 : index
    %c0_13 = arith.constant 0 : index
    %12 = vector.load %arg13[%c0_12, %c0_13] : memref<128x384xf32, #tpu.memory_space<vmem>>, vector<8x384xf32>
    %13 = arith.truncf %11 : vector<8x128xf32> to vector<8x128xbf16>
    %cst_14 = arith.constant dense<0.000000e+00> : vector<8x384xf32>
    %14 = tpu.matmul %13, %7, %cst_14 {dimension_numbers = #tpu.dot_dimension_numbers<[1], [0], [0], [1], [0, 0, 1, 1], [], []>} : vector<8x128xbf16>, vector<128x384xbf16>, vector<8x384xf32> -> vector<8x384xf32>
    %15 = vector.extract_strided_slice %12 {offsets = [0, 0], sizes = [8, 128], strides = [1, 1]} : vector<8x384xf32> to vector<8x128xf32>
    %16 = vector.extract_strided_slice %14 {offsets = [0, 0], sizes = [8, 128], strides = [1, 1]} : vector<8x384xf32> to vector<8x128xf32>
    %17 = arith.addf %15, %16 : vector<8x128xf32>
    %18 = arith.negf %17 : vector<8x128xf32>
    %19 = math.exp %18 : vector<8x128xf32>
    %cst_15 = arith.constant 1.000000e+00 : f32
    %20 = vector.broadcast %cst_15 : f32 to vector<8x128xf32>
    %21 = arith.addf %20, %19 : vector<8x128xf32>
    %22 = arith.divf %20, %21 : vector<8x128xf32>
    %23 = vector.extract_strided_slice %12 {offsets = [0, 128], sizes = [8, 128], strides = [1, 1]} : vector<8x384xf32> to vector<8x128xf32>
    %24 = vector.extract_strided_slice %14 {offsets = [0, 128], sizes = [8, 128], strides = [1, 1]} : vector<8x384xf32> to vector<8x128xf32>
    %25 = arith.addf %23, %24 : vector<8x128xf32>
    %26 = arith.negf %25 : vector<8x128xf32>
    %27 = math.exp %26 : vector<8x128xf32>
    %cst_16 = arith.constant 1.000000e+00 : f32
    %28 = vector.broadcast %cst_16 : f32 to vector<8x128xf32>
    %29 = arith.addf %28, %27 : vector<8x128xf32>
    %30 = arith.divf %28, %29 : vector<8x128xf32>
    %31 = vector.extract_strided_slice %12 {offsets = [0, 256], sizes = [8, 128], strides = [1, 1]} : vector<8x384xf32> to vector<8x128xf32>
    %32 = vector.extract_strided_slice %14 {offsets = [0, 256], sizes = [8, 128], strides = [1, 1]} : vector<8x384xf32> to vector<8x128xf32>
    %33 = arith.addf %32, %10 : vector<8x128xf32>
    %34 = arith.mulf %22, %33 : vector<8x128xf32>
    %35 = arith.addf %31, %34 : vector<8x128xf32>
    %36 = math.tanh %35 : vector<8x128xf32>
    %cst_17 = arith.constant 1.000000e+00 : f32
    %37 = vector.broadcast %cst_17 : f32 to vector<8x128xf32>
    %38 = arith.subf %37, %30 : vector<8x128xf32>
    %39 = arith.mulf %38, %36 : vector<8x128xf32>
    %40 = arith.mulf %30, %11 : vector<8x128xf32>
    %41 = arith.addf %39, %40 : vector<8x128xf32>
    %c8 = arith.constant 8 : index
    %c0_18 = arith.constant 0 : index
    %42 = vector.load %arg13[%c8, %c0_18] : memref<128x384xf32, #tpu.memory_space<vmem>>, vector<8x384xf32>
    %43 = arith.truncf %41 : vector<8x128xf32> to vector<8x128xbf16>
    %cst_19 = arith.constant dense<0.000000e+00> : vector<8x384xf32>
    %44 = tpu.matmul %43, %7, %cst_19 {dimension_numbers = #tpu.dot_dimension_numbers<[1], [0], [0], [1], [0, 0, 1, 1], [], []>} : vector<8x128xbf16>, vector<128x384xbf16>, vector<8x384xf32> -> vector<8x384xf32>
    %45 = vector.extract_strided_slice %42 {offsets = [0, 0], sizes = [8, 128], strides = [1, 1]} : vector<8x384xf32> to vector<8x128xf32>
    %46 = vector.extract_strided_slice %44 {offsets = [0, 0], sizes = [8, 128], strides = [1, 1]} : vector<8x384xf32> to vector<8x128xf32>
    %47 = arith.addf %45, %46 : vector<8x128xf32>
    %48 = arith.negf %47 : vector<8x128xf32>
    %49 = math.exp %48 : vector<8x128xf32>
    %cst_20 = arith.constant 1.000000e+00 : f32
    %50 = vector.broadcast %cst_20 : f32 to vector<8x128xf32>
    %51 = arith.addf %50, %49 : vector<8x128xf32>
    %52 = arith.divf %50, %51 : vector<8x128xf32>
    %53 = vector.extract_strided_slice %42 {offsets = [0, 128], sizes = [8, 128], strides = [1, 1]} : vector<8x384xf32> to vector<8x128xf32>
    %54 = vector.extract_strided_slice %44 {offsets = [0, 128], sizes = [8, 128], strides = [1, 1]} : vector<8x384xf32> to vector<8x128xf32>
    %55 = arith.addf %53, %54 : vector<8x128xf32>
    %56 = arith.negf %55 : vector<8x128xf32>
    %57 = math.exp %56 : vector<8x128xf32>
    %cst_21 = arith.constant 1.000000e+00 : f32
    %58 = vector.broadcast %cst_21 : f32 to vector<8x128xf32>
    %59 = arith.addf %58, %57 : vector<8x128xf32>
    %60 = arith.divf %58, %59 : vector<8x128xf32>
    %61 = vector.extract_strided_slice %42 {offsets = [0, 256], sizes = [8, 128], strides = [1, 1]} : vector<8x384xf32> to vector<8x128xf32>
    %62 = vector.extract_strided_slice %44 {offsets = [0, 256], sizes = [8, 128], strides = [1, 1]} : vector<8x384xf32> to vector<8x128xf32>
    %63 = arith.addf %62, %10 : vector<8x128xf32>
    %64 = arith.mulf %52, %63 : vector<8x128xf32>
    %65 = arith.addf %61, %64 : vector<8x128xf32>
    %66 = math.tanh %65 : vector<8x128xf32>
    %cst_22 = arith.constant 1.000000e+00 : f32
    %67 = vector.broadcast %cst_22 : f32 to vector<8x128xf32>
    %68 = arith.subf %67, %60 : vector<8x128xf32>
    %69 = arith.mulf %68, %66 : vector<8x128xf32>
    %70 = arith.mulf %60, %41 : vector<8x128xf32>
    %71 = arith.addf %69, %70 : vector<8x128xf32>
    %c16 = arith.constant 16 : index
    %c0_23 = arith.constant 0 : index
    %72 = vector.load %arg13[%c16, %c0_23] : memref<128x384xf32, #tpu.memory_space<vmem>>, vector<8x384xf32>
    %73 = arith.truncf %71 : vector<8x128xf32> to vector<8x128xbf16>
    %cst_24 = arith.constant dense<0.000000e+00> : vector<8x384xf32>
    %74 = tpu.matmul %73, %7, %cst_24 {dimension_numbers = #tpu.dot_dimension_numbers<[1], [0], [0], [1], [0, 0, 1, 1], [], []>} : vector<8x128xbf16>, vector<128x384xbf16>, vector<8x384xf32> -> vector<8x384xf32>
    %75 = vector.extract_strided_slice %72 {offsets = [0, 0], sizes = [8, 128], strides = [1, 1]} : vector<8x384xf32> to vector<8x128xf32>
    %76 = vector.extract_strided_slice %74 {offsets = [0, 0], sizes = [8, 128], strides = [1, 1]} : vector<8x384xf32> to vector<8x128xf32>
    %77 = arith.addf %75, %76 : vector<8x128xf32>
    %78 = arith.negf %77 : vector<8x128xf32>
    %79 = math.exp %78 : vector<8x128xf32>
    %cst_25 = arith.constant 1.000000e+00 : f32
    %80 = vector.broadcast %cst_25 : f32 to vector<8x128xf32>
    %81 = arith.addf %80, %79 : vector<8x128xf32>
    %82 = arith.divf %80, %81 : vector<8x128xf32>
    %83 = vector.extract_strided_slice %72 {offsets = [0, 128], sizes = [8, 128], strides = [1, 1]} : vector<8x384xf32> to vector<8x128xf32>
    %84 = vector.extract_strided_slice %74 {offsets = [0, 128], sizes = [8, 128], strides = [1, 1]} : vector<8x384xf32> to vector<8x128xf32>
    %85 = arith.addf %83, %84 : vector<8x128xf32>
    %86 = arith.negf %85 : vector<8x128xf32>
    %87 = math.exp %86 : vector<8x128xf32>
    %cst_26 = arith.constant 1.000000e+00 : f32
    %88 = vector.broadcast %cst_26 : f32 to vector<8x128xf32>
    %89 = arith.addf %88, %87 : vector<8x128xf32>
    %90 = arith.divf %88, %89 : vector<8x128xf32>
    %91 = vector.extract_strided_slice %72 {offsets = [0, 256], sizes = [8, 128], strides = [1, 1]} : vector<8x384xf32> to vector<8x128xf32>
    %92 = vector.extract_strided_slice %74 {offsets = [0, 256], sizes = [8, 128], strides = [1, 1]} : vector<8x384xf32> to vector<8x128xf32>
    %93 = arith.addf %92, %10 : vector<8x128xf32>
    %94 = arith.mulf %82, %93 : vector<8x128xf32>
    %95 = arith.addf %91, %94 : vector<8x128xf32>
    %96 = math.tanh %95 : vector<8x128xf32>
    %cst_27 = arith.constant 1.000000e+00 : f32
    %97 = vector.broadcast %cst_27 : f32 to vector<8x128xf32>
    %98 = arith.subf %97, %90 : vector<8x128xf32>
    %99 = arith.mulf %98, %96 : vector<8x128xf32>
    %100 = arith.mulf %90, %71 : vector<8x128xf32>
    %101 = arith.addf %99, %100 : vector<8x128xf32>
    %c24 = arith.constant 24 : index
    %c0_28 = arith.constant 0 : index
    %102 = vector.load %arg13[%c24, %c0_28] : memref<128x384xf32, #tpu.memory_space<vmem>>, vector<8x384xf32>
    %103 = arith.truncf %101 : vector<8x128xf32> to vector<8x128xbf16>
    %cst_29 = arith.constant dense<0.000000e+00> : vector<8x384xf32>
    %104 = tpu.matmul %103, %7, %cst_29 {dimension_numbers = #tpu.dot_dimension_numbers<[1], [0], [0], [1], [0, 0, 1, 1], [], []>} : vector<8x128xbf16>, vector<128x384xbf16>, vector<8x384xf32> -> vector<8x384xf32>
    %105 = vector.extract_strided_slice %102 {offsets = [0, 0], sizes = [8, 128], strides = [1, 1]} : vector<8x384xf32> to vector<8x128xf32>
    %106 = vector.extract_strided_slice %104 {offsets = [0, 0], sizes = [8, 128], strides = [1, 1]} : vector<8x384xf32> to vector<8x128xf32>
    %107 = arith.addf %105, %106 : vector<8x128xf32>
    %108 = arith.negf %107 : vector<8x128xf32>
    %109 = math.exp %108 : vector<8x128xf32>
    %cst_30 = arith.constant 1.000000e+00 : f32
    %110 = vector.broadcast %cst_30 : f32 to vector<8x128xf32>
    %111 = arith.addf %110, %109 : vector<8x128xf32>
    %112 = arith.divf %110, %111 : vector<8x128xf32>
    %113 = vector.extract_strided_slice %102 {offsets = [0, 128], sizes = [8, 128], strides = [1, 1]} : vector<8x384xf32> to vector<8x128xf32>
    %114 = vector.extract_strided_slice %104 {offsets = [0, 128], sizes = [8, 128], strides = [1, 1]} : vector<8x384xf32> to vector<8x128xf32>
    %115 = arith.addf %113, %114 : vector<8x128xf32>
    %116 = arith.negf %115 : vector<8x128xf32>
    %117 = math.exp %116 : vector<8x128xf32>
    %cst_31 = arith.constant 1.000000e+00 : f32
    %118 = vector.broadcast %cst_31 : f32 to vector<8x128xf32>
    %119 = arith.addf %118, %117 : vector<8x128xf32>
    %120 = arith.divf %118, %119 : vector<8x128xf32>
    %121 = vector.extract_strided_slice %102 {offsets = [0, 256], sizes = [8, 128], strides = [1, 1]} : vector<8x384xf32> to vector<8x128xf32>
    %122 = vector.extract_strided_slice %104 {offsets = [0, 256], sizes = [8, 128], strides = [1, 1]} : vector<8x384xf32> to vector<8x128xf32>
    %123 = arith.addf %122, %10 : vector<8x128xf32>
    %124 = arith.mulf %112, %123 : vector<8x128xf32>
    %125 = arith.addf %121, %124 : vector<8x128xf32>
    %126 = math.tanh %125 : vector<8x128xf32>
    %cst_32 = arith.constant 1.000000e+00 : f32
    %127 = vector.broadcast %cst_32 : f32 to vector<8x128xf32>
    %128 = arith.subf %127, %120 : vector<8x128xf32>
    %129 = arith.mulf %128, %126 : vector<8x128xf32>
    %130 = arith.mulf %120, %101 : vector<8x128xf32>
    %131 = arith.addf %129, %130 : vector<8x128xf32>
    %c32 = arith.constant 32 : index
    %c0_33 = arith.constant 0 : index
    %132 = vector.load %arg13[%c32, %c0_33] : memref<128x384xf32, #tpu.memory_space<vmem>>, vector<8x384xf32>
    %133 = arith.truncf %131 : vector<8x128xf32> to vector<8x128xbf16>
    %cst_34 = arith.constant dense<0.000000e+00> : vector<8x384xf32>
    %134 = tpu.matmul %133, %7, %cst_34 {dimension_numbers = #tpu.dot_dimension_numbers<[1], [0], [0], [1], [0, 0, 1, 1], [], []>} : vector<8x128xbf16>, vector<128x384xbf16>, vector<8x384xf32> -> vector<8x384xf32>
    %135 = vector.extract_strided_slice %132 {offsets = [0, 0], sizes = [8, 128], strides = [1, 1]} : vector<8x384xf32> to vector<8x128xf32>
    %136 = vector.extract_strided_slice %134 {offsets = [0, 0], sizes = [8, 128], strides = [1, 1]} : vector<8x384xf32> to vector<8x128xf32>
    %137 = arith.addf %135, %136 : vector<8x128xf32>
    %138 = arith.negf %137 : vector<8x128xf32>
    %139 = math.exp %138 : vector<8x128xf32>
    %cst_35 = arith.constant 1.000000e+00 : f32
    %140 = vector.broadcast %cst_35 : f32 to vector<8x128xf32>
    %141 = arith.addf %140, %139 : vector<8x128xf32>
    %142 = arith.divf %140, %141 : vector<8x128xf32>
    %143 = vector.extract_strided_slice %132 {offsets = [0, 128], sizes = [8, 128], strides = [1, 1]} : vector<8x384xf32> to vector<8x128xf32>
    %144 = vector.extract_strided_slice %134 {offsets = [0, 128], sizes = [8, 128], strides = [1, 1]} : vector<8x384xf32> to vector<8x128xf32>
    %145 = arith.addf %143, %144 : vector<8x128xf32>
    %146 = arith.negf %145 : vector<8x128xf32>
    %147 = math.exp %146 : vector<8x128xf32>
    %cst_36 = arith.constant 1.000000e+00 : f32
    %148 = vector.broadcast %cst_36 : f32 to vector<8x128xf32>
    %149 = arith.addf %148, %147 : vector<8x128xf32>
    %150 = arith.divf %148, %149 : vector<8x128xf32>
    %151 = vector.extract_strided_slice %132 {offsets = [0, 256], sizes = [8, 128], strides = [1, 1]} : vector<8x384xf32> to vector<8x128xf32>
    %152 = vector.extract_strided_slice %134 {offsets = [0, 256], sizes = [8, 128], strides = [1, 1]} : vector<8x384xf32> to vector<8x128xf32>
    %153 = arith.addf %152, %10 : vector<8x128xf32>
    %154 = arith.mulf %142, %153 : vector<8x128xf32>
    %155 = arith.addf %151, %154 : vector<8x128xf32>
    %156 = math.tanh %155 : vector<8x128xf32>
    %cst_37 = arith.constant 1.000000e+00 : f32
    %157 = vector.broadcast %cst_37 : f32 to vector<8x128xf32>
    %158 = arith.subf %157, %150 : vector<8x128xf32>
    %159 = arith.mulf %158, %156 : vector<8x128xf32>
    %160 = arith.mulf %150, %131 : vector<8x128xf32>
    %161 = arith.addf %159, %160 : vector<8x128xf32>
    %c40 = arith.constant 40 : index
    %c0_38 = arith.constant 0 : index
    %162 = vector.load %arg13[%c40, %c0_38] : memref<128x384xf32, #tpu.memory_space<vmem>>, vector<8x384xf32>
    %163 = arith.truncf %161 : vector<8x128xf32> to vector<8x128xbf16>
    %cst_39 = arith.constant dense<0.000000e+00> : vector<8x384xf32>
    %164 = tpu.matmul %163, %7, %cst_39 {dimension_numbers = #tpu.dot_dimension_numbers<[1], [0], [0], [1], [0, 0, 1, 1], [], []>} : vector<8x128xbf16>, vector<128x384xbf16>, vector<8x384xf32> -> vector<8x384xf32>
    %165 = vector.extract_strided_slice %162 {offsets = [0, 0], sizes = [8, 128], strides = [1, 1]} : vector<8x384xf32> to vector<8x128xf32>
    %166 = vector.extract_strided_slice %164 {offsets = [0, 0], sizes = [8, 128], strides = [1, 1]} : vector<8x384xf32> to vector<8x128xf32>
    %167 = arith.addf %165, %166 : vector<8x128xf32>
    %168 = arith.negf %167 : vector<8x128xf32>
    %169 = math.exp %168 : vector<8x128xf32>
    %cst_40 = arith.constant 1.000000e+00 : f32
    %170 = vector.broadcast %cst_40 : f32 to vector<8x128xf32>
    %171 = arith.addf %170, %169 : vector<8x128xf32>
    %172 = arith.divf %170, %171 : vector<8x128xf32>
    %173 = vector.extract_strided_slice %162 {offsets = [0, 128], sizes = [8, 128], strides = [1, 1]} : vector<8x384xf32> to vector<8x128xf32>
    %174 = vector.extract_strided_slice %164 {offsets = [0, 128], sizes = [8, 128], strides = [1, 1]} : vector<8x384xf32> to vector<8x128xf32>
    %175 = arith.addf %173, %174 : vector<8x128xf32>
    %176 = arith.negf %175 : vector<8x128xf32>
    %177 = math.exp %176 : vector<8x128xf32>
    %cst_41 = arith.constant 1.000000e+00 : f32
    %178 = vector.broadcast %cst_41 : f32 to vector<8x128xf32>
    %179 = arith.addf %178, %177 : vector<8x128xf32>
    %180 = arith.divf %178, %179 : vector<8x128xf32>
    %181 = vector.extract_strided_slice %162 {offsets = [0, 256], sizes = [8, 128], strides = [1, 1]} : vector<8x384xf32> to vector<8x128xf32>
    %182 = vector.extract_strided_slice %164 {offsets = [0, 256], sizes = [8, 128], strides = [1, 1]} : vector<8x384xf32> to vector<8x128xf32>
    %183 = arith.addf %182, %10 : vector<8x128xf32>
    %184 = arith.mulf %172, %183 : vector<8x128xf32>
    %185 = arith.addf %181, %184 : vector<8x128xf32>
    %186 = math.tanh %185 : vector<8x128xf32>
    %cst_42 = arith.constant 1.000000e+00 : f32
    %187 = vector.broadcast %cst_42 : f32 to vector<8x128xf32>
    %188 = arith.subf %187, %180 : vector<8x128xf32>
    %189 = arith.mulf %188, %186 : vector<8x128xf32>
    %190 = arith.mulf %180, %161 : vector<8x128xf32>
    %191 = arith.addf %189, %190 : vector<8x128xf32>
    %c48 = arith.constant 48 : index
    %c0_43 = arith.constant 0 : index
    %192 = vector.load %arg13[%c48, %c0_43] : memref<128x384xf32, #tpu.memory_space<vmem>>, vector<8x384xf32>
    %193 = arith.truncf %191 : vector<8x128xf32> to vector<8x128xbf16>
    %cst_44 = arith.constant dense<0.000000e+00> : vector<8x384xf32>
    %194 = tpu.matmul %193, %7, %cst_44 {dimension_numbers = #tpu.dot_dimension_numbers<[1], [0], [0], [1], [0, 0, 1, 1], [], []>} : vector<8x128xbf16>, vector<128x384xbf16>, vector<8x384xf32> -> vector<8x384xf32>
    %195 = vector.extract_strided_slice %192 {offsets = [0, 0], sizes = [8, 128], strides = [1, 1]} : vector<8x384xf32> to vector<8x128xf32>
    %196 = vector.extract_strided_slice %194 {offsets = [0, 0], sizes = [8, 128], strides = [1, 1]} : vector<8x384xf32> to vector<8x128xf32>
    %197 = arith.addf %195, %196 : vector<8x128xf32>
    %198 = arith.negf %197 : vector<8x128xf32>
    %199 = math.exp %198 : vector<8x128xf32>
    %cst_45 = arith.constant 1.000000e+00 : f32
    %200 = vector.broadcast %cst_45 : f32 to vector<8x128xf32>
    %201 = arith.addf %200, %199 : vector<8x128xf32>
    %202 = arith.divf %200, %201 : vector<8x128xf32>
    %203 = vector.extract_strided_slice %192 {offsets = [0, 128], sizes = [8, 128], strides = [1, 1]} : vector<8x384xf32> to vector<8x128xf32>
    %204 = vector.extract_strided_slice %194 {offsets = [0, 128], sizes = [8, 128], strides = [1, 1]} : vector<8x384xf32> to vector<8x128xf32>
    %205 = arith.addf %203, %204 : vector<8x128xf32>
    %206 = arith.negf %205 : vector<8x128xf32>
    %207 = math.exp %206 : vector<8x128xf32>
    %cst_46 = arith.constant 1.000000e+00 : f32
    %208 = vector.broadcast %cst_46 : f32 to vector<8x128xf32>
    %209 = arith.addf %208, %207 : vector<8x128xf32>
    %210 = arith.divf %208, %209 : vector<8x128xf32>
    %211 = vector.extract_strided_slice %192 {offsets = [0, 256], sizes = [8, 128], strides = [1, 1]} : vector<8x384xf32> to vector<8x128xf32>
    %212 = vector.extract_strided_slice %194 {offsets = [0, 256], sizes = [8, 128], strides = [1, 1]} : vector<8x384xf32> to vector<8x128xf32>
    %213 = arith.addf %212, %10 : vector<8x128xf32>
    %214 = arith.mulf %202, %213 : vector<8x128xf32>
    %215 = arith.addf %211, %214 : vector<8x128xf32>
    %216 = math.tanh %215 : vector<8x128xf32>
    %cst_47 = arith.constant 1.000000e+00 : f32
    %217 = vector.broadcast %cst_47 : f32 to vector<8x128xf32>
    %218 = arith.subf %217, %210 : vector<8x128xf32>
    %219 = arith.mulf %218, %216 : vector<8x128xf32>
    %220 = arith.mulf %210, %191 : vector<8x128xf32>
    %221 = arith.addf %219, %220 : vector<8x128xf32>
    %c56 = arith.constant 56 : index
    %c0_48 = arith.constant 0 : index
    %222 = vector.load %arg13[%c56, %c0_48] : memref<128x384xf32, #tpu.memory_space<vmem>>, vector<8x384xf32>
    %223 = arith.truncf %221 : vector<8x128xf32> to vector<8x128xbf16>
    %cst_49 = arith.constant dense<0.000000e+00> : vector<8x384xf32>
    %224 = tpu.matmul %223, %7, %cst_49 {dimension_numbers = #tpu.dot_dimension_numbers<[1], [0], [0], [1], [0, 0, 1, 1], [], []>} : vector<8x128xbf16>, vector<128x384xbf16>, vector<8x384xf32> -> vector<8x384xf32>
    %225 = vector.extract_strided_slice %222 {offsets = [0, 0], sizes = [8, 128], strides = [1, 1]} : vector<8x384xf32> to vector<8x128xf32>
    %226 = vector.extract_strided_slice %224 {offsets = [0, 0], sizes = [8, 128], strides = [1, 1]} : vector<8x384xf32> to vector<8x128xf32>
    %227 = arith.addf %225, %226 : vector<8x128xf32>
    %228 = arith.negf %227 : vector<8x128xf32>
    %229 = math.exp %228 : vector<8x128xf32>
    %cst_50 = arith.constant 1.000000e+00 : f32
    %230 = vector.broadcast %cst_50 : f32 to vector<8x128xf32>
    %231 = arith.addf %230, %229 : vector<8x128xf32>
    %232 = arith.divf %230, %231 : vector<8x128xf32>
    %233 = vector.extract_strided_slice %222 {offsets = [0, 128], sizes = [8, 128], strides = [1, 1]} : vector<8x384xf32> to vector<8x128xf32>
    %234 = vector.extract_strided_slice %224 {offsets = [0, 128], sizes = [8, 128], strides = [1, 1]} : vector<8x384xf32> to vector<8x128xf32>
    %235 = arith.addf %233, %234 : vector<8x128xf32>
    %236 = arith.negf %235 : vector<8x128xf32>
    %237 = math.exp %236 : vector<8x128xf32>
    %cst_51 = arith.constant 1.000000e+00 : f32
    %238 = vector.broadcast %cst_51 : f32 to vector<8x128xf32>
    %239 = arith.addf %238, %237 : vector<8x128xf32>
    %240 = arith.divf %238, %239 : vector<8x128xf32>
    %241 = vector.extract_strided_slice %222 {offsets = [0, 256], sizes = [8, 128], strides = [1, 1]} : vector<8x384xf32> to vector<8x128xf32>
    %242 = vector.extract_strided_slice %224 {offsets = [0, 256], sizes = [8, 128], strides = [1, 1]} : vector<8x384xf32> to vector<8x128xf32>
    %243 = arith.addf %242, %10 : vector<8x128xf32>
    %244 = arith.mulf %232, %243 : vector<8x128xf32>
    %245 = arith.addf %241, %244 : vector<8x128xf32>
    %246 = math.tanh %245 : vector<8x128xf32>
    %cst_52 = arith.constant 1.000000e+00 : f32
    %247 = vector.broadcast %cst_52 : f32 to vector<8x128xf32>
    %248 = arith.subf %247, %240 : vector<8x128xf32>
    %249 = arith.mulf %248, %246 : vector<8x128xf32>
    %250 = arith.mulf %240, %221 : vector<8x128xf32>
    %251 = arith.addf %249, %250 : vector<8x128xf32>
    %c64 = arith.constant 64 : index
    %c0_53 = arith.constant 0 : index
    %252 = vector.load %arg13[%c64, %c0_53] : memref<128x384xf32, #tpu.memory_space<vmem>>, vector<8x384xf32>
    %253 = arith.truncf %251 : vector<8x128xf32> to vector<8x128xbf16>
    %cst_54 = arith.constant dense<0.000000e+00> : vector<8x384xf32>
    %254 = tpu.matmul %253, %7, %cst_54 {dimension_numbers = #tpu.dot_dimension_numbers<[1], [0], [0], [1], [0, 0, 1, 1], [], []>} : vector<8x128xbf16>, vector<128x384xbf16>, vector<8x384xf32> -> vector<8x384xf32>
    %255 = vector.extract_strided_slice %252 {offsets = [0, 0], sizes = [8, 128], strides = [1, 1]} : vector<8x384xf32> to vector<8x128xf32>
    %256 = vector.extract_strided_slice %254 {offsets = [0, 0], sizes = [8, 128], strides = [1, 1]} : vector<8x384xf32> to vector<8x128xf32>
    %257 = arith.addf %255, %256 : vector<8x128xf32>
    %258 = arith.negf %257 : vector<8x128xf32>
    %259 = math.exp %258 : vector<8x128xf32>
    %cst_55 = arith.constant 1.000000e+00 : f32
    %260 = vector.broadcast %cst_55 : f32 to vector<8x128xf32>
    %261 = arith.addf %260, %259 : vector<8x128xf32>
    %262 = arith.divf %260, %261 : vector<8x128xf32>
    %263 = vector.extract_strided_slice %252 {offsets = [0, 128], sizes = [8, 128], strides = [1, 1]} : vector<8x384xf32> to vector<8x128xf32>
    %264 = vector.extract_strided_slice %254 {offsets = [0, 128], sizes = [8, 128], strides = [1, 1]} : vector<8x384xf32> to vector<8x128xf32>
    %265 = arith.addf %263, %264 : vector<8x128xf32>
    %266 = arith.negf %265 : vector<8x128xf32>
    %267 = math.exp %266 : vector<8x128xf32>
    %cst_56 = arith.constant 1.000000e+00 : f32
    %268 = vector.broadcast %cst_56 : f32 to vector<8x128xf32>
    %269 = arith.addf %268, %267 : vector<8x128xf32>
    %270 = arith.divf %268, %269 : vector<8x128xf32>
    %271 = vector.extract_strided_slice %252 {offsets = [0, 256], sizes = [8, 128], strides = [1, 1]} : vector<8x384xf32> to vector<8x128xf32>
    %272 = vector.extract_strided_slice %254 {offsets = [0, 256], sizes = [8, 128], strides = [1, 1]} : vector<8x384xf32> to vector<8x128xf32>
    %273 = arith.addf %272, %10 : vector<8x128xf32>
    %274 = arith.mulf %262, %273 : vector<8x128xf32>
    %275 = arith.addf %271, %274 : vector<8x128xf32>
    %276 = math.tanh %275 : vector<8x128xf32>
    %cst_57 = arith.constant 1.000000e+00 : f32
    %277 = vector.broadcast %cst_57 : f32 to vector<8x128xf32>
    %278 = arith.subf %277, %270 : vector<8x128xf32>
    %279 = arith.mulf %278, %276 : vector<8x128xf32>
    %280 = arith.mulf %270, %251 : vector<8x128xf32>
    %281 = arith.addf %279, %280 : vector<8x128xf32>
    %c72 = arith.constant 72 : index
    %c0_58 = arith.constant 0 : index
    %282 = vector.load %arg13[%c72, %c0_58] : memref<128x384xf32, #tpu.memory_space<vmem>>, vector<8x384xf32>
    %283 = arith.truncf %281 : vector<8x128xf32> to vector<8x128xbf16>
    %cst_59 = arith.constant dense<0.000000e+00> : vector<8x384xf32>
    %284 = tpu.matmul %283, %7, %cst_59 {dimension_numbers = #tpu.dot_dimension_numbers<[1], [0], [0], [1], [0, 0, 1, 1], [], []>} : vector<8x128xbf16>, vector<128x384xbf16>, vector<8x384xf32> -> vector<8x384xf32>
    %285 = vector.extract_strided_slice %282 {offsets = [0, 0], sizes = [8, 128], strides = [1, 1]} : vector<8x384xf32> to vector<8x128xf32>
    %286 = vector.extract_strided_slice %284 {offsets = [0, 0], sizes = [8, 128], strides = [1, 1]} : vector<8x384xf32> to vector<8x128xf32>
    %287 = arith.addf %285, %286 : vector<8x128xf32>
    %288 = arith.negf %287 : vector<8x128xf32>
    %289 = math.exp %288 : vector<8x128xf32>
    %cst_60 = arith.constant 1.000000e+00 : f32
    %290 = vector.broadcast %cst_60 : f32 to vector<8x128xf32>
    %291 = arith.addf %290, %289 : vector<8x128xf32>
    %292 = arith.divf %290, %291 : vector<8x128xf32>
    %293 = vector.extract_strided_slice %282 {offsets = [0, 128], sizes = [8, 128], strides = [1, 1]} : vector<8x384xf32> to vector<8x128xf32>
    %294 = vector.extract_strided_slice %284 {offsets = [0, 128], sizes = [8, 128], strides = [1, 1]} : vector<8x384xf32> to vector<8x128xf32>
    %295 = arith.addf %293, %294 : vector<8x128xf32>
    %296 = arith.negf %295 : vector<8x128xf32>
    %297 = math.exp %296 : vector<8x128xf32>
    %cst_61 = arith.constant 1.000000e+00 : f32
    %298 = vector.broadcast %cst_61 : f32 to vector<8x128xf32>
    %299 = arith.addf %298, %297 : vector<8x128xf32>
    %300 = arith.divf %298, %299 : vector<8x128xf32>
    %301 = vector.extract_strided_slice %282 {offsets = [0, 256], sizes = [8, 128], strides = [1, 1]} : vector<8x384xf32> to vector<8x128xf32>
    %302 = vector.extract_strided_slice %284 {offsets = [0, 256], sizes = [8, 128], strides = [1, 1]} : vector<8x384xf32> to vector<8x128xf32>
    %303 = arith.addf %302, %10 : vector<8x128xf32>
    %304 = arith.mulf %292, %303 : vector<8x128xf32>
    %305 = arith.addf %301, %304 : vector<8x128xf32>
    %306 = math.tanh %305 : vector<8x128xf32>
    %cst_62 = arith.constant 1.000000e+00 : f32
    %307 = vector.broadcast %cst_62 : f32 to vector<8x128xf32>
    %308 = arith.subf %307, %300 : vector<8x128xf32>
    %309 = arith.mulf %308, %306 : vector<8x128xf32>
    %310 = arith.mulf %300, %281 : vector<8x128xf32>
    %311 = arith.addf %309, %310 : vector<8x128xf32>
    %c80 = arith.constant 80 : index
    %c0_63 = arith.constant 0 : index
    %312 = vector.load %arg13[%c80, %c0_63] : memref<128x384xf32, #tpu.memory_space<vmem>>, vector<8x384xf32>
    %313 = arith.truncf %311 : vector<8x128xf32> to vector<8x128xbf16>
    %cst_64 = arith.constant dense<0.000000e+00> : vector<8x384xf32>
    %314 = tpu.matmul %313, %7, %cst_64 {dimension_numbers = #tpu.dot_dimension_numbers<[1], [0], [0], [1], [0, 0, 1, 1], [], []>} : vector<8x128xbf16>, vector<128x384xbf16>, vector<8x384xf32> -> vector<8x384xf32>
    %315 = vector.extract_strided_slice %312 {offsets = [0, 0], sizes = [8, 128], strides = [1, 1]} : vector<8x384xf32> to vector<8x128xf32>
    %316 = vector.extract_strided_slice %314 {offsets = [0, 0], sizes = [8, 128], strides = [1, 1]} : vector<8x384xf32> to vector<8x128xf32>
    %317 = arith.addf %315, %316 : vector<8x128xf32>
    %318 = arith.negf %317 : vector<8x128xf32>
    %319 = math.exp %318 : vector<8x128xf32>
    %cst_65 = arith.constant 1.000000e+00 : f32
    %320 = vector.broadcast %cst_65 : f32 to vector<8x128xf32>
    %321 = arith.addf %320, %319 : vector<8x128xf32>
    %322 = arith.divf %320, %321 : vector<8x128xf32>
    %323 = vector.extract_strided_slice %312 {offsets = [0, 128], sizes = [8, 128], strides = [1, 1]} : vector<8x384xf32> to vector<8x128xf32>
    %324 = vector.extract_strided_slice %314 {offsets = [0, 128], sizes = [8, 128], strides = [1, 1]} : vector<8x384xf32> to vector<8x128xf32>
    %325 = arith.addf %323, %324 : vector<8x128xf32>
    %326 = arith.negf %325 : vector<8x128xf32>
    %327 = math.exp %326 : vector<8x128xf32>
    %cst_66 = arith.constant 1.000000e+00 : f32
    %328 = vector.broadcast %cst_66 : f32 to vector<8x128xf32>
    %329 = arith.addf %328, %327 : vector<8x128xf32>
    %330 = arith.divf %328, %329 : vector<8x128xf32>
    %331 = vector.extract_strided_slice %312 {offsets = [0, 256], sizes = [8, 128], strides = [1, 1]} : vector<8x384xf32> to vector<8x128xf32>
    %332 = vector.extract_strided_slice %314 {offsets = [0, 256], sizes = [8, 128], strides = [1, 1]} : vector<8x384xf32> to vector<8x128xf32>
    %333 = arith.addf %332, %10 : vector<8x128xf32>
    %334 = arith.mulf %322, %333 : vector<8x128xf32>
    %335 = arith.addf %331, %334 : vector<8x128xf32>
    %336 = math.tanh %335 : vector<8x128xf32>
    %cst_67 = arith.constant 1.000000e+00 : f32
    %337 = vector.broadcast %cst_67 : f32 to vector<8x128xf32>
    %338 = arith.subf %337, %330 : vector<8x128xf32>
    %339 = arith.mulf %338, %336 : vector<8x128xf32>
    %340 = arith.mulf %330, %311 : vector<8x128xf32>
    %341 = arith.addf %339, %340 : vector<8x128xf32>
    %c88 = arith.constant 88 : index
    %c0_68 = arith.constant 0 : index
    %342 = vector.load %arg13[%c88, %c0_68] : memref<128x384xf32, #tpu.memory_space<vmem>>, vector<8x384xf32>
    %343 = arith.truncf %341 : vector<8x128xf32> to vector<8x128xbf16>
    %cst_69 = arith.constant dense<0.000000e+00> : vector<8x384xf32>
    %344 = tpu.matmul %343, %7, %cst_69 {dimension_numbers = #tpu.dot_dimension_numbers<[1], [0], [0], [1], [0, 0, 1, 1], [], []>} : vector<8x128xbf16>, vector<128x384xbf16>, vector<8x384xf32> -> vector<8x384xf32>
    %345 = vector.extract_strided_slice %342 {offsets = [0, 0], sizes = [8, 128], strides = [1, 1]} : vector<8x384xf32> to vector<8x128xf32>
    %346 = vector.extract_strided_slice %344 {offsets = [0, 0], sizes = [8, 128], strides = [1, 1]} : vector<8x384xf32> to vector<8x128xf32>
    %347 = arith.addf %345, %346 : vector<8x128xf32>
    %348 = arith.negf %347 : vector<8x128xf32>
    %349 = math.exp %348 : vector<8x128xf32>
    %cst_70 = arith.constant 1.000000e+00 : f32
    %350 = vector.broadcast %cst_70 : f32 to vector<8x128xf32>
    %351 = arith.addf %350, %349 : vector<8x128xf32>
    %352 = arith.divf %350, %351 : vector<8x128xf32>
    %353 = vector.extract_strided_slice %342 {offsets = [0, 128], sizes = [8, 128], strides = [1, 1]} : vector<8x384xf32> to vector<8x128xf32>
    %354 = vector.extract_strided_slice %344 {offsets = [0, 128], sizes = [8, 128], strides = [1, 1]} : vector<8x384xf32> to vector<8x128xf32>
    %355 = arith.addf %353, %354 : vector<8x128xf32>
    %356 = arith.negf %355 : vector<8x128xf32>
    %357 = math.exp %356 : vector<8x128xf32>
    %cst_71 = arith.constant 1.000000e+00 : f32
    %358 = vector.broadcast %cst_71 : f32 to vector<8x128xf32>
    %359 = arith.addf %358, %357 : vector<8x128xf32>
    %360 = arith.divf %358, %359 : vector<8x128xf32>
    %361 = vector.extract_strided_slice %342 {offsets = [0, 256], sizes = [8, 128], strides = [1, 1]} : vector<8x384xf32> to vector<8x128xf32>
    %362 = vector.extract_strided_slice %344 {offsets = [0, 256], sizes = [8, 128], strides = [1, 1]} : vector<8x384xf32> to vector<8x128xf32>
    %363 = arith.addf %362, %10 : vector<8x128xf32>
    %364 = arith.mulf %352, %363 : vector<8x128xf32>
    %365 = arith.addf %361, %364 : vector<8x128xf32>
    %366 = math.tanh %365 : vector<8x128xf32>
    %cst_72 = arith.constant 1.000000e+00 : f32
    %367 = vector.broadcast %cst_72 : f32 to vector<8x128xf32>
    %368 = arith.subf %367, %360 : vector<8x128xf32>
    %369 = arith.mulf %368, %366 : vector<8x128xf32>
    %370 = arith.mulf %360, %341 : vector<8x128xf32>
    %371 = arith.addf %369, %370 : vector<8x128xf32>
    %c96 = arith.constant 96 : index
    %c0_73 = arith.constant 0 : index
    %372 = vector.load %arg13[%c96, %c0_73] : memref<128x384xf32, #tpu.memory_space<vmem>>, vector<8x384xf32>
    %373 = arith.truncf %371 : vector<8x128xf32> to vector<8x128xbf16>
    %cst_74 = arith.constant dense<0.000000e+00> : vector<8x384xf32>
    %374 = tpu.matmul %373, %7, %cst_74 {dimension_numbers = #tpu.dot_dimension_numbers<[1], [0], [0], [1], [0, 0, 1, 1], [], []>} : vector<8x128xbf16>, vector<128x384xbf16>, vector<8x384xf32> -> vector<8x384xf32>
    %375 = vector.extract_strided_slice %372 {offsets = [0, 0], sizes = [8, 128], strides = [1, 1]} : vector<8x384xf32> to vector<8x128xf32>
    %376 = vector.extract_strided_slice %374 {offsets = [0, 0], sizes = [8, 128], strides = [1, 1]} : vector<8x384xf32> to vector<8x128xf32>
    %377 = arith.addf %375, %376 : vector<8x128xf32>
    %378 = arith.negf %377 : vector<8x128xf32>
    %379 = math.exp %378 : vector<8x128xf32>
    %cst_75 = arith.constant 1.000000e+00 : f32
    %380 = vector.broadcast %cst_75 : f32 to vector<8x128xf32>
    %381 = arith.addf %380, %379 : vector<8x128xf32>
    %382 = arith.divf %380, %381 : vector<8x128xf32>
    %383 = vector.extract_strided_slice %372 {offsets = [0, 128], sizes = [8, 128], strides = [1, 1]} : vector<8x384xf32> to vector<8x128xf32>
    %384 = vector.extract_strided_slice %374 {offsets = [0, 128], sizes = [8, 128], strides = [1, 1]} : vector<8x384xf32> to vector<8x128xf32>
    %385 = arith.addf %383, %384 : vector<8x128xf32>
    %386 = arith.negf %385 : vector<8x128xf32>
    %387 = math.exp %386 : vector<8x128xf32>
    %cst_76 = arith.constant 1.000000e+00 : f32
    %388 = vector.broadcast %cst_76 : f32 to vector<8x128xf32>
    %389 = arith.addf %388, %387 : vector<8x128xf32>
    %390 = arith.divf %388, %389 : vector<8x128xf32>
    %391 = vector.extract_strided_slice %372 {offsets = [0, 256], sizes = [8, 128], strides = [1, 1]} : vector<8x384xf32> to vector<8x128xf32>
    %392 = vector.extract_strided_slice %374 {offsets = [0, 256], sizes = [8, 128], strides = [1, 1]} : vector<8x384xf32> to vector<8x128xf32>
    %393 = arith.addf %392, %10 : vector<8x128xf32>
    %394 = arith.mulf %382, %393 : vector<8x128xf32>
    %395 = arith.addf %391, %394 : vector<8x128xf32>
    %396 = math.tanh %395 : vector<8x128xf32>
    %cst_77 = arith.constant 1.000000e+00 : f32
    %397 = vector.broadcast %cst_77 : f32 to vector<8x128xf32>
    %398 = arith.subf %397, %390 : vector<8x128xf32>
    %399 = arith.mulf %398, %396 : vector<8x128xf32>
    %400 = arith.mulf %390, %371 : vector<8x128xf32>
    %401 = arith.addf %399, %400 : vector<8x128xf32>
    %c104 = arith.constant 104 : index
    %c0_78 = arith.constant 0 : index
    %402 = vector.load %arg13[%c104, %c0_78] : memref<128x384xf32, #tpu.memory_space<vmem>>, vector<8x384xf32>
    %403 = arith.truncf %401 : vector<8x128xf32> to vector<8x128xbf16>
    %cst_79 = arith.constant dense<0.000000e+00> : vector<8x384xf32>
    %404 = tpu.matmul %403, %7, %cst_79 {dimension_numbers = #tpu.dot_dimension_numbers<[1], [0], [0], [1], [0, 0, 1, 1], [], []>} : vector<8x128xbf16>, vector<128x384xbf16>, vector<8x384xf32> -> vector<8x384xf32>
    %405 = vector.extract_strided_slice %402 {offsets = [0, 0], sizes = [8, 128], strides = [1, 1]} : vector<8x384xf32> to vector<8x128xf32>
    %406 = vector.extract_strided_slice %404 {offsets = [0, 0], sizes = [8, 128], strides = [1, 1]} : vector<8x384xf32> to vector<8x128xf32>
    %407 = arith.addf %405, %406 : vector<8x128xf32>
    %408 = arith.negf %407 : vector<8x128xf32>
    %409 = math.exp %408 : vector<8x128xf32>
    %cst_80 = arith.constant 1.000000e+00 : f32
    %410 = vector.broadcast %cst_80 : f32 to vector<8x128xf32>
    %411 = arith.addf %410, %409 : vector<8x128xf32>
    %412 = arith.divf %410, %411 : vector<8x128xf32>
    %413 = vector.extract_strided_slice %402 {offsets = [0, 128], sizes = [8, 128], strides = [1, 1]} : vector<8x384xf32> to vector<8x128xf32>
    %414 = vector.extract_strided_slice %404 {offsets = [0, 128], sizes = [8, 128], strides = [1, 1]} : vector<8x384xf32> to vector<8x128xf32>
    %415 = arith.addf %413, %414 : vector<8x128xf32>
    %416 = arith.negf %415 : vector<8x128xf32>
    %417 = math.exp %416 : vector<8x128xf32>
    %cst_81 = arith.constant 1.000000e+00 : f32
    %418 = vector.broadcast %cst_81 : f32 to vector<8x128xf32>
    %419 = arith.addf %418, %417 : vector<8x128xf32>
    %420 = arith.divf %418, %419 : vector<8x128xf32>
    %421 = vector.extract_strided_slice %402 {offsets = [0, 256], sizes = [8, 128], strides = [1, 1]} : vector<8x384xf32> to vector<8x128xf32>
    %422 = vector.extract_strided_slice %404 {offsets = [0, 256], sizes = [8, 128], strides = [1, 1]} : vector<8x384xf32> to vector<8x128xf32>
    %423 = arith.addf %422, %10 : vector<8x128xf32>
    %424 = arith.mulf %412, %423 : vector<8x128xf32>
    %425 = arith.addf %421, %424 : vector<8x128xf32>
    %426 = math.tanh %425 : vector<8x128xf32>
    %cst_82 = arith.constant 1.000000e+00 : f32
    %427 = vector.broadcast %cst_82 : f32 to vector<8x128xf32>
    %428 = arith.subf %427, %420 : vector<8x128xf32>
    %429 = arith.mulf %428, %426 : vector<8x128xf32>
    %430 = arith.mulf %420, %401 : vector<8x128xf32>
    %431 = arith.addf %429, %430 : vector<8x128xf32>
    %c112 = arith.constant 112 : index
    %c0_83 = arith.constant 0 : index
    %432 = vector.load %arg13[%c112, %c0_83] : memref<128x384xf32, #tpu.memory_space<vmem>>, vector<8x384xf32>
    %433 = arith.truncf %431 : vector<8x128xf32> to vector<8x128xbf16>
    %cst_84 = arith.constant dense<0.000000e+00> : vector<8x384xf32>
    %434 = tpu.matmul %433, %7, %cst_84 {dimension_numbers = #tpu.dot_dimension_numbers<[1], [0], [0], [1], [0, 0, 1, 1], [], []>} : vector<8x128xbf16>, vector<128x384xbf16>, vector<8x384xf32> -> vector<8x384xf32>
    %435 = vector.extract_strided_slice %432 {offsets = [0, 0], sizes = [8, 128], strides = [1, 1]} : vector<8x384xf32> to vector<8x128xf32>
    %436 = vector.extract_strided_slice %434 {offsets = [0, 0], sizes = [8, 128], strides = [1, 1]} : vector<8x384xf32> to vector<8x128xf32>
    %437 = arith.addf %435, %436 : vector<8x128xf32>
    %438 = arith.negf %437 : vector<8x128xf32>
    %439 = math.exp %438 : vector<8x128xf32>
    %cst_85 = arith.constant 1.000000e+00 : f32
    %440 = vector.broadcast %cst_85 : f32 to vector<8x128xf32>
    %441 = arith.addf %440, %439 : vector<8x128xf32>
    %442 = arith.divf %440, %441 : vector<8x128xf32>
    %443 = vector.extract_strided_slice %432 {offsets = [0, 128], sizes = [8, 128], strides = [1, 1]} : vector<8x384xf32> to vector<8x128xf32>
    %444 = vector.extract_strided_slice %434 {offsets = [0, 128], sizes = [8, 128], strides = [1, 1]} : vector<8x384xf32> to vector<8x128xf32>
    %445 = arith.addf %443, %444 : vector<8x128xf32>
    %446 = arith.negf %445 : vector<8x128xf32>
    %447 = math.exp %446 : vector<8x128xf32>
    %cst_86 = arith.constant 1.000000e+00 : f32
    %448 = vector.broadcast %cst_86 : f32 to vector<8x128xf32>
    %449 = arith.addf %448, %447 : vector<8x128xf32>
    %450 = arith.divf %448, %449 : vector<8x128xf32>
    %451 = vector.extract_strided_slice %432 {offsets = [0, 256], sizes = [8, 128], strides = [1, 1]} : vector<8x384xf32> to vector<8x128xf32>
    %452 = vector.extract_strided_slice %434 {offsets = [0, 256], sizes = [8, 128], strides = [1, 1]} : vector<8x384xf32> to vector<8x128xf32>
    %453 = arith.addf %452, %10 : vector<8x128xf32>
    %454 = arith.mulf %442, %453 : vector<8x128xf32>
    %455 = arith.addf %451, %454 : vector<8x128xf32>
    %456 = math.tanh %455 : vector<8x128xf32>
    %cst_87 = arith.constant 1.000000e+00 : f32
    %457 = vector.broadcast %cst_87 : f32 to vector<8x128xf32>
    %458 = arith.subf %457, %450 : vector<8x128xf32>
    %459 = arith.mulf %458, %456 : vector<8x128xf32>
    %460 = arith.mulf %450, %431 : vector<8x128xf32>
    %461 = arith.addf %459, %460 : vector<8x128xf32>
    %c120 = arith.constant 120 : index
    %c0_88 = arith.constant 0 : index
    %462 = vector.load %arg13[%c120, %c0_88] : memref<128x384xf32, #tpu.memory_space<vmem>>, vector<8x384xf32>
    %463 = arith.truncf %461 : vector<8x128xf32> to vector<8x128xbf16>
    %cst_89 = arith.constant dense<0.000000e+00> : vector<8x384xf32>
    %464 = tpu.matmul %463, %7, %cst_89 {dimension_numbers = #tpu.dot_dimension_numbers<[1], [0], [0], [1], [0, 0, 1, 1], [], []>} : vector<8x128xbf16>, vector<128x384xbf16>, vector<8x384xf32> -> vector<8x384xf32>
    %465 = vector.extract_strided_slice %462 {offsets = [0, 0], sizes = [8, 128], strides = [1, 1]} : vector<8x384xf32> to vector<8x128xf32>
    %466 = vector.extract_strided_slice %464 {offsets = [0, 0], sizes = [8, 128], strides = [1, 1]} : vector<8x384xf32> to vector<8x128xf32>
    %467 = arith.addf %465, %466 : vector<8x128xf32>
    %468 = arith.negf %467 : vector<8x128xf32>
    %469 = math.exp %468 : vector<8x128xf32>
    %cst_90 = arith.constant 1.000000e+00 : f32
    %470 = vector.broadcast %cst_90 : f32 to vector<8x128xf32>
    %471 = arith.addf %470, %469 : vector<8x128xf32>
    %472 = arith.divf %470, %471 : vector<8x128xf32>
    %473 = vector.extract_strided_slice %462 {offsets = [0, 128], sizes = [8, 128], strides = [1, 1]} : vector<8x384xf32> to vector<8x128xf32>
    %474 = vector.extract_strided_slice %464 {offsets = [0, 128], sizes = [8, 128], strides = [1, 1]} : vector<8x384xf32> to vector<8x128xf32>
    %475 = arith.addf %473, %474 : vector<8x128xf32>
    %476 = arith.negf %475 : vector<8x128xf32>
    %477 = math.exp %476 : vector<8x128xf32>
    %cst_91 = arith.constant 1.000000e+00 : f32
    %478 = vector.broadcast %cst_91 : f32 to vector<8x128xf32>
    %479 = arith.addf %478, %477 : vector<8x128xf32>
    %480 = arith.divf %478, %479 : vector<8x128xf32>
    %481 = vector.extract_strided_slice %462 {offsets = [0, 256], sizes = [8, 128], strides = [1, 1]} : vector<8x384xf32> to vector<8x128xf32>
    %482 = vector.extract_strided_slice %464 {offsets = [0, 256], sizes = [8, 128], strides = [1, 1]} : vector<8x384xf32> to vector<8x128xf32>
    %483 = arith.addf %482, %10 : vector<8x128xf32>
    %484 = arith.mulf %472, %483 : vector<8x128xf32>
    %485 = arith.addf %481, %484 : vector<8x128xf32>
    %486 = math.tanh %485 : vector<8x128xf32>
    %cst_92 = arith.constant 1.000000e+00 : f32
    %487 = vector.broadcast %cst_92 : f32 to vector<8x128xf32>
    %488 = arith.subf %487, %480 : vector<8x128xf32>
    %489 = arith.mulf %488, %486 : vector<8x128xf32>
    %490 = arith.mulf %480, %461 : vector<8x128xf32>
    %491 = arith.addf %489, %490 : vector<8x128xf32>
    %492 = vector.extract_strided_slice %0 {offsets = [120, 0], sizes = [8, 22], strides = [1, 1]} : vector<128x22xbf16> to vector<8x22xbf16>
    %c0_93 = arith.constant 0 : index
    %c0_94 = arith.constant 0 : index
    %493 = vector.load %arg5[%c0_93, %c0_94] : memref<22x384xbf16, #tpu.memory_space<vmem>>, vector<22x384xbf16>
    %cst_95 = arith.constant dense<0.000000e+00> : vector<8x384xf32>
    %494 = tpu.matmul %492, %493, %cst_95 {dimension_numbers = #tpu.dot_dimension_numbers<[1], [0], [0], [1], [0, 0, 1, 1], [], []>} : vector<8x22xbf16>, vector<22x384xbf16>, vector<8x384xf32> -> vector<8x384xf32>
    %c0_96 = arith.constant 0 : index
    %c0_97 = arith.constant 0 : index
    %495 = vector.load %arg6[%c0_96, %c0_97] : memref<1x384xf32, #tpu.memory_space<vmem>>, vector<1x384xf32>
    %496 = vector.broadcast %495 : vector<1x384xf32> to vector<8x384xf32>
    %497 = arith.addf %494, %496 : vector<8x384xf32>
    %498 = vector.extract_strided_slice %497 {offsets = [0, 0], sizes = [8, 128], strides = [1, 1]} : vector<8x384xf32> to vector<8x128xf32>
    %499 = arith.negf %498 : vector<8x128xf32>
    %500 = math.exp %499 : vector<8x128xf32>
    %cst_98 = arith.constant 1.000000e+00 : f32
    %501 = vector.broadcast %cst_98 : f32 to vector<8x128xf32>
    %502 = arith.addf %501, %500 : vector<8x128xf32>
    %503 = arith.divf %501, %502 : vector<8x128xf32>
    %504 = vector.extract_strided_slice %497 {offsets = [0, 128], sizes = [8, 128], strides = [1, 1]} : vector<8x384xf32> to vector<8x128xf32>
    %505 = arith.negf %504 : vector<8x128xf32>
    %506 = math.exp %505 : vector<8x128xf32>
    %cst_99 = arith.constant 1.000000e+00 : f32
    %507 = vector.broadcast %cst_99 : f32 to vector<8x128xf32>
    %508 = arith.addf %507, %506 : vector<8x128xf32>
    %509 = arith.divf %507, %508 : vector<8x128xf32>
    %510 = vector.extract_strided_slice %497 {offsets = [0, 256], sizes = [8, 128], strides = [1, 1]} : vector<8x384xf32> to vector<8x128xf32>
    %c0_100 = arith.constant 0 : index
    %c0_101 = arith.constant 0 : index
    %511 = vector.load %arg7[%c0_100, %c0_101] : memref<1x128xf32, #tpu.memory_space<vmem>>, vector<1x128xf32>
    %512 = vector.shape_cast %511 : vector<1x128xf32> to vector<1x128xf32>
    %513 = vector.broadcast %512 : vector<1x128xf32> to vector<8x128xf32>
    %514 = arith.mulf %503, %513 : vector<8x128xf32>
    %515 = arith.addf %510, %514 : vector<8x128xf32>
    %516 = math.tanh %515 : vector<8x128xf32>
    %cst_102 = arith.constant 1.000000e+00 : f32
    %517 = vector.broadcast %cst_102 : f32 to vector<8x128xf32>
    %518 = arith.subf %517, %509 : vector<8x128xf32>
    %519 = arith.mulf %518, %516 : vector<8x128xf32>
    %520 = arith.truncf %491 : vector<8x128xf32> to vector<8x128xbf16>
    %c0_103 = arith.constant 0 : index
    %c0_104 = arith.constant 0 : index
    %c0_105 = arith.constant 0 : index
    %521 = vector.load %arg8[%c0_103, %c0_104, %c0_105] : memref<2x128x32xbf16, #tpu.memory_space<vmem>>, vector<1x128x32xbf16>
    %522 = vector.shape_cast %521 : vector<1x128x32xbf16> to vector<128x32xbf16>
    %cst_106 = arith.constant dense<0.000000e+00> : vector<8x32xf32>
    %523 = tpu.matmul %520, %522, %cst_106 {dimension_numbers = #tpu.dot_dimension_numbers<[1], [0], [0], [1], [0, 0, 1, 1], [], []>} : vector<8x128xbf16>, vector<128x32xbf16>, vector<8x32xf32> -> vector<8x32xf32>
    %524 = arith.truncf %519 : vector<8x128xf32> to vector<8x128xbf16>
    %c1 = arith.constant 1 : index
    %c0_107 = arith.constant 0 : index
    %c0_108 = arith.constant 0 : index
    %525 = vector.load %arg8[%c1, %c0_107, %c0_108] : memref<2x128x32xbf16, #tpu.memory_space<vmem>>, vector<1x128x32xbf16>
    %526 = vector.shape_cast %525 : vector<1x128x32xbf16> to vector<128x32xbf16>
    %cst_109 = arith.constant dense<0.000000e+00> : vector<8x32xf32>
    %527 = tpu.matmul %524, %526, %cst_109 {dimension_numbers = #tpu.dot_dimension_numbers<[1], [0], [0], [1], [0, 0, 1, 1], [], []>} : vector<8x128xbf16>, vector<128x32xbf16>, vector<8x32xf32> -> vector<8x32xf32>
    %528 = arith.addf %523, %527 : vector<8x32xf32>
    %c0_110 = arith.constant 0 : index
    %c0_111 = arith.constant 0 : index
    %529 = vector.load %arg9[%c0_110, %c0_111] : memref<1x32xf32, #tpu.memory_space<vmem>>, vector<1x32xf32>
    %530 = vector.broadcast %529 : vector<1x32xf32> to vector<8x32xf32>
    %531 = arith.addf %528, %530 : vector<8x32xf32>
    %cst_112 = arith.constant 0.000000e+00 : f32
    %532 = vector.broadcast %cst_112 : f32 to vector<8x32xf32>
    %533 = arith.maximumf %531, %532 : vector<8x32xf32>
    %534 = arith.truncf %533 : vector<8x32xf32> to vector<8x32xbf16>
    %c0_113 = arith.constant 0 : index
    %c0_114 = arith.constant 0 : index
    %535 = vector.load %arg10[%c0_113, %c0_114] : memref<32x5xbf16, #tpu.memory_space<vmem>>, vector<32x5xbf16>
    %cst_115 = arith.constant dense<0.000000e+00> : vector<8x5xf32>
    %536 = tpu.matmul %534, %535, %cst_115 {dimension_numbers = #tpu.dot_dimension_numbers<[1], [0], [0], [1], [0, 0, 1, 1], [], []>} : vector<8x32xbf16>, vector<32x5xbf16>, vector<8x5xf32> -> vector<8x5xf32>
    %c0_116 = arith.constant 0 : index
    %c0_117 = arith.constant 0 : index
    %537 = vector.load %arg11[%c0_116, %c0_117] : memref<1x5xf32, #tpu.memory_space<vmem>>, vector<1x5xf32>
    %538 = vector.broadcast %537 : vector<1x5xf32> to vector<8x5xf32>
    %539 = arith.addf %536, %538 : vector<8x5xf32>
    %c0_118 = arith.constant 0 : index
    %c0_119 = arith.constant 0 : index
    %540 = vector.load %arg12[%c0_118, %c0_119] : memref<8x5xf32, #tpu.memory_space<vmem>>, vector<8x5xf32>
    tpu.vector_store %arg12[%c0_118, %c0_119], %539 {strides = array<i32>} : memref<8x5xf32, #tpu.memory_space<vmem>>, vector<8x5xf32>,
    return
  }
}

</mosaic_0001>

<llo_original>
// kernel: tpu_custom_call.1
$region0: #{tpu_custom_call.1}
  #allocation0 [shape = 'u32[]', space=smem, size = 0x4, offset = 0x4, fixed_abs, tag = 'smem constant byte address 0x4 - core index']
  #allocation1 [shape = 'u32[144,128]{1,0:T(1,128)}', space=vmem, size = 0x12000, scoped, tag = 'internal scratch']
  #allocation2 [shape = 'f32[128,384]{1,0:T(8,128)}', space=vmem, size = 0x30000, scoped, tag = 'scratch operand']
  %s0 = inlined_call_operand.vmem [shape: bf16[128,22], index: 0, kind: input, shape index: {}]
  %s1 = inlined_call_operand.vmem [shape: bf16[22,384], index: 1, kind: input, shape index: {}]
  %s2 = inlined_call_operand.vmem [shape: bf16[128,384], index: 2, kind: input, shape index: {}]
  %s3 = inlined_call_operand.vmem [shape: f32[1,384], index: 3, kind: input, shape index: {}]
  %s4 = inlined_call_operand.hbm [shape: f32[1,128], index: 4, kind: input, shape index: {}]
  %s5 = inlined_call_operand.vmem [shape: bf16[22,384], index: 5, kind: input, shape index: {}]
  %s6 = inlined_call_operand.vmem [shape: f32[1,384], index: 6, kind: input, shape index: {}]
  %s7 = inlined_call_operand.vmem [shape: f32[1,128], index: 7, kind: input, shape index: {}]
  %s8 = inlined_call_operand.vmem [shape: bf16[2,128,32], index: 8, kind: input, shape index: {}]
  %s9 = inlined_call_operand.vmem [shape: f32[1,32], index: 9, kind: input, shape index: {}]
  %s10 = inlined_call_operand.vmem [shape: bf16[32,5], index: 10, kind: input, shape index: {}]
  %s11 = inlined_call_operand.vmem [shape: f32[1,5], index: 11, kind: input, shape index: {}]
  %s12 = inlined_call_operand.hbm [shape: f32[8,5], index: 12, kind: output, shape index: {}]
  %s13 = sld [smem:[#allocation0]]
  $region62: #{tpu_custom_call.1} parent=0
    _
  %s15 = ssub.s32 1, %s13
  %s16 = scalar_select 0, %s15, %s13
  $region1: #{tpu_custom_call.1} parent=0
    #allocation3 [shape = 'u8[512]{0}', space=vmem, size = 0x400, scoped, tag = 'input window, operand 4, single buffered']
    #allocation4 [shape = 's32[1]{0}', space=sflag, size = 0x4, scoped, tag = 'scoped memory for tpu_custom_call.1']
    #allocation5 [shape = 's32[1]{0}', space=sflag, size = 0x4, scoped, tag = 'scoped memory for tpu_custom_call.1']
    #allocation6 [shape = 'u8[4096]{0}', space=vmem, size = 0x1000, scoped, tag = 'output window, operand 0, single buffered']
    %17 = vsyncpa [#allocation4], 0
    %18 = vsyncpa [#allocation5], 0
    // Predicated region
    $region2: #{tpu_custom_call.1} parent=1 // pred_check
      _
    $region3: #{tpu_custom_call.1} parent=1 // pred_check_branch
      %20 = sbr.rel (0) target = $region5
    $region4: #{tpu_custom_call.1} parent=1 // pred_region
      _
    $region5: #{tpu_custom_call.1} parent=1 // pred_fallthru
      _
    // Predicated region
    $region6: #{tpu_custom_call.1} parent=1 // pred_check
      _
    $region7: #{tpu_custom_call.1} parent=1 // pred_check_branch
      %22 = sbr.rel (0) target = $region9
    $region8: #{tpu_custom_call.1} parent=1 // pred_region
      _
    $region9: #{tpu_custom_call.1} parent=1 // pred_fallthru
      _
    // Predicated region
    $region10: #{tpu_custom_call.1} parent=1 // pred_check
      _
    $region11: #{tpu_custom_call.1} parent=1 // pred_check_branch
      %24 = sbr.rel (0) target = $region13
    $region12: #{tpu_custom_call.1} parent=1 // pred_region
      _
    $region13: #{tpu_custom_call.1} parent=1 // pred_fallthru
      _
    // Predicated region
    $region14: #{tpu_custom_call.1} parent=1 // pred_check
      _
    $region15: #{tpu_custom_call.1} parent=1 // pred_check_branch
      %26 = sbr.rel (0) target = $region17
    $region16: #{tpu_custom_call.1} parent=1 // pred_region
      _
    $region17: #{tpu_custom_call.1} parent=1 // pred_fallthru
      _
    // Predicated region
    $region18: #{tpu_custom_call.1} parent=1 // pred_check
      _
    $region19: #{tpu_custom_call.1} parent=1 // pred_check_branch
      %28 = sbr.rel (0) target = $region21
    $region20: #{tpu_custom_call.1} parent=1 // pred_region
      %s30 = ssub.s32 16, 16
      %31 = vsyncadd [#allocation4], %s30
      %s33 = sshll.u32 [#allocation3], 4
      %s34 = int_to_ptr.vmem [resolvable:$true] %s33
      %36 = dma.hbm_to_vmem [thread:$0]  %s4, 16, %s34, [#allocation4]
    $region21: #{tpu_custom_call.1} parent=1 // pred_fallthru
      _
    // Predicated region
    $region22: #{tpu_custom_call.1} parent=1 // pred_check
      _
    $region23: #{tpu_custom_call.1} parent=1 // pred_check_branch
      %38 = sbr.rel (0) target = $region25
    $region24: #{tpu_custom_call.1} parent=1 // pred_region
      _
    $region25: #{tpu_custom_call.1} parent=1 // pred_fallthru
      _
    // Predicated region
    $region26: #{tpu_custom_call.1} parent=1 // pred_check
      _
    $region27: #{tpu_custom_call.1} parent=1 // pred_check_branch
      %40 = sbr.rel (0) target = $region29
    $region28: #{tpu_custom_call.1} parent=1 // pred_region
      _
    $region29: #{tpu_custom_call.1} parent=1 // pred_fallthru
      _
    // Predicated region
    $region30: #{tpu_custom_call.1} parent=1 // pred_check
      _
    $region31: #{tpu_custom_call.1} parent=1 // pred_check_branch
      %42 = sbr.rel (0) target = $region33
    $region32: #{tpu_custom_call.1} parent=1 // pred_region
      _
    $region33: #{tpu_custom_call.1} parent=1 // pred_fallthru
      _
    // Predicated region
    $region34: #{tpu_custom_call.1} parent=1 // pred_check
      _
    $region35: #{tpu_custom_call.1} parent=1 // pred_check_branch
      %44 = sbr.rel (0) target = $region37
    $region36: #{tpu_custom_call.1} parent=1 // pred_region
      _
    $region37: #{tpu_custom_call.1} parent=1 // pred_fallthru
      _
    // Predicated region
    $region38: #{tpu_custom_call.1} parent=1 // pred_check
      _
    $region39: #{tpu_custom_call.1} parent=1 // pred_check_branch
      %46 = sbr.rel (0) target = $region41
    $region40: #{tpu_custom_call.1} parent=1 // pred_region
      _
    $region41: #{tpu_custom_call.1} parent=1 // pred_fallthru
      _
    // Predicated region
    $region42: #{tpu_custom_call.1} parent=1 // pred_check
      _
    $region43: #{tpu_custom_call.1} parent=1 // pred_check_branch
      %48 = sbr.rel (0) target = $region45
    $region44: #{tpu_custom_call.1} parent=1 // pred_region
      _
    $region45: #{tpu_custom_call.1} parent=1 // pred_fallthru
      _
    // Predicated region
    $region46: #{tpu_custom_call.1} parent=1 // pred_check
      _
    $region47: #{tpu_custom_call.1} parent=1 // pred_check_branch
      %50 = sbr.rel (0) target = $region49
    $region48: #{tpu_custom_call.1} parent=1 // pred_region
      _
    $region49: #{tpu_custom_call.1} parent=1 // pred_fallthru
      _
    // Predicated region
    $region50: #{tpu_custom_call.1} parent=1 // pred_check
      _
    $region51: #{tpu_custom_call.1} parent=1 // pred_check_branch
      %52 = sbr.rel (0) target = $region53
    $region52: #{tpu_custom_call.1} parent=1 // pred_region
      %53 = dma.done [#allocation4], 16
    $region53: #{tpu_custom_call.1} parent=1 // pred_fallthru
      _
    %v55 = vld [vmem:[%s0] sm:$0xf]
    %v56 = vld [vmem:[%s0 + $0x4] sm:$0xf]
    %v57 = vld [vmem:[%s0 + $0x8] sm:$0xf]
    %v58 = vld [vmem:[%s0 + $0xc] sm:$0xf]
    %v59 = vld [vmem:[%s0 + $0x10] sm:$0xf]
    %v60 = vld [vmem:[%s0 + $0x14] sm:$0xf]
    %v61 = vld [vmem:[%s0 + $0x18] sm:$0xf]
    %v62 = vld [vmem:[%s0 + $0x1c] sm:$0xf]
    %v63 = vld [vmem:[%s0 + $0x20] sm:$0xf]
    %v64 = vld [vmem:[%s0 + $0x24] sm:$0xf]
    %v65 = vld [vmem:[%s0 + $0x28] sm:$0xf]
    %v66 = vld [vmem:[%s0 + $0x2c] sm:$0xf]
    %v67 = vld [vmem:[%s0 + $0x30] sm:$0xf]
    %v68 = vld [vmem:[%s0 + $0x34] sm:$0xf]
    %v69 = vld [vmem:[%s0 + $0x38] sm:$0xf]
    %v70 = vld [vmem:[%s0 + $0x3c] sm:$0xf]
    %v71 = vld [vmem:[%s1] sm:$0xff]
    %v72 = vld [vmem:[%s1 + $0x8] sm:$0xf]
    %v73 = vld [vmem:[%s1 + $0xc] sm:$0xff]
    %v74 = vld [vmem:[%s1 + $0x14] sm:$0xf]
    %v75 = vld [vmem:[%s1 + $0x18] sm:$0x77]
    %v76 = vld [vmem:[%s1 + $0x20] sm:$0x7]
    %v77 = vld [vmem:[%s3] sm:$0x7]
    %v79 = vlaneseq
    %v80 = vshrl.u32 %v79, 7
    %v81 = vsub.s32 0, %v80
    %v82 = vrot.slane %v77, %v81
    %v83 = vlaneseq
    %v84 = vshrl.u32 %v83, 7
    %v85 = vsub.s32 1, %v84
    %v86 = vrot.slane %v77, %v85
    %v87 = vlaneseq
    %v88 = vshrl.u32 %v87, 7
    %v89 = vsub.s32 2, %v88
    %v90 = vrot.slane %v77, %v89
    %v110 = vunpack.c.l.b16 %v55
    %v111 = vunpack.c.l.b16 %v56
    %v112 = vunpack.c.l.b16 %v57
    %v113 = vunpack.c.l.b16 %v58
    %v114 = vunpack.c.l.b16 %v59
    %v115 = vunpack.c.l.b16 %v60
    %v116 = vunpack.c.l.b16 %v61
    %v117 = vunpack.c.l.b16 %v62
    %v118 = vunpack.c.l.b16 %v63
    %v119 = vunpack.c.l.b16 %v64
    %v120 = vunpack.c.l.b16 %v65
    %v121 = vunpack.c.l.b16 %v66
    %v122 = vunpack.c.l.b16 %v67
    %v123 = vunpack.c.l.b16 %v68
    %v124 = vunpack.c.l.b16 %v69
    %v125 = vunpack.c.l.b16 %v70
    %v126 = vpack.c.b16 %v111, %v110
    %v127 = vpack.c.b16 %v113, %v112
    %v128 = vpack.c.b16 %v115, %v114
    %v129 = vpack.c.b16 %v117, %v116
    %v130 = vpack.c.b16 %v119, %v118
    %v131 = vpack.c.b16 %v121, %v120
    %v132 = vpack.c.b16 %v123, %v122
    %v133 = vpack.c.b16 %v125, %v124
    %v140 = vunpack.c.l.b16 %v71
    %v141 = vunpack.c.h.b16 %v71
    %v142 = vunpack.c.l.b16 %v72
    %v143 = vunpack.c.l.b16 %v73
    %v144 = vunpack.c.h.b16 %v73
    %v145 = vunpack.c.l.b16 %v74
    %v146 = vunpack.c.l.b16 %v75
    %v147 = vunpack.c.h.b16 %v75
    %v148 = vunpack.c.l.b16 %v76
    %v149 = vpack.c.b16 %v143, %v140
    %v150 = vpack.c.b16 %v144, %v141
    %v151 = vpack.c.b16 %v145, %v142
    %v152 = vpack.c.b16 %v146, %v146
    %v153 = vpack.c.b16 %v147, %v147
    %v154 = vpack.c.b16 %v148, %v148
    %vm158 = vcmask 179200
    %v160 = vsel %vm158, %v126, 0
    %v163 = vsel %vm158, %v127, 0
    %v166 = vsel %vm158, %v128, 0
    %v169 = vsel %vm158, %v129, 0
    %v172 = vsel %vm158, %v130, 0
    %v175 = vsel %vm158, %v131, 0
    %v178 = vsel %vm158, %v132, 0
    %v181 = vsel %vm158, %v133, 0
    %vm183 = vcmask 1042432
    %v185 = vsel %vm183, %v152, 0
    %v188 = vsel %vm183, %v153, 0
    %v191 = vsel %vm183, %v154, 0
    %193 = vmatprep.subr.bf16.mxu0 %v150
    %194 = vmatpush1.bf16.msra.mxu0 %v149
    %195 = vmatprep.subr.bf16.mxu0 %v188
    %196 = vmatpush1.bf16.msra.mxu0 %v185
    %197 = vmatprep.subr.bf16.mxu0 0
    %198 = vmatpush1.bf16.msra.mxu0 0
    %199 = vmatprep.subr.bf16.mxu0 0
    %200 = vmatpush1.bf16.msra.mxu0 0
    %201 = vmatprep.subr.bf16.mxu0 0
    %202 = vmatpush1.bf16.msra.mxu0 0
    %203 = vmatprep.subr.bf16.mxu0 0
    %204 = vmatpush1.bf16.msra.mxu0 0
    %205 = vmatprep.subr.bf16.mxu0 0
    %206 = vmatpush1.bf16.msra.mxu0 0
    %207 = vmatprep.subr.bf16.mxu0 0
    %208 = vmatpush1.bf16.msra.mxu0 0
    %209 = vmatprep.subr.bf16.mxu0 0
    %210 = vmatpush1.bf16.msra.mxu0 0
    %211 = vmatprep.subr.bf16.mxu0 0
    %212 = vmatpush1.bf16.msra.mxu0 0
    %213 = vmatprep.subr.bf16.mxu0 0
    %214 = vmatpush1.bf16.msra.mxu0 0
    %215 = vmatprep.subr.bf16.mxu0 0
    %216 = vmatpush1.bf16.msra.mxu0 0
    %217 = vmatprep.subr.bf16.mxu0 0
    %218 = vmatpush1.bf16.msra.mxu0 0
    %219 = vmatprep.subr.bf16.mxu0 0
    %220 = vmatpush1.bf16.msra.mxu0 0
    %221 = vmatprep.subr.bf16.mxu0 0
    %222 = vmatpush1.bf16.msra.mxu0 0
    %223 = vmatprep.subr.bf16.mxu0 0
    %224 = vmatpush1.bf16.msra.mxu0 0
    %225 = vmatprep.mubr.bf16.mxu0 0
    %226 = vmatmul.mubr.bf16.gmra.mrb[0].mxu0 %v160
    %v227 = vpop.f32.mrb[0].mxu0
    %v228 = vadd.f32 %v82, %v227
    %v229 = vpop.f32.mrb[0].mxu0
    %v230 = vadd.f32 %v86, %v229
    %v231 = vpop.f32.mrb[0].mxu0
    %v232 = vadd.f32 %v82, %v231
    %v233 = vpop.f32.mrb[0].mxu0
    %v234 = vadd.f32 %v86, %v233
    %235 = vmatprep.mubr.bf16.mxu0 0
    %236 = vmatmul.mubr.bf16.gmra.mrb[0].mxu0 %v163
    %v237 = vpop.f32.mrb[0].mxu0
    %v238 = vadd.f32 %v82, %v237
    %v239 = vpop.f32.mrb[0].mxu0
    %v240 = vadd.f32 %v86, %v239
    %v241 = vpop.f32.mrb[0].mxu0
    %v242 = vadd.f32 %v82, %v241
    %v243 = vpop.f32.mrb[0].mxu0
    %v244 = vadd.f32 %v86, %v243
    %245 = vmatprep.mubr.bf16.mxu0 0
    %246 = vmatmul.mubr.bf16.gmra.mrb[0].mxu0 %v166
    %v247 = vpop.f32.mrb[0].mxu0
    %v248 = vadd.f32 %v82, %v247
    %v249 = vpop.f32.mrb[0].mxu0
    %v250 = vadd.f32 %v86, %v249
    %v251 = vpop.f32.mrb[0].mxu0
    %v252 = vadd.f32 %v82, %v251
    %v253 = vpop.f32.mrb[0].mxu0
    %v254 = vadd.f32 %v86, %v253
    %255 = vmatprep.mubr.bf16.mxu0 0
    %256 = vmatmul.mubr.bf16.gmra.mrb[0].mxu0 %v169
    %v257 = vpop.f32.mrb[0].mxu0
    %v258 = vadd.f32 %v82, %v257
    %v259 = vpop.f32.mrb[0].mxu0
    %v260 = vadd.f32 %v86, %v259
    %v261 = vpop.f32.mrb[0].mxu0
    %v262 = vadd.f32 %v82, %v261
    %v263 = vpop.f32.mrb[0].mxu0
    %v264 = vadd.f32 %v86, %v263
    %265 = vmatprep.mubr.bf16.mxu0 0
    %266 = vmatmul.mubr.bf16.gmra.mrb[0].mxu0 %v172
    %v267 = vpop.f32.mrb[0].mxu0
    %v268 = vadd.f32 %v82, %v267
    %v269 = vpop.f32.mrb[0].mxu0
    %v270 = vadd.f32 %v86, %v269
    %v271 = vpop.f32.mrb[0].mxu0
    %v272 = vadd.f32 %v82, %v271
    %v273 = vpop.f32.mrb[0].mxu0
    %v274 = vadd.f32 %v86, %v273
    %275 = vmatprep.mubr.bf16.mxu0 0
    %276 = vmatmul.mubr.bf16.gmra.mrb[0].mxu0 %v175
    %v277 = vpop.f32.mrb[0].mxu0
    %v278 = vadd.f32 %v82, %v277
    %v279 = vpop.f32.mrb[0].mxu0
    %v280 = vadd.f32 %v86, %v279
    %v281 = vpop.f32.mrb[0].mxu0
    %v282 = vadd.f32 %v82, %v281
    %v283 = vpop.f32.mrb[0].mxu0
    %v284 = vadd.f32 %v86, %v283
    %285 = vmatprep.mubr.bf16.mxu0 0
    %286 = vmatmul.mubr.bf16.gmra.mrb[0].mxu0 %v178
    %v287 = vpop.f32.mrb[0].mxu0
    %v288 = vadd.f32 %v82, %v287
    %v289 = vpop.f32.mrb[0].mxu0
    %v290 = vadd.f32 %v86, %v289
    %v291 = vpop.f32.mrb[0].mxu0
    %v292 = vadd.f32 %v82, %v291
    %v293 = vpop.f32.mrb[0].mxu0
    %v294 = vadd.f32 %v86, %v293
    %295 = vmatprep.mubr.bf16.mxu0 0
    %296 = vmatmul.mubr.bf16.gmra.mrb[0].mxu0 %v181
    %v297 = vpop.f32.mrb[0].mxu0
    %v298 = vadd.f32 %v82, %v297
    %v299 = vpop.f32.mrb[0].mxu0
    %v300 = vadd.f32 %v86, %v299
    %v301 = vpop.f32.mrb[0].mxu0
    %v302 = vadd.f32 %v82, %v301
    %v303 = vpop.f32.mrb[0].mxu0
    %v304 = vadd.f32 %v86, %v303
    %305 = vdwg.mxu0
    %306 = vmatprep.subr.bf16.mxu0 0
    %307 = vmatpush1.bf16.msra.mxu0 %v151
    %308 = vmatprep.subr.bf16.mxu0 0
    %309 = vmatpush1.bf16.msra.mxu0 %v191
    %310 = vmatprep.subr.bf16.mxu0 0
    %311 = vmatpush1.bf16.msra.mxu0 0
    %312 = vmatprep.subr.bf16.mxu0 0
    %313 = vmatpush1.bf16.msra.mxu0 0
    %314 = vmatprep.subr.bf16.mxu0 0
    %315 = vmatpush1.bf16.msra.mxu0 0
    %316 = vmatprep.subr.bf16.mxu0 0
    %317 = vmatpush1.bf16.msra.mxu0 0
    %318 = vmatprep.subr.bf16.mxu0 0
    %319 = vmatpush1.bf16.msra.mxu0 0
    %320 = vmatprep.subr.bf16.mxu0 0
    %321 = vmatpush1.bf16.msra.mxu0 0
    %322 = vmatprep.subr.bf16.mxu0 0
    %323 = vmatpush1.bf16.msra.mxu0 0
    %324 = vmatprep.subr.bf16.mxu0 0
    %325 = vmatpush1.bf16.msra.mxu0 0
    %326 = vmatprep.subr.bf16.mxu0 0
    %327 = vmatpush1.bf16.msra.mxu0 0
    %328 = vmatprep.subr.bf16.mxu0 0
    %329 = vmatpush1.bf16.msra.mxu0 0
    %330 = vmatprep.subr.bf16.mxu0 0
    %331 = vmatpush1.bf16.msra.mxu0 0
    %332 = vmatprep.subr.bf16.mxu0 0
    %333 = vmatpush1.bf16.msra.mxu0 0
    %334 = vmatprep.subr.bf16.mxu0 0
    %335 = vmatpush1.bf16.msra.mxu0 0
    %336 = vmatprep.subr.bf16.mxu0 0
    %337 = vmatpush1.bf16.msra.mxu0 0
    %338 = vmatprep.mubr.bf16.mxu0 0
    %339 = vmatmul.mubr.bf16.gmra.mrb[0].mxu0 %v160
    %v340 = vpop.f32.mrb[0].mxu0
    %v341 = vadd.f32 %v90, %v340
    %v342 = vpop.f32.mrb[0].mxu0
    %v343 = vpop.f32.mrb[0].mxu0
    %v344 = vadd.f32 %v90, %v343
    %v345 = vpop.f32.mrb[0].mxu0
    %346 = vmatprep.mubr.bf16.mxu0 0
    %347 = vmatmul.mubr.bf16.gmra.mrb[0].mxu0 %v163
    %v348 = vpop.f32.mrb[0].mxu0
    %v349 = vadd.f32 %v90, %v348
    %v350 = vpop.f32.mrb[0].mxu0
    %v351 = vpop.f32.mrb[0].mxu0
    %v352 = vadd.f32 %v90, %v351
    %v353 = vpop.f32.mrb[0].mxu0
    %354 = vmatprep.mubr.bf16.mxu0 0
    %355 = vmatmul.mubr.bf16.gmra.mrb[0].mxu0 %v166
    %v356 = vpop.f32.mrb[0].mxu0
    %v357 = vadd.f32 %v90, %v356
    %v358 = vpop.f32.mrb[0].mxu0
    %v359 = vpop.f32.mrb[0].mxu0
    %v360 = vadd.f32 %v90, %v359
    %v361 = vpop.f32.mrb[0].mxu0
    %362 = vmatprep.mubr.bf16.mxu0 0
    %363 = vmatmul.mubr.bf16.gmra.mrb[0].mxu0 %v169
    %v364 = vpop.f32.mrb[0].mxu0
    %v365 = vadd.f32 %v90, %v364
    %v366 = vpop.f32.mrb[0].mxu0
    %v367 = vpop.f32.mrb[0].mxu0
    %v368 = vadd.f32 %v90, %v367
    %v369 = vpop.f32.mrb[0].mxu0
    %370 = vmatprep.mubr.bf16.mxu0 0
    %371 = vmatmul.mubr.bf16.gmra.mrb[0].mxu0 %v172
    %v372 = vpop.f32.mrb[0].mxu0
    %v373 = vadd.f32 %v90, %v372
    %v374 = vpop.f32.mrb[0].mxu0
    %v375 = vpop.f32.mrb[0].mxu0
    %v376 = vadd.f32 %v90, %v375
    %v377 = vpop.f32.mrb[0].mxu0
    %378 = vmatprep.mubr.bf16.mxu0 0
    %379 = vmatmul.mubr.bf16.gmra.mrb[0].mxu0 %v175
    %v380 = vpop.f32.mrb[0].mxu0
    %v381 = vadd.f32 %v90, %v380
    %v382 = vpop.f32.mrb[0].mxu0
    %v383 = vpop.f32.mrb[0].mxu0
    %v384 = vadd.f32 %v90, %v383
    %v385 = vpop.f32.mrb[0].mxu0
    %386 = vmatprep.mubr.bf16.mxu0 0
    %387 = vmatmul.mubr.bf16.gmra.mrb[0].mxu0 %v178
    %v388 = vpop.f32.mrb[0].mxu0
    %v389 = vadd.f32 %v90, %v388
    %v390 = vpop.f32.mrb[0].mxu0
    %v391 = vpop.f32.mrb[0].mxu0
    %v392 = vadd.f32 %v90, %v391
    %v393 = vpop.f32.mrb[0].mxu0
    %394 = vmatprep.mubr.bf16.mxu0 0
    %395 = vmatmul.mubr.bf16.gmra.mrb[0].mxu0 %v181
    %v396 = vpop.f32.mrb[0].mxu0
    %v397 = vadd.f32 %v90, %v396
    %v398 = vpop.f32.mrb[0].mxu0
    %v399 = vpop.f32.mrb[0].mxu0
    %v400 = vadd.f32 %v90, %v399
    %v401 = vpop.f32.mrb[0].mxu0
    %402 = vdwg.mxu0
    %403 = vst [vmem:[#allocation2] sm:$0xff] %v228
    %404 = vst [vmem:[#allocation2 + $0x8] sm:$0xff] %v230
    %405 = vst [vmem:[#allocation2 + $0x10] sm:$0xff] %v341
    %406 = vst [vmem:[#allocation2 + $0x18] sm:$0xff] %v232
    %407 = vst [vmem:[#allocation2 + $0x20] sm:$0xff] %v234
    %408 = vst [vmem:[#allocation2 + $0x28] sm:$0xff] %v344
    %409 = vst [vmem:[#allocation2 + $0x30] sm:$0xff] %v238
    %410 = vst [vmem:[#allocation2 + $0x38] sm:$0xff] %v240
    %411 = vst [vmem:[#allocation2 + $0x40] sm:$0xff] %v349
    %412 = vst [vmem:[#allocation2 + $0x48] sm:$0xff] %v242
    %413 = vst [vmem:[#allocation2 + $0x50] sm:$0xff] %v244
    %414 = vst [vmem:[#allocation2 + $0x58] sm:$0xff] %v352
    %415 = vst [vmem:[#allocation2 + $0x60] sm:$0xff] %v248
    %416 = vst [vmem:[#allocation2 + $0x68] sm:$0xff] %v250
    %417 = vst [vmem:[#allocation2 + $0x70] sm:$0xff] %v357
    %418 = vst [vmem:[#allocation2 + $0x78] sm:$0xff] %v252
    %419 = vst [vmem:[#allocation2 + $0x80] sm:$0xff] %v254
    %420 = vst [vmem:[#allocation2 + $0x88] sm:$0xff] %v360
    %421 = vst [vmem:[#allocation2 + $0x90] sm:$0xff] %v258
    %422 = vst [vmem:[#allocation2 + $0x98] sm:$0xff] %v260
    %423 = vst [vmem:[#allocation2 + $0xa0] sm:$0xff] %v365
    %424 = vst [vmem:[#allocation2 + $0xa8] sm:$0xff] %v262
    %425 = vst [vmem:[#allocation2 + $0xb0] sm:$0xff] %v264
    %426 = vst [vmem:[#allocation2 + $0xb8] sm:$0xff] %v368
    %427 = vst [vmem:[#allocation2 + $0xc0] sm:$0xff] %v268
    %428 = vst [vmem:[#allocation2 + $0xc8] sm:$0xff] %v270
    %429 = vst [vmem:[#allocation2 + $0xd0] sm:$0xff] %v373
    %430 = vst [vmem:[#allocation2 + $0xd8] sm:$0xff] %v272
    %431 = vst [vmem:[#allocation2 + $0xe0] sm:$0xff] %v274
    %432 = vst [vmem:[#allocation2 + $0xe8] sm:$0xff] %v376
    %433 = vst [vmem:[#allocation2 + $0xf0] sm:$0xff] %v278
    %434 = vst [vmem:[#allocation2 + $0xf8] sm:$0xff] %v280
    %435 = vst [vmem:[#allocation2 + $0x100] sm:$0xff] %v381
    %436 = vst [vmem:[#allocation2 + $0x108] sm:$0xff] %v282
    %437 = vst [vmem:[#allocation2 + $0x110] sm:$0xff] %v284
    %438 = vst [vmem:[#allocation2 + $0x118] sm:$0xff] %v384
    %439 = vst [vmem:[#allocation2 + $0x120] sm:$0xff] %v288
    %440 = vst [vmem:[#allocation2 + $0x128] sm:$0xff] %v290
    %441 = vst [vmem:[#allocation2 + $0x130] sm:$0xff] %v389
    %442 = vst [vmem:[#allocation2 + $0x138] sm:$0xff] %v292
    %443 = vst [vmem:[#allocation2 + $0x140] sm:$0xff] %v294
    %444 = vst [vmem:[#allocation2 + $0x148] sm:$0xff] %v392
    %445 = vst [vmem:[#allocation2 + $0x150] sm:$0xff] %v298
    %446 = vst [vmem:[#allocation2 + $0x158] sm:$0xff] %v300
    %447 = vst [vmem:[#allocation2 + $0x160] sm:$0xff] %v397
    %448 = vst [vmem:[#allocation2 + $0x168] sm:$0xff] %v302
    %449 = vst [vmem:[#allocation2 + $0x170] sm:$0xff] %v304
    %450 = vst [vmem:[#allocation2 + $0x178] sm:$0xff] %v400
    %v451 = vld [vmem:[%s2] sm:$0xff]
    %v452 = vld [vmem:[%s2 + $0x8] sm:$0xf]
    %v453 = vld [vmem:[%s2 + $0xc] sm:$0xff]
    %v454 = vld [vmem:[%s2 + $0x14] sm:$0xf]
    %v455 = vld [vmem:[%s2 + $0x18] sm:$0xff]
    %v456 = vld [vmem:[%s2 + $0x20] sm:$0xf]
    %v457 = vld [vmem:[%s2 + $0x24] sm:$0xff]
    %v458 = vld [vmem:[%s2 + $0x2c] sm:$0xf]
    %v459 = vld [vmem:[%s2 + $0x30] sm:$0xff]
    %v460 = vld [vmem:[%s2 + $0x38] sm:$0xf]
    %v461 = vld [vmem:[%s2 + $0x3c] sm:$0xff]
    %v462 = vld [vmem:[%s2 + $0x44] sm:$0xf]
    %v463 = vld [vmem:[%s2 + $0x48] sm:$0xff]
    %v464 = vld [vmem:[%s2 + $0x50] sm:$0xf]
    %v465 = vld [vmem:[%s2 + $0x54] sm:$0xff]
    %v466 = vld [vmem:[%s2 + $0x5c] sm:$0xf]
    %v467 = vld [vmem:[%s2 + $0x60] sm:$0xff]
    %v468 = vld [vmem:[%s2 + $0x68] sm:$0xf]
    %v469 = vld [vmem:[%s2 + $0x6c] sm:$0xff]
    %v470 = vld [vmem:[%s2 + $0x74] sm:$0xf]
    %v471 = vld [vmem:[%s2 + $0x78] sm:$0xff]
    %v472 = vld [vmem:[%s2 + $0x80] sm:$0xf]
    %v473 = vld [vmem:[%s2 + $0x84] sm:$0xff]
    %v474 = vld [vmem:[%s2 + $0x8c] sm:$0xf]
    %v475 = vld [vmem:[%s2 + $0x90] sm:$0xff]
    %v476 = vld [vmem:[%s2 + $0x98] sm:$0xf]
    %v477 = vld [vmem:[%s2 + $0x9c] sm:$0xff]
    %v478 = vld [vmem:[%s2 + $0xa4] sm:$0xf]
    %v479 = vld [vmem:[%s2 + $0xa8] sm:$0xff]
    %v480 = vld [vmem:[%s2 + $0xb0] sm:$0xf]
    %v481 = vld [vmem:[%s2 + $0xb4] sm:$0xff]
    %v482 = vld [vmem:[%s2 + $0xbc] sm:$0xf]
    %v483 = vld [vmem:[#allocation3] sm:$0x1]
    %v485 = vlaneseq
    %v486 = vshrl.u32 %v485, 7
    %v487 = vsub.s32 0, %v486
    %v488 = vrot.slane %v483, %v487
    %v490 = vld [vmem:[#allocation2] sm:$0xff]
    %v491 = vld [vmem:[#allocation2 + $0x8] sm:$0xff]
    %v492 = vld [vmem:[#allocation2 + $0x10] sm:$0xff]
    %v525 = vunpack.c.l.b16 %v451
    %v526 = vunpack.c.h.b16 %v451
    %v527 = vunpack.c.l.b16 %v452
    %v528 = vunpack.c.l.b16 %v453
    %v529 = vunpack.c.h.b16 %v453
    %v530 = vunpack.c.l.b16 %v454
    %v531 = vunpack.c.l.b16 %v455
    %v532 = vunpack.c.h.b16 %v455
    %v533 = vunpack.c.l.b16 %v456
    %v534 = vunpack.c.l.b16 %v457
    %v535 = vunpack.c.h.b16 %v457
    %v536 = vunpack.c.l.b16 %v458
    %v537 = vunpack.c.l.b16 %v459
    %v538 = vunpack.c.h.b16 %v459
    %v539 = vunpack.c.l.b16 %v460
    %v540 = vunpack.c.l.b16 %v461
    %v541 = vunpack.c.h.b16 %v461
    %v542 = vunpack.c.l.b16 %v462
    %v543 = vunpack.c.l.b16 %v463
    %v544 = vunpack.c.h.b16 %v463
    %v545 = vunpack.c.l.b16 %v464
    %v546 = vunpack.c.l.b16 %v465
    %v547 = vunpack.c.h.b16 %v465
    %v548 = vunpack.c.l.b16 %v466
    %v549 = vunpack.c.l.b16 %v467
    %v550 = vunpack.c.h.b16 %v467
    %v551 = vunpack.c.l.b16 %v468
    %v552 = vunpack.c.l.b16 %v469
    %v553 = vunpack.c.h.b16 %v469
    %v554 = vunpack.c.l.b16 %v470
    %v555 = vunpack.c.l.b16 %v471
    %v556 = vunpack.c.h.b16 %v471
    %v557 = vunpack.c.l.b16 %v472
    %v558 = vunpack.c.l.b16 %v473
    %v559 = vunpack.c.h.b16 %v473
    %v560 = vunpack.c.l.b16 %v474
    %v561 = vunpack.c.l.b16 %v475
    %v562 = vunpack.c.h.b16 %v475
    %v563 = vunpack.c.l.b16 %v476
    %v564 = vunpack.c.l.b16 %v477
    %v565 = vunpack.c.h.b16 %v477
    %v566 = vunpack.c.l.b16 %v478
    %v567 = vunpack.c.l.b16 %v479
    %v568 = vunpack.c.h.b16 %v479
    %v569 = vunpack.c.l.b16 %v480
    %v570 = vunpack.c.l.b16 %v481
    %v571 = vunpack.c.h.b16 %v481
    %v572 = vunpack.c.l.b16 %v482
    %v573 = vpack.c.b16 %v528, %v525
    %v574 = vpack.c.b16 %v529, %v526
    %v575 = vpack.c.b16 %v530, %v527
    %v576 = vpack.c.b16 %v534, %v531
    %v577 = vpack.c.b16 %v535, %v532
    %v578 = vpack.c.b16 %v536, %v533
    %v579 = vpack.c.b16 %v540, %v537
    %v580 = vpack.c.b16 %v541, %v538
    %v581 = vpack.c.b16 %v542, %v539
    %v582 = vpack.c.b16 %v546, %v543
    %v583 = vpack.c.b16 %v547, %v544
    %v584 = vpack.c.b16 %v548, %v545
    %v585 = vpack.c.b16 %v552, %v549
    %v586 = vpack.c.b16 %v553, %v550
    %v587 = vpack.c.b16 %v554, %v551
    %v588 = vpack.c.b16 %v558, %v555
    %v589 = vpack.c.b16 %v559, %v556
    %v590 = vpack.c.b16 %v560, %v557
    %v591 = vpack.c.b16 %v564, %v561
    %v592 = vpack.c.b16 %v565, %v562
    %v593 = vpack.c.b16 %v566, %v563
    %v594 = vpack.c.b16 %v570, %v567
    %v595 = vpack.c.b16 %v571, %v568
    %v596 = vpack.c.b16 %v572, %v569
    %621 = vmatprep.subr.bf16.mxu0 %v574
    %622 = vmatpush1.bf16.msra.mxu0 %v573
    %623 = vmatprep.subr.bf16.mxu0 %v577
    %624 = vmatpush1.bf16.msra.mxu0 %v576
    %625 = vmatprep.subr.bf16.mxu0 %v580
    %626 = vmatpush1.bf16.msra.mxu0 %v579
    %627 = vmatprep.subr.bf16.mxu0 %v583
    %628 = vmatpush1.bf16.msra.mxu0 %v582
    %629 = vmatprep.subr.bf16.mxu0 %v586
    %630 = vmatpush1.bf16.msra.mxu0 %v585
    %631 = vmatprep.subr.bf16.mxu0 %v589
    %632 = vmatpush1.bf16.msra.mxu0 %v588
    %633 = vmatprep.subr.bf16.mxu0 %v592
    %634 = vmatpush1.bf16.msra.mxu0 %v591
    %635 = vmatprep.subr.bf16.mxu0 %v595
    %636 = vmatpush1.bf16.msra.mxu0 %v594
    %637 = vmatprep.subr.bf16.mxu0 0
    %638 = vmatpush1.bf16.msra.mxu0 0
    %639 = vmatprep.subr.bf16.mxu0 0
    %640 = vmatpush1.bf16.msra.mxu0 0
    %641 = vmatprep.subr.bf16.mxu0 0
    %642 = vmatpush1.bf16.msra.mxu0 0
    %643 = vmatprep.subr.bf16.mxu0 0
    %644 = vmatpush1.bf16.msra.mxu0 0
    %645 = vmatprep.subr.bf16.mxu0 0
    %646 = vmatpush1.bf16.msra.mxu0 0
    %647 = vmatprep.subr.bf16.mxu0 0
    %648 = vmatpush1.bf16.msra.mxu0 0
    %649 = vmatprep.subr.bf16.mxu0 0
    %650 = vmatpush1.bf16.msra.mxu0 0
    %651 = vmatprep.subr.bf16.mxu0 0
    %652 = vmatpush1.bf16.msra.mxu0 0
    %653 = vmatprep.mubr.bf16.mxu0 0
    %654 = vmatmul.mubr.bf16.gmra.mrb[0].mxu0 0
    %v655 = vpop.f32.mrb[0].mxu0
    %v656 = vadd.f32 0.0, %v655
    %v657 = vpop.f32.mrb[0].mxu0
    %v658 = vadd.f32 0.0, %v657
    %v659 = vpop.f32.mrb[0].mxu0
    %v660 = vpop.f32.mrb[0].mxu0
    %661 = vdwg.mxu0
    %662 = vmatprep.subr.bf16.mxu0 0
    %663 = vmatpush1.bf16.msra.mxu0 %v575
    %664 = vmatprep.subr.bf16.mxu0 0
    %665 = vmatpush1.bf16.msra.mxu0 %v578
    %666 = vmatprep.subr.bf16.mxu0 0
    %667 = vmatpush1.bf16.msra.mxu0 %v581
    %668 = vmatprep.subr.bf16.mxu0 0
    %669 = vmatpush1.bf16.msra.mxu0 %v584
    %670 = vmatprep.subr.bf16.mxu0 0
    %671 = vmatpush1.bf16.msra.mxu0 %v587
    %672 = vmatprep.subr.bf16.mxu0 0
    %673 = vmatpush1.bf16.msra.mxu0 %v590
    %674 = vmatprep.subr.bf16.mxu0 0
    %675 = vmatpush1.bf16.msra.mxu0 %v593
    %676 = vmatprep.subr.bf16.mxu0 0
    %677 = vmatpush1.bf16.msra.mxu0 %v596
    %678 = vmatprep.subr.bf16.mxu0 0
    %679 = vmatpush1.bf16.msra.mxu0 0
    %680 = vmatprep.subr.bf16.mxu0 0
    %681 = vmatpush1.bf16.msra.mxu0 0
    %682 = vmatprep.subr.bf16.mxu0 0
    %683 = vmatpush1.bf16.msra.mxu0 0
    %684 = vmatprep.subr.bf16.mxu0 0
    %685 = vmatpush1.bf16.msra.mxu0 0
    %686 = vmatprep.subr.bf16.mxu0 0
    %687 = vmatpush1.bf16.msra.mxu0 0
    %688 = vmatprep.subr.bf16.mxu0 0
    %689 = vmatpush1.bf16.msra.mxu0 0
    %690 = vmatprep.subr.bf16.mxu0 0
    %691 = vmatpush1.bf16.msra.mxu0 0
    %692 = vmatprep.subr.bf16.mxu0 0
    %693 = vmatpush1.bf16.msra.mxu0 0
    %694 = vmatprep.mubr.bf16.mxu0 0
    %695 = vmatmul.mubr.bf16.gmra.mrb[0].mxu0 0
    %v696 = vpop.f32.mrb[0].mxu0
    %v697 = vadd.f32 0.0, %v696
    %v698 = vpop.f32.mrb[0].mxu0
    %v699 = vpop.f32.mrb[0].mxu0
    %v700 = vpop.f32.mrb[0].mxu0
    %701 = vdwg.mxu0
    %v702 = vadd.f32 %v490, %v656
    %v703 = vxor.u32 %v702, 2147483648
    %v704 = vmul.f32 %v703, 1.442695
    %v705 = vpow.pop %v704
    %v706 = vadd.f32 %v705, 1.0
    %v707 = vrcp.pop %v706
    %v708 = vmul.f32 1.0, %v707
    %v709 = vadd.f32 %v491, %v658
    %v710 = vxor.u32 %v709, 2147483648
    %v711 = vmul.f32 %v710, 1.442695
    %v712 = vpow.pop %v711
    %v713 = vadd.f32 %v712, 1.0
    %v714 = vrcp.pop %v713
    %v715 = vmul.f32 1.0, %v714
    %v716 = vadd.f32 %v697, %v488
    %v717 = vmul.f32 %v708, %v716
    %v718 = vadd.f32 %v492, %v717
    %v719 = vtanh.pop %v718
    %v720 = vsub.f32 1.0, %v715
    %v721 = vmul.f32 %v720, %v719
    %v722 = vmul.f32 %v715, 0.0
    %v723 = vadd.f32 %v721, %v722
    %v724 = vld [vmem:[#allocation2 + $0x18] sm:$0xff]
    %v725 = vld [vmem:[#allocation2 + $0x20] sm:$0xff]
    %v726 = vld [vmem:[#allocation2 + $0x28] sm:$0xff]
    %v727 = vpack.c.bf16 %v723, %v723
    %728 = vmatprep.subr.bf16.mxu0 %v574
    %729 = vmatpush1.bf16.msra.mxu0 %v573
    %730 = vmatprep.subr.bf16.mxu0 %v577
    %731 = vmatpush1.bf16.msra.mxu0 %v576
    %732 = vmatprep.subr.bf16.mxu0 %v580
    %733 = vmatpush1.bf16.msra.mxu0 %v579
    %734 = vmatprep.subr.bf16.mxu0 %v583
    %735 = vmatpush1.bf16.msra.mxu0 %v582
    %736 = vmatprep.subr.bf16.mxu0 %v586
    %737 = vmatpush1.bf16.msra.mxu0 %v585
    %738 = vmatprep.subr.bf16.mxu0 %v589
    %739 = vmatpush1.bf16.msra.mxu0 %v588
    %740 = vmatprep.subr.bf16.mxu0 %v592
    %741 = vmatpush1.bf16.msra.mxu0 %v591
    %742 = vmatprep.subr.bf16.mxu0 %v595
    %743 = vmatpush1.bf16.msra.mxu0 %v594
    %744 = vmatprep.subr.bf16.mxu0 0
    %745 = vmatpush1.bf16.msra.mxu0 0
    %746 = vmatprep.subr.bf16.mxu0 0
    %747 = vmatpush1.bf16.msra.mxu0 0
    %748 = vmatprep.subr.bf16.mxu0 0
    %749 = vmatpush1.bf16.msra.mxu0 0
    %750 = vmatprep.subr.bf16.mxu0 0
    %751 = vmatpush1.bf16.msra.mxu0 0
    %752 = vmatprep.subr.bf16.mxu0 0
    %753 = vmatpush1.bf16.msra.mxu0 0
    %754 = vmatprep.subr.bf16.mxu0 0
    %755 = vmatpush1.bf16.msra.mxu0 0
    %756 = vmatprep.subr.bf16.mxu0 0
    %757 = vmatpush1.bf16.msra.mxu0 0
    %758 = vmatprep.subr.bf16.mxu0 0
    %759 = vmatpush1.bf16.msra.mxu0 0
    %760 = vmatprep.mubr.bf16.mxu0 0
    %761 = vmatmul.mubr.bf16.gmra.mrb[0].mxu0 %v727
    %v762 = vpop.f32.mrb[0].mxu0
    %v763 = vadd.f32 0.0, %v762
    %v764 = vpop.f32.mrb[0].mxu0
    %v765 = vadd.f32 0.0, %v764
    %v766 = vpop.f32.mrb[0].mxu0
    %v767 = vpop.f32.mrb[0].mxu0
    %768 = vdwg.mxu0
    %769 = vmatprep.subr.bf16.mxu0 0
    %770 = vmatpush1.bf16.msra.mxu0 %v575
    %771 = vmatprep.subr.bf16.mxu0 0
    %772 = vmatpush1.bf16.msra.mxu0 %v578
    %773 = vmatprep.subr.bf16.mxu0 0
    %774 = vmatpush1.bf16.msra.mxu0 %v581
    %775 = vmatprep.subr.bf16.mxu0 0
    %776 = vmatpush1.bf16.msra.mxu0 %v584
    %777 = vmatprep.subr.bf16.mxu0 0
    %778 = vmatpush1.bf16.msra.mxu0 %v587
    %779 = vmatprep.subr.bf16.mxu0 0
    %780 = vmatpush1.bf16.msra.mxu0 %v590
    %781 = vmatprep.subr.bf16.mxu0 0
    %782 = vmatpush1.bf16.msra.mxu0 %v593
    %783 = vmatprep.subr.bf16.mxu0 0
    %784 = vmatpush1.bf16.msra.mxu0 %v596
    %785 = vmatprep.subr.bf16.mxu0 0
    %786 = vmatpush1.bf16.msra.mxu0 0
    %787 = vmatprep.subr.bf16.mxu0 0
    %788 = vmatpush1.bf16.msra.mxu0 0
    %789 = vmatprep.subr.bf16.mxu0 0
    %790 = vmatpush1.bf16.msra.mxu0 0
    %791 = vmatprep.subr.bf16.mxu0 0
    %792 = vmatpush1.bf16.msra.mxu0 0
    %793 = vmatprep.subr.bf16.mxu0 0
    %794 = vmatpush1.bf16.msra.mxu0 0
    %795 = vmatprep.subr.bf16.mxu0 0
    %796 = vmatpush1.bf16.msra.mxu0 0
    %797 = vmatprep.subr.bf16.mxu0 0
    %798 = vmatpush1.bf16.msra.mxu0 0
    %799 = vmatprep.subr.bf16.mxu0 0
    %800 = vmatpush1.bf16.msra.mxu0 0
    %801 = vmatprep.mubr.bf16.mxu0 0
    %802 = vmatmul.mubr.bf16.gmra.mrb[0].mxu0 %v727
    %v803 = vpop.f32.mrb[0].mxu0
    %v804 = vadd.f32 0.0, %v803
    %v805 = vpop.f32.mrb[0].mxu0
    %v806 = vpop.f32.mrb[0].mxu0
    %v807 = vpop.f32.mrb[0].mxu0
    %808 = vdwg.mxu0
    %v809 = vadd.f32 %v724, %v763
    %v810 = vxor.u32 %v809, 2147483648
    %v811 = vmul.f32 %v810, 1.442695
    %v812 = vpow.pop %v811
    %v813 = vadd.f32 %v812, 1.0
    %v814 = vrcp.pop %v813
    %v815 = vmul.f32 1.0, %v814
    %v816 = vadd.f32 %v725, %v765
    %v817 = vxor.u32 %v816, 2147483648
    %v818 = vmul.f32 %v817, 1.442695
    %v819 = vpow.pop %v818
    %v820 = vadd.f32 %v819, 1.0
    %v821 = vrcp.pop %v820
    %v822 = vmul.f32 1.0, %v821
    %v823 = vadd.f32 %v804, %v488
    %v824 = vmul.f32 %v815, %v823
    %v825 = vadd.f32 %v726, %v824
    %v826 = vtanh.pop %v825
    %v827 = vsub.f32 1.0, %v822
    %v828 = vmul.f32 %v827, %v826
    %v829 = vmul.f32 %v822, %v723
    %v830 = vadd.f32 %v828, %v829
    %v831 = vld [vmem:[#allocation2 + $0x30] sm:$0xff]
    %v832 = vld [vmem:[#allocation2 + $0x38] sm:$0xff]
    %v833 = vld [vmem:[#allocation2 + $0x40] sm:$0xff]
    %v834 = vpack.c.bf16 %v830, %v830
    %835 = vmatprep.subr.bf16.mxu0 %v574
    %836 = vmatpush1.bf16.msra.mxu0 %v573
    %837 = vmatprep.subr.bf16.mxu0 %v577
    %838 = vmatpush1.bf16.msra.mxu0 %v576
    %839 = vmatprep.subr.bf16.mxu0 %v580
    %840 = vmatpush1.bf16.msra.mxu0 %v579
    %841 = vmatprep.subr.bf16.mxu0 %v583
    %842 = vmatpush1.bf16.msra.mxu0 %v582
    %843 = vmatprep.subr.bf16.mxu0 %v586
    %844 = vmatpush1.bf16.msra.mxu0 %v585
    %845 = vmatprep.subr.bf16.mxu0 %v589
    %846 = vmatpush1.bf16.msra.mxu0 %v588
    %847 = vmatprep.subr.bf16.mxu0 %v592
    %848 = vmatpush1.bf16.msra.mxu0 %v591
    %849 = vmatprep.subr.bf16.mxu0 %v595
    %850 = vmatpush1.bf16.msra.mxu0 %v594
    %851 = vmatprep.subr.bf16.mxu0 0
    %852 = vmatpush1.bf16.msra.mxu0 0
    %853 = vmatprep.subr.bf16.mxu0 0
    %854 = vmatpush1.bf16.msra.mxu0 0
    %855 = vmatprep.subr.bf16.mxu0 0
    %856 = vmatpush1.bf16.msra.mxu0 0
    %857 = vmatprep.subr.bf16.mxu0 0
    %858 = vmatpush1.bf16.msra.mxu0 0
    %859 = vmatprep.subr.bf16.mxu0 0
    %860 = vmatpush1.bf16.msra.mxu0 0
    %861 = vmatprep.subr.bf16.mxu0 0
    %862 = vmatpush1.bf16.msra.mxu0 0
    %863 = vmatprep.subr.bf16.mxu0 0
    %864 = vmatpush1.bf16.msra.mxu0 0
    %865 = vmatprep.subr.bf16.mxu0 0
    %866 = vmatpush1.bf16.msra.mxu0 0
    %867 = vmatprep.mubr.bf16.mxu0 0
    %868 = vmatmul.mubr.bf16.gmra.mrb[0].mxu0 %v834
    %v869 = vpop.f32.mrb[0].mxu0
    %v870 = vadd.f32 0.0, %v869
    %v871 = vpop.f32.mrb[0].mxu0
    %v872 = vadd.f32 0.0, %v871
    %v873 = vpop.f32.mrb[0].mxu0
    %v874 = vpop.f32.mrb[0].mxu0
    %875 = vdwg.mxu0
    %876 = vmatprep.subr.bf16.mxu0 0
    %877 = vmatpush1.bf16.msra.mxu0 %v575
    %878 = vmatprep.subr.bf16.mxu0 0
    %879 = vmatpush1.bf16.msra.mxu0 %v578
    %880 = vmatprep.subr.bf16.mxu0 0
    %881 = vmatpush1.bf16.msra.mxu0 %v581
    %882 = vmatprep.subr.bf16.mxu0 0
    %883 = vmatpush1.bf16.msra.mxu0 %v584
    %884 = vmatprep.subr.bf16.mxu0 0
    %885 = vmatpush1.bf16.msra.mxu0 %v587
    %886 = vmatprep.subr.bf16.mxu0 0
    %887 = vmatpush1.bf16.msra.mxu0 %v590
    %888 = vmatprep.subr.bf16.mxu0 0
    %889 = vmatpush1.bf16.msra.mxu0 %v593
    %890 = vmatprep.subr.bf16.mxu0 0
    %891 = vmatpush1.bf16.msra.mxu0 %v596
    %892 = vmatprep.subr.bf16.mxu0 0
    %893 = vmatpush1.bf16.msra.mxu0 0
    %894 = vmatprep.subr.bf16.mxu0 0
    %895 = vmatpush1.bf16.msra.mxu0 0
    %896 = vmatprep.subr.bf16.mxu0 0
    %897 = vmatpush1.bf16.msra.mxu0 0
    %898 = vmatprep.subr.bf16.mxu0 0
    %899 = vmatpush1.bf16.msra.mxu0 0
    %900 = vmatprep.subr.bf16.mxu0 0
    %901 = vmatpush1.bf16.msra.mxu0 0
    %902 = vmatprep.subr.bf16.mxu0 0
    %903 = vmatpush1.bf16.msra.mxu0 0
    %904 = vmatprep.subr.bf16.mxu0 0
    %905 = vmatpush1.bf16.msra.mxu0 0
    %906 = vmatprep.subr.bf16.mxu0 0
    %907 = vmatpush1.bf16.msra.mxu0 0
    %908 = vmatprep.mubr.bf16.mxu0 0
    %909 = vmatmul.mubr.bf16.gmra.mrb[0].mxu0 %v834
    %v910 = vpop.f32.mrb[0].mxu0
    %v911 = vadd.f32 0.0, %v910
    %v912 = vpop.f32.mrb[0].mxu0
    %v913 = vpop.f32.mrb[0].mxu0
    %v914 = vpop.f32.mrb[0].mxu0
    %915 = vdwg.mxu0
    %v916 = vadd.f32 %v831, %v870
    %v917 = vxor.u32 %v916, 2147483648
    %v918 = vmul.f32 %v917, 1.442695
    %v919 = vpow.pop %v918
    %v920 = vadd.f32 %v919, 1.0
    %v921 = vrcp.pop %v920
    %v922 = vmul.f32 1.0, %v921
    %v923 = vadd.f32 %v832, %v872
    %v924 = vxor.u32 %v923, 2147483648
    %v925 = vmul.f32 %v924, 1.442695
    %v926 = vpow.pop %v925
    %v927 = vadd.f32 %v926, 1.0
    %v928 = vrcp.pop %v927
    %v929 = vmul.f32 1.0, %v928
    %v930 = vadd.f32 %v911, %v488
    %v931 = vmul.f32 %v922, %v930
    %v932 = vadd.f32 %v833, %v931
    %v933 = vtanh.pop %v932
    %v934 = vsub.f32 1.0, %v929
    %v935 = vmul.f32 %v934, %v933
    %v936 = vmul.f32 %v929, %v830
    %v937 = vadd.f32 %v935, %v936
    %v938 = vld [vmem:[#allocation2 + $0x48] sm:$0xff]
    %v939 = vld [vmem:[#allocation2 + $0x50] sm:$0xff]
    %v940 = vld [vmem:[#allocation2 + $0x58] sm:$0xff]
    %v941 = vpack.c.bf16 %v937, %v937
    %942 = vmatprep.subr.bf16.mxu0 %v574
    %943 = vmatpush1.bf16.msra.mxu0 %v573
    %944 = vmatprep.subr.bf16.mxu0 %v577
    %945 = vmatpush1.bf16.msra.mxu0 %v576
    %946 = vmatprep.subr.bf16.mxu0 %v580
    %947 = vmatpush1.bf16.msra.mxu0 %v579
    %948 = vmatprep.subr.bf16.mxu0 %v583
    %949 = vmatpush1.bf16.msra.mxu0 %v582
    %950 = vmatprep.subr.bf16.mxu0 %v586
    %951 = vmatpush1.bf16.msra.mxu0 %v585
    %952 = vmatprep.subr.bf16.mxu0 %v589
    %953 = vmatpush1.bf16.msra.mxu0 %v588
    %954 = vmatprep.subr.bf16.mxu0 %v592
    %955 = vmatpush1.bf16.msra.mxu0 %v591
    %956 = vmatprep.subr.bf16.mxu0 %v595
    %957 = vmatpush1.bf16.msra.mxu0 %v594
    %958 = vmatprep.subr.bf16.mxu0 0
    %959 = vmatpush1.bf16.msra.mxu0 0
    %960 = vmatprep.subr.bf16.mxu0 0
    %961 = vmatpush1.bf16.msra.mxu0 0
    %962 = vmatprep.subr.bf16.mxu0 0
    %963 = vmatpush1.bf16.msra.mxu0 0
    %964 = vmatprep.subr.bf16.mxu0 0
    %965 = vmatpush1.bf16.msra.mxu0 0
    %966 = vmatprep.subr.bf16.mxu0 0
    %967 = vmatpush1.bf16.msra.mxu0 0
    %968 = vmatprep.subr.bf16.mxu0 0
    %969 = vmatpush1.bf16.msra.mxu0 0
    %970 = vmatprep.subr.bf16.mxu0 0
    %971 = vmatpush1.bf16.msra.mxu0 0
    %972 = vmatprep.subr.bf16.mxu0 0
    %973 = vmatpush1.bf16.msra.mxu0 0
    %974 = vmatprep.mubr.bf16.mxu0 0
    %975 = vmatmul.mubr.bf16.gmra.mrb[0].mxu0 %v941
    %v976 = vpop.f32.mrb[0].mxu0
    %v977 = vadd.f32 0.0, %v976
    %v978 = vpop.f32.mrb[0].mxu0
    %v979 = vadd.f32 0.0, %v978
    %v980 = vpop.f32.mrb[0].mxu0
    %v981 = vpop.f32.mrb[0].mxu0
    %982 = vdwg.mxu0
    %983 = vmatprep.subr.bf16.mxu0 0
    %984 = vmatpush1.bf16.msra.mxu0 %v575
    %985 = vmatprep.subr.bf16.mxu0 0
    %986 = vmatpush1.bf16.msra.mxu0 %v578
    %987 = vmatprep.subr.bf16.mxu0 0
    %988 = vmatpush1.bf16.msra.mxu0 %v581
    %989 = vmatprep.subr.bf16.mxu0 0
    %990 = vmatpush1.bf16.msra.mxu0 %v584
    %991 = vmatprep.subr.bf16.mxu0 0
    %992 = vmatpush1.bf16.msra.mxu0 %v587
    %993 = vmatprep.subr.bf16.mxu0 0
    %994 = vmatpush1.bf16.msra.mxu0 %v590
    %995 = vmatprep.subr.bf16.mxu0 0
    %996 = vmatpush1.bf16.msra.mxu0 %v593
    %997 = vmatprep.subr.bf16.mxu0 0
    %998 = vmatpush1.bf16.msra.mxu0 %v596
    %999 = vmatprep.subr.bf16.mxu0 0
    %1000 = vmatpush1.bf16.msra.mxu0 0
    %1001 = vmatprep.subr.bf16.mxu0 0
    %1002 = vmatpush1.bf16.msra.mxu0 0
    %1003 = vmatprep.subr.bf16.mxu0 0
    %1004 = vmatpush1.bf16.msra.mxu0 0
    %1005 = vmatprep.subr.bf16.mxu0 0
    %1006 = vmatpush1.bf16.msra.mxu0 0
    %1007 = vmatprep.subr.bf16.mxu0 0
    %1008 = vmatpush1.bf16.msra.mxu0 0
    %1009 = vmatprep.subr.bf16.mxu0 0
    %1010 = vmatpush1.bf16.msra.mxu0 0
    %1011 = vmatprep.subr.bf16.mxu0 0
    %1012 = vmatpush1.bf16.msra.mxu0 0
    %1013 = vmatprep.subr.bf16.mxu0 0
    %1014 = vmatpush1.bf16.msra.mxu0 0
    %1015 = vmatprep.mubr.bf16.mxu0 0
    %1016 = vmatmul.mubr.bf16.gmra.mrb[0].mxu0 %v941
    %v1017 = vpop.f32.mrb[0].mxu0
    %v1018 = vadd.f32 0.0, %v1017
    %v1019 = vpop.f32.mrb[0].mxu0
    %v1020 = vpop.f32.mrb[0].mxu0
    %v1021 = vpop.f32.mrb[0].mxu0
    %1022 = vdwg.mxu0
    %v1023 = vadd.f32 %v938, %v977
    %v1024 = vxor.u32 %v1023, 2147483648
    %v1025 = vmul.f32 %v1024, 1.442695
    %v1026 = vpow.pop %v1025
    %v1027 = vadd.f32 %v1026, 1.0
    %v1028 = vrcp.pop %v1027
    %v1029 = vmul.f32 1.0, %v1028
    %v1030 = vadd.f32 %v939, %v979
    %v1031 = vxor.u32 %v1030, 2147483648
    %v1032 = vmul.f32 %v1031, 1.442695
    %v1033 = vpow.pop %v1032
    %v1034 = vadd.f32 %v1033, 1.0
    %v1035 = vrcp.pop %v1034
    %v1036 = vmul.f32 1.0, %v1035
    %v1037 = vadd.f32 %v1018, %v488
    %v1038 = vmul.f32 %v1029, %v1037
    %v1039 = vadd.f32 %v940, %v1038
    %v1040 = vtanh.pop %v1039
    %v1041 = vsub.f32 1.0, %v1036
    %v1042 = vmul.f32 %v1041, %v1040
    %v1043 = vmul.f32 %v1036, %v937
    %v1044 = vadd.f32 %v1042, %v1043
    %v1045 = vld [vmem:[#allocation2 + $0x60] sm:$0xff]
    %v1046 = vld [vmem:[#allocation2 + $0x68] sm:$0xff]
    %v1047 = vld [vmem:[#allocation2 + $0x70] sm:$0xff]
    %v1048 = vpack.c.bf16 %v1044, %v1044
    %1049 = vmatprep.subr.bf16.mxu0 %v574
    %1050 = vmatpush1.bf16.msra.mxu0 %v573
    %1051 = vmatprep.subr.bf16.mxu0 %v577
    %1052 = vmatpush1.bf16.msra.mxu0 %v576
    %1053 = vmatprep.subr.bf16.mxu0 %v580
    %1054 = vmatpush1.bf16.msra.mxu0 %v579
    %1055 = vmatprep.subr.bf16.mxu0 %v583
    %1056 = vmatpush1.bf16.msra.mxu0 %v582
    %1057 = vmatprep.subr.bf16.mxu0 %v586
    %1058 = vmatpush1.bf16.msra.mxu0 %v585
    %1059 = vmatprep.subr.bf16.mxu0 %v589
    %1060 = vmatpush1.bf16.msra.mxu0 %v588
    %1061 = vmatprep.subr.bf16.mxu0 %v592
    %1062 = vmatpush1.bf16.msra.mxu0 %v591
    %1063 = vmatprep.subr.bf16.mxu0 %v595
    %1064 = vmatpush1.bf16.msra.mxu0 %v594
    %1065 = vmatprep.subr.bf16.mxu0 0
    %1066 = vmatpush1.bf16.msra.mxu0 0
    %1067 = vmatprep.subr.bf16.mxu0 0
    %1068 = vmatpush1.bf16.msra.mxu0 0
    %1069 = vmatprep.subr.bf16.mxu0 0
    %1070 = vmatpush1.bf16.msra.mxu0 0
    %1071 = vmatprep.subr.bf16.mxu0 0
    %1072 = vmatpush1.bf16.msra.mxu0 0
    %1073 = vmatprep.subr.bf16.mxu0 0
    %1074 = vmatpush1.bf16.msra.mxu0 0
    %1075 = vmatprep.subr.bf16.mxu0 0
    %1076 = vmatpush1.bf16.msra.mxu0 0
    %1077 = vmatprep.subr.bf16.mxu0 0
    %1078 = vmatpush1.bf16.msra.mxu0 0
    %1079 = vmatprep.subr.bf16.mxu0 0
    %1080 = vmatpush1.bf16.msra.mxu0 0
    %1081 = vmatprep.mubr.bf16.mxu0 0
    %1082 = vmatmul.mubr.bf16.gmra.mrb[0].mxu0 %v1048
    %v1083 = vpop.f32.mrb[0].mxu0
    %v1084 = vadd.f32 0.0, %v1083
    %v1085 = vpop.f32.mrb[0].mxu0
    %v1086 = vadd.f32 0.0, %v1085
    %v1087 = vpop.f32.mrb[0].mxu0
    %v1088 = vpop.f32.mrb[0].mxu0
    %1089 = vdwg.mxu0
    %1090 = vmatprep.subr.bf16.mxu0 0
    %1091 = vmatpush1.bf16.msra.mxu0 %v575
    %1092 = vmatprep.subr.bf16.mxu0 0
    %1093 = vmatpush1.bf16.msra.mxu0 %v578
    %1094 = vmatprep.subr.bf16.mxu0 0
    %1095 = vmatpush1.bf16.msra.mxu0 %v581
    %1096 = vmatprep.subr.bf16.mxu0 0
    %1097 = vmatpush1.bf16.msra.mxu0 %v584
    %1098 = vmatprep.subr.bf16.mxu0 0
    %1099 = vmatpush1.bf16.msra.mxu0 %v587
    %1100 = vmatprep.subr.bf16.mxu0 0
    %1101 = vmatpush1.bf16.msra.mxu0 %v590
    %1102 = vmatprep.subr.bf16.mxu0 0
    %1103 = vmatpush1.bf16.msra.mxu0 %v593
    %1104 = vmatprep.subr.bf16.mxu0 0
    %1105 = vmatpush1.bf16.msra.mxu0 %v596
    %1106 = vmatprep.subr.bf16.mxu0 0
    %1107 = vmatpush1.bf16.msra.mxu0 0
    %1108 = vmatprep.subr.bf16.mxu0 0
    %1109 = vmatpush1.bf16.msra.mxu0 0
    %1110 = vmatprep.subr.bf16.mxu0 0
    %1111 = vmatpush1.bf16.msra.mxu0 0
    %1112 = vmatprep.subr.bf16.mxu0 0
    %1113 = vmatpush1.bf16.msra.mxu0 0
    %1114 = vmatprep.subr.bf16.mxu0 0
    %1115 = vmatpush1.bf16.msra.mxu0 0
    %1116 = vmatprep.subr.bf16.mxu0 0
    %1117 = vmatpush1.bf16.msra.mxu0 0
    %1118 = vmatprep.subr.bf16.mxu0 0
    %1119 = vmatpush1.bf16.msra.mxu0 0
    %1120 = vmatprep.subr.bf16.mxu0 0
    %1121 = vmatpush1.bf16.msra.mxu0 0
    %1122 = vmatprep.mubr.bf16.mxu0 0
    %1123 = vmatmul.mubr.bf16.gmra.mrb[0].mxu0 %v1048
    %v1124 = vpop.f32.mrb[0].mxu0
    %v1125 = vadd.f32 0.0, %v1124
    %v1126 = vpop.f32.mrb[0].mxu0
    %v1127 = vpop.f32.mrb[0].mxu0
    %v1128 = vpop.f32.mrb[0].mxu0
    %1129 = vdwg.mxu0
    %v1130 = vadd.f32 %v1045, %v1084
    %v1131 = vxor.u32 %v1130, 2147483648
    %v1132 = vmul.f32 %v1131, 1.442695
    %v1133 = vpow.pop %v1132
    %v1134 = vadd.f32 %v1133, 1.0
    %v1135 = vrcp.pop %v1134
    %v1136 = vmul.f32 1.0, %v1135
    %v1137 = vadd.f32 %v1046, %v1086
    %v1138 = vxor.u32 %v1137, 2147483648
    %v1139 = vmul.f32 %v1138, 1.442695
    %v1140 = vpow.pop %v1139
    %v1141 = vadd.f32 %v1140, 1.0
    %v1142 = vrcp.pop %v1141
    %v1143 = vmul.f32 1.0, %v1142
    %v1144 = vadd.f32 %v1125, %v488
    %v1145 = vmul.f32 %v1136, %v1144
    %v1146 = vadd.f32 %v1047, %v1145
    %v1147 = vtanh.pop %v1146
    %v1148 = vsub.f32 1.0, %v1143
    %v1149 = vmul.f32 %v1148, %v1147
    %v1150 = vmul.f32 %v1143, %v1044
    %v1151 = vadd.f32 %v1149, %v1150
    %v1152 = vld [vmem:[#allocation2 + $0x78] sm:$0xff]
    %v1153 = vld [vmem:[#allocation2 + $0x80] sm:$0xff]
    %v1154 = vld [vmem:[#allocation2 + $0x88] sm:$0xff]
    %v1155 = vpack.c.bf16 %v1151, %v1151
    %1156 = vmatprep.subr.bf16.mxu0 %v574
    %1157 = vmatpush1.bf16.msra.mxu0 %v573
    %1158 = vmatprep.subr.bf16.mxu0 %v577
    %1159 = vmatpush1.bf16.msra.mxu0 %v576
    %1160 = vmatprep.subr.bf16.mxu0 %v580
    %1161 = vmatpush1.bf16.msra.mxu0 %v579
    %1162 = vmatprep.subr.bf16.mxu0 %v583
    %1163 = vmatpush1.bf16.msra.mxu0 %v582
    %1164 = vmatprep.subr.bf16.mxu0 %v586
    %1165 = vmatpush1.bf16.msra.mxu0 %v585
    %1166 = vmatprep.subr.bf16.mxu0 %v589
    %1167 = vmatpush1.bf16.msra.mxu0 %v588
    %1168 = vmatprep.subr.bf16.mxu0 %v592
    %1169 = vmatpush1.bf16.msra.mxu0 %v591
    %1170 = vmatprep.subr.bf16.mxu0 %v595
    %1171 = vmatpush1.bf16.msra.mxu0 %v594
    %1172 = vmatprep.subr.bf16.mxu0 0
    %1173 = vmatpush1.bf16.msra.mxu0 0
    %1174 = vmatprep.subr.bf16.mxu0 0
    %1175 = vmatpush1.bf16.msra.mxu0 0
    %1176 = vmatprep.subr.bf16.mxu0 0
    %1177 = vmatpush1.bf16.msra.mxu0 0
    %1178 = vmatprep.subr.bf16.mxu0 0
    %1179 = vmatpush1.bf16.msra.mxu0 0
    %1180 = vmatprep.subr.bf16.mxu0 0
    %1181 = vmatpush1.bf16.msra.mxu0 0
    %1182 = vmatprep.subr.bf16.mxu0 0
    %1183 = vmatpush1.bf16.msra.mxu0 0
    %1184 = vmatprep.subr.bf16.mxu0 0
    %1185 = vmatpush1.bf16.msra.mxu0 0
    %1186 = vmatprep.subr.bf16.mxu0 0
    %1187 = vmatpush1.bf16.msra.mxu0 0
    %1188 = vmatprep.mubr.bf16.mxu0 0
    %1189 = vmatmul.mubr.bf16.gmra.mrb[0].mxu0 %v1155
    %v1190 = vpop.f32.mrb[0].mxu0
    %v1191 = vadd.f32 0.0, %v1190
    %v1192 = vpop.f32.mrb[0].mxu0
    %v1193 = vadd.f32 0.0, %v1192
    %v1194 = vpop.f32.mrb[0].mxu0
    %v1195 = vpop.f32.mrb[0].mxu0
    %1196 = vdwg.mxu0
    %1197 = vmatprep.subr.bf16.mxu0 0
    %1198 = vmatpush1.bf16.msra.mxu0 %v575
    %1199 = vmatprep.subr.bf16.mxu0 0
    %1200 = vmatpush1.bf16.msra.mxu0 %v578
    %1201 = vmatprep.subr.bf16.mxu0 0
    %1202 = vmatpush1.bf16.msra.mxu0 %v581
    %1203 = vmatprep.subr.bf16.mxu0 0
    %1204 = vmatpush1.bf16.msra.mxu0 %v584
    %1205 = vmatprep.subr.bf16.mxu0 0
    %1206 = vmatpush1.bf16.msra.mxu0 %v587
    %1207 = vmatprep.subr.bf16.mxu0 0
    %1208 = vmatpush1.bf16.msra.mxu0 %v590
    %1209 = vmatprep.subr.bf16.mxu0 0
    %1210 = vmatpush1.bf16.msra.mxu0 %v593
    %1211 = vmatprep.subr.bf16.mxu0 0
    %1212 = vmatpush1.bf16.msra.mxu0 %v596
    %1213 = vmatprep.subr.bf16.mxu0 0
    %1214 = vmatpush1.bf16.msra.mxu0 0
    %1215 = vmatprep.subr.bf16.mxu0 0
    %1216 = vmatpush1.bf16.msra.mxu0 0
    %1217 = vmatprep.subr.bf16.mxu0 0
    %1218 = vmatpush1.bf16.msra.mxu0 0
    %1219 = vmatprep.subr.bf16.mxu0 0
    %1220 = vmatpush1.bf16.msra.mxu0 0
    %1221 = vmatprep.subr.bf16.mxu0 0
    %1222 = vmatpush1.bf16.msra.mxu0 0
    %1223 = vmatprep.subr.bf16.mxu0 0
    %1224 = vmatpush1.bf16.msra.mxu0 0
    %1225 = vmatprep.subr.bf16.mxu0 0
    %1226 = vmatpush1.bf16.msra.mxu0 0
    %1227 = vmatprep.subr.bf16.mxu0 0
    %1228 = vmatpush1.bf16.msra.mxu0 0
    %1229 = vmatprep.mubr.bf16.mxu0 0
    %1230 = vmatmul.mubr.bf16.gmra.mrb[0].mxu0 %v1155
    %v1231 = vpop.f32.mrb[0].mxu0
    %v1232 = vadd.f32 0.0, %v1231
    %v1233 = vpop.f32.mrb[0].mxu0
    %v1234 = vpop.f32.mrb[0].mxu0
    %v1235 = vpop.f32.mrb[0].mxu0
    %1236 = vdwg.mxu0
    %v1237 = vadd.f32 %v1152, %v1191
    %v1238 = vxor.u32 %v1237, 2147483648
    %v1239 = vmul.f32 %v1238, 1.442695
    %v1240 = vpow.pop %v1239
    %v1241 = vadd.f32 %v1240, 1.0
    %v1242 = vrcp.pop %v1241
    %v1243 = vmul.f32 1.0, %v1242
    %v1244 = vadd.f32 %v1153, %v1193
    %v1245 = vxor.u32 %v1244, 2147483648
    %v1246 = vmul.f32 %v1245, 1.442695
    %v1247 = vpow.pop %v1246
    %v1248 = vadd.f32 %v1247, 1.0
    %v1249 = vrcp.pop %v1248
    %v1250 = vmul.f32 1.0, %v1249
    %v1251 = vadd.f32 %v1232, %v488
    %v1252 = vmul.f32 %v1243, %v1251
    %v1253 = vadd.f32 %v1154, %v1252
    %v1254 = vtanh.pop %v1253
    %v1255 = vsub.f32 1.0, %v1250
    %v1256 = vmul.f32 %v1255, %v1254
    %v1257 = vmul.f32 %v1250, %v1151
    %v1258 = vadd.f32 %v1256, %v1257
    %v1259 = vld [vmem:[#allocation2 + $0x90] sm:$0xff]
    %v1260 = vld [vmem:[#allocation2 + $0x98] sm:$0xff]
    %v1261 = vld [vmem:[#allocation2 + $0xa0] sm:$0xff]
    %v1262 = vpack.c.bf16 %v1258, %v1258
    %1263 = vmatprep.subr.bf16.mxu0 %v574
    %1264 = vmatpush1.bf16.msra.mxu0 %v573
    %1265 = vmatprep.subr.bf16.mxu0 %v577
    %1266 = vmatpush1.bf16.msra.mxu0 %v576
    %1267 = vmatprep.subr.bf16.mxu0 %v580
    %1268 = vmatpush1.bf16.msra.mxu0 %v579
    %1269 = vmatprep.subr.bf16.mxu0 %v583
    %1270 = vmatpush1.bf16.msra.mxu0 %v582
    %1271 = vmatprep.subr.bf16.mxu0 %v586
    %1272 = vmatpush1.bf16.msra.mxu0 %v585
    %1273 = vmatprep.subr.bf16.mxu0 %v589
    %1274 = vmatpush1.bf16.msra.mxu0 %v588
    %1275 = vmatprep.subr.bf16.mxu0 %v592
    %1276 = vmatpush1.bf16.msra.mxu0 %v591
    %1277 = vmatprep.subr.bf16.mxu0 %v595
    %1278 = vmatpush1.bf16.msra.mxu0 %v594
    %1279 = vmatprep.subr.bf16.mxu0 0
    %1280 = vmatpush1.bf16.msra.mxu0 0
    %1281 = vmatprep.subr.bf16.mxu0 0
    %1282 = vmatpush1.bf16.msra.mxu0 0
    %1283 = vmatprep.subr.bf16.mxu0 0
    %1284 = vmatpush1.bf16.msra.mxu0 0
    %1285 = vmatprep.subr.bf16.mxu0 0
    %1286 = vmatpush1.bf16.msra.mxu0 0
    %1287 = vmatprep.subr.bf16.mxu0 0
    %1288 = vmatpush1.bf16.msra.mxu0 0
    %1289 = vmatprep.subr.bf16.mxu0 0
    %1290 = vmatpush1.bf16.msra.mxu0 0
    %1291 = vmatprep.subr.bf16.mxu0 0
    %1292 = vmatpush1.bf16.msra.mxu0 0
    %1293 = vmatprep.subr.bf16.mxu0 0
    %1294 = vmatpush1.bf16.msra.mxu0 0
    %1295 = vmatprep.mubr.bf16.mxu0 0
    %1296 = vmatmul.mubr.bf16.gmra.mrb[0].mxu0 %v1262
    %v1297 = vpop.f32.mrb[0].mxu0
    %v1298 = vadd.f32 0.0, %v1297
    %v1299 = vpop.f32.mrb[0].mxu0
    %v1300 = vadd.f32 0.0, %v1299
    %v1301 = vpop.f32.mrb[0].mxu0
    %v1302 = vpop.f32.mrb[0].mxu0
    %1303 = vdwg.mxu0
    %1304 = vmatprep.subr.bf16.mxu0 0
    %1305 = vmatpush1.bf16.msra.mxu0 %v575
    %1306 = vmatprep.subr.bf16.mxu0 0
    %1307 = vmatpush1.bf16.msra.mxu0 %v578
    %1308 = vmatprep.subr.bf16.mxu0 0
    %1309 = vmatpush1.bf16.msra.mxu0 %v581
    %1310 = vmatprep.subr.bf16.mxu0 0
    %1311 = vmatpush1.bf16.msra.mxu0 %v584
    %1312 = vmatprep.subr.bf16.mxu0 0
    %1313 = vmatpush1.bf16.msra.mxu0 %v587
    %1314 = vmatprep.subr.bf16.mxu0 0
    %1315 = vmatpush1.bf16.msra.mxu0 %v590
    %1316 = vmatprep.subr.bf16.mxu0 0
    %1317 = vmatpush1.bf16.msra.mxu0 %v593
    %1318 = vmatprep.subr.bf16.mxu0 0
    %1319 = vmatpush1.bf16.msra.mxu0 %v596
    %1320 = vmatprep.subr.bf16.mxu0 0
    %1321 = vmatpush1.bf16.msra.mxu0 0
    %1322 = vmatprep.subr.bf16.mxu0 0
    %1323 = vmatpush1.bf16.msra.mxu0 0
    %1324 = vmatprep.subr.bf16.mxu0 0
    %1325 = vmatpush1.bf16.msra.mxu0 0
    %1326 = vmatprep.subr.bf16.mxu0 0
    %1327 = vmatpush1.bf16.msra.mxu0 0
    %1328 = vmatprep.subr.bf16.mxu0 0
    %1329 = vmatpush1.bf16.msra.mxu0 0
    %1330 = vmatprep.subr.bf16.mxu0 0
    %1331 = vmatpush1.bf16.msra.mxu0 0
    %1332 = vmatprep.subr.bf16.mxu0 0
    %1333 = vmatpush1.bf16.msra.mxu0 0
    %1334 = vmatprep.subr.bf16.mxu0 0
    %1335 = vmatpush1.bf16.msra.mxu0 0
    %1336 = vmatprep.mubr.bf16.mxu0 0
    %1337 = vmatmul.mubr.bf16.gmra.mrb[0].mxu0 %v1262
    %v1338 = vpop.f32.mrb[0].mxu0
    %v1339 = vadd.f32 0.0, %v1338
    %v1340 = vpop.f32.mrb[0].mxu0
    %v1341 = vpop.f32.mrb[0].mxu0
    %v1342 = vpop.f32.mrb[0].mxu0
    %1343 = vdwg.mxu0
    %v1344 = vadd.f32 %v1259, %v1298
    %v1345 = vxor.u32 %v1344, 2147483648
    %v1346 = vmul.f32 %v1345, 1.442695
    %v1347 = vpow.pop %v1346
    %v1348 = vadd.f32 %v1347, 1.0
    %v1349 = vrcp.pop %v1348
    %v1350 = vmul.f32 1.0, %v1349
    %v1351 = vadd.f32 %v1260, %v1300
    %v1352 = vxor.u32 %v1351, 2147483648
    %v1353 = vmul.f32 %v1352, 1.442695
    %v1354 = vpow.pop %v1353
    %v1355 = vadd.f32 %v1354, 1.0
    %v1356 = vrcp.pop %v1355
    %v1357 = vmul.f32 1.0, %v1356
    %v1358 = vadd.f32 %v1339, %v488
    %v1359 = vmul.f32 %v1350, %v1358
    %v1360 = vadd.f32 %v1261, %v1359
    %v1361 = vtanh.pop %v1360
    %v1362 = vsub.f32 1.0, %v1357
    %v1363 = vmul.f32 %v1362, %v1361
    %v1364 = vmul.f32 %v1357, %v1258
    %v1365 = vadd.f32 %v1363, %v1364
    %v1366 = vld [vmem:[#allocation2 + $0xa8] sm:$0xff]
    %v1367 = vld [vmem:[#allocation2 + $0xb0] sm:$0xff]
    %v1368 = vld [vmem:[#allocation2 + $0xb8] sm:$0xff]
    %v1369 = vpack.c.bf16 %v1365, %v1365
    %1370 = vmatprep.subr.bf16.mxu0 %v574
    %1371 = vmatpush1.bf16.msra.mxu0 %v573
    %1372 = vmatprep.subr.bf16.mxu0 %v577
    %1373 = vmatpush1.bf16.msra.mxu0 %v576
    %1374 = vmatprep.subr.bf16.mxu0 %v580
    %1375 = vmatpush1.bf16.msra.mxu0 %v579
    %1376 = vmatprep.subr.bf16.mxu0 %v583
    %1377 = vmatpush1.bf16.msra.mxu0 %v582
    %1378 = vmatprep.subr.bf16.mxu0 %v586
    %1379 = vmatpush1.bf16.msra.mxu0 %v585
    %1380 = vmatprep.subr.bf16.mxu0 %v589
    %1381 = vmatpush1.bf16.msra.mxu0 %v588
    %1382 = vmatprep.subr.bf16.mxu0 %v592
    %1383 = vmatpush1.bf16.msra.mxu0 %v591
    %1384 = vmatprep.subr.bf16.mxu0 %v595
    %1385 = vmatpush1.bf16.msra.mxu0 %v594
    %1386 = vmatprep.subr.bf16.mxu0 0
    %1387 = vmatpush1.bf16.msra.mxu0 0
    %1388 = vmatprep.subr.bf16.mxu0 0
    %1389 = vmatpush1.bf16.msra.mxu0 0
    %1390 = vmatprep.subr.bf16.mxu0 0
    %1391 = vmatpush1.bf16.msra.mxu0 0
    %1392 = vmatprep.subr.bf16.mxu0 0
    %1393 = vmatpush1.bf16.msra.mxu0 0
    %1394 = vmatprep.subr.bf16.mxu0 0
    %1395 = vmatpush1.bf16.msra.mxu0 0
    %1396 = vmatprep.subr.bf16.mxu0 0
    %1397 = vmatpush1.bf16.msra.mxu0 0
    %1398 = vmatprep.subr.bf16.mxu0 0
    %1399 = vmatpush1.bf16.msra.mxu0 0
    %1400 = vmatprep.subr.bf16.mxu0 0
    %1401 = vmatpush1.bf16.msra.mxu0 0
    %1402 = vmatprep.mubr.bf16.mxu0 0
    %1403 = vmatmul.mubr.bf16.gmra.mrb[0].mxu0 %v1369
    %v1404 = vpop.f32.mrb[0].mxu0
    %v1405 = vadd.f32 0.0, %v1404
    %v1406 = vpop.f32.mrb[0].mxu0
    %v1407 = vadd.f32 0.0, %v1406
    %v1408 = vpop.f32.mrb[0].mxu0
    %v1409 = vpop.f32.mrb[0].mxu0
    %1410 = vdwg.mxu0
    %1411 = vmatprep.subr.bf16.mxu0 0
    %1412 = vmatpush1.bf16.msra.mxu0 %v575
    %1413 = vmatprep.subr.bf16.mxu0 0
    %1414 = vmatpush1.bf16.msra.mxu0 %v578
    %1415 = vmatprep.subr.bf16.mxu0 0
    %1416 = vmatpush1.bf16.msra.mxu0 %v581
    %1417 = vmatprep.subr.bf16.mxu0 0
    %1418 = vmatpush1.bf16.msra.mxu0 %v584
    %1419 = vmatprep.subr.bf16.mxu0 0
    %1420 = vmatpush1.bf16.msra.mxu0 %v587
    %1421 = vmatprep.subr.bf16.mxu0 0
    %1422 = vmatpush1.bf16.msra.mxu0 %v590
    %1423 = vmatprep.subr.bf16.mxu0 0
    %1424 = vmatpush1.bf16.msra.mxu0 %v593
    %1425 = vmatprep.subr.bf16.mxu0 0
    %1426 = vmatpush1.bf16.msra.mxu0 %v596
    %1427 = vmatprep.subr.bf16.mxu0 0
    %1428 = vmatpush1.bf16.msra.mxu0 0
    %1429 = vmatprep.subr.bf16.mxu0 0
    %1430 = vmatpush1.bf16.msra.mxu0 0
    %1431 = vmatprep.subr.bf16.mxu0 0
    %1432 = vmatpush1.bf16.msra.mxu0 0
    %1433 = vmatprep.subr.bf16.mxu0 0
    %1434 = vmatpush1.bf16.msra.mxu0 0
    %1435 = vmatprep.subr.bf16.mxu0 0
    %1436 = vmatpush1.bf16.msra.mxu0 0
    %1437 = vmatprep.subr.bf16.mxu0 0
    %1438 = vmatpush1.bf16.msra.mxu0 0
    %1439 = vmatprep.subr.bf16.mxu0 0
    %1440 = vmatpush1.bf16.msra.mxu0 0
    %1441 = vmatprep.subr.bf16.mxu0 0
    %1442 = vmatpush1.bf16.msra.mxu0 0
    %1443 = vmatprep.mubr.bf16.mxu0 0
    %1444 = vmatmul.mubr.bf16.gmra.mrb[0].mxu0 %v1369
    %v1445 = vpop.f32.mrb[0].mxu0
    %v1446 = vadd.f32 0.0, %v1445
    %v1447 = vpop.f32.mrb[0].mxu0
    %v1448 = vpop.f32.mrb[0].mxu0
    %v1449 = vpop.f32.mrb[0].mxu0
    %1450 = vdwg.mxu0
    %v1451 = vadd.f32 %v1366, %v1405
    %v1452 = vxor.u32 %v1451, 2147483648
    %v1453 = vmul.f32 %v1452, 1.442695
    %v1454 = vpow.pop %v1453
    %v1455 = vadd.f32 %v1454, 1.0
    %v1456 = vrcp.pop %v1455
    %v1457 = vmul.f32 1.0, %v1456
    %v1458 = vadd.f32 %v1367, %v1407
    %v1459 = vxor.u32 %v1458, 2147483648
    %v1460 = vmul.f32 %v1459, 1.442695
    %v1461 = vpow.pop %v1460
    %v1462 = vadd.f32 %v1461, 1.0
    %v1463 = vrcp.pop %v1462
    %v1464 = vmul.f32 1.0, %v1463
    %v1465 = vadd.f32 %v1446, %v488
    %v1466 = vmul.f32 %v1457, %v1465
    %v1467 = vadd.f32 %v1368, %v1466
    %v1468 = vtanh.pop %v1467
    %v1469 = vsub.f32 1.0, %v1464
    %v1470 = vmul.f32 %v1469, %v1468
    %v1471 = vmul.f32 %v1464, %v1365
    %v1472 = vadd.f32 %v1470, %v1471
    %v1473 = vld [vmem:[#allocation2 + $0xc0] sm:$0xff]
    %v1474 = vld [vmem:[#allocation2 + $0xc8] sm:$0xff]
    %v1475 = vld [vmem:[#allocation2 + $0xd0] sm:$0xff]
    %v1476 = vpack.c.bf16 %v1472, %v1472
    %1477 = vmatprep.subr.bf16.mxu0 %v574
    %1478 = vmatpush1.bf16.msra.mxu0 %v573
    %1479 = vmatprep.subr.bf16.mxu0 %v577
    %1480 = vmatpush1.bf16.msra.mxu0 %v576
    %1481 = vmatprep.subr.bf16.mxu0 %v580
    %1482 = vmatpush1.bf16.msra.mxu0 %v579
    %1483 = vmatprep.subr.bf16.mxu0 %v583
    %1484 = vmatpush1.bf16.msra.mxu0 %v582
    %1485 = vmatprep.subr.bf16.mxu0 %v586
    %1486 = vmatpush1.bf16.msra.mxu0 %v585
    %1487 = vmatprep.subr.bf16.mxu0 %v589
    %1488 = vmatpush1.bf16.msra.mxu0 %v588
    %1489 = vmatprep.subr.bf16.mxu0 %v592
    %1490 = vmatpush1.bf16.msra.mxu0 %v591
    %1491 = vmatprep.subr.bf16.mxu0 %v595
    %1492 = vmatpush1.bf16.msra.mxu0 %v594
    %1493 = vmatprep.subr.bf16.mxu0 0
    %1494 = vmatpush1.bf16.msra.mxu0 0
    %1495 = vmatprep.subr.bf16.mxu0 0
    %1496 = vmatpush1.bf16.msra.mxu0 0
    %1497 = vmatprep.subr.bf16.mxu0 0
    %1498 = vmatpush1.bf16.msra.mxu0 0
    %1499 = vmatprep.subr.bf16.mxu0 0
    %1500 = vmatpush1.bf16.msra.mxu0 0
    %1501 = vmatprep.subr.bf16.mxu0 0
    %1502 = vmatpush1.bf16.msra.mxu0 0
    %1503 = vmatprep.subr.bf16.mxu0 0
    %1504 = vmatpush1.bf16.msra.mxu0 0
    %1505 = vmatprep.subr.bf16.mxu0 0
    %1506 = vmatpush1.bf16.msra.mxu0 0
    %1507 = vmatprep.subr.bf16.mxu0 0
    %1508 = vmatpush1.bf16.msra.mxu0 0
    %1509 = vmatprep.mubr.bf16.mxu0 0
    %1510 = vmatmul.mubr.bf16.gmra.mrb[0].mxu0 %v1476
    %v1511 = vpop.f32.mrb[0].mxu0
    %v1512 = vadd.f32 0.0, %v1511
    %v1513 = vpop.f32.mrb[0].mxu0
    %v1514 = vadd.f32 0.0, %v1513
    %v1515 = vpop.f32.mrb[0].mxu0
    %v1516 = vpop.f32.mrb[0].mxu0
    %1517 = vdwg.mxu0
    %1518 = vmatprep.subr.bf16.mxu0 0
    %1519 = vmatpush1.bf16.msra.mxu0 %v575
    %1520 = vmatprep.subr.bf16.mxu0 0
    %1521 = vmatpush1.bf16.msra.mxu0 %v578
    %1522 = vmatprep.subr.bf16.mxu0 0
    %1523 = vmatpush1.bf16.msra.mxu0 %v581
    %1524 = vmatprep.subr.bf16.mxu0 0
    %1525 = vmatpush1.bf16.msra.mxu0 %v584
    %1526 = vmatprep.subr.bf16.mxu0 0
    %1527 = vmatpush1.bf16.msra.mxu0 %v587
    %1528 = vmatprep.subr.bf16.mxu0 0
    %1529 = vmatpush1.bf16.msra.mxu0 %v590
    %1530 = vmatprep.subr.bf16.mxu0 0
    %1531 = vmatpush1.bf16.msra.mxu0 %v593
    %1532 = vmatprep.subr.bf16.mxu0 0
    %1533 = vmatpush1.bf16.msra.mxu0 %v596
    %1534 = vmatprep.subr.bf16.mxu0 0
    %1535 = vmatpush1.bf16.msra.mxu0 0
    %1536 = vmatprep.subr.bf16.mxu0 0
    %1537 = vmatpush1.bf16.msra.mxu0 0
    %1538 = vmatprep.subr.bf16.mxu0 0
    %1539 = vmatpush1.bf16.msra.mxu0 0
    %1540 = vmatprep.subr.bf16.mxu0 0
    %1541 = vmatpush1.bf16.msra.mxu0 0
    %1542 = vmatprep.subr.bf16.mxu0 0
    %1543 = vmatpush1.bf16.msra.mxu0 0
    %1544 = vmatprep.subr.bf16.mxu0 0
    %1545 = vmatpush1.bf16.msra.mxu0 0
    %1546 = vmatprep.subr.bf16.mxu0 0
    %1547 = vmatpush1.bf16.msra.mxu0 0
    %1548 = vmatprep.subr.bf16.mxu0 0
    %1549 = vmatpush1.bf16.msra.mxu0 0
    %1550 = vmatprep.mubr.bf16.mxu0 0
    %1551 = vmatmul.mubr.bf16.gmra.mrb[0].mxu0 %v1476
    %v1552 = vpop.f32.mrb[0].mxu0
    %v1553 = vadd.f32 0.0, %v1552
    %v1554 = vpop.f32.mrb[0].mxu0
    %v1555 = vpop.f32.mrb[0].mxu0
    %v1556 = vpop.f32.mrb[0].mxu0
    %1557 = vdwg.mxu0
    %v1558 = vadd.f32 %v1473, %v1512
    %v1559 = vxor.u32 %v1558, 2147483648
    %v1560 = vmul.f32 %v1559, 1.442695
    %v1561 = vpow.pop %v1560
    %v1562 = vadd.f32 %v1561, 1.0
    %v1563 = vrcp.pop %v1562
    %v1564 = vmul.f32 1.0, %v1563
    %v1565 = vadd.f32 %v1474, %v1514
    %v1566 = vxor.u32 %v1565, 2147483648
    %v1567 = vmul.f32 %v1566, 1.442695
    %v1568 = vpow.pop %v1567
    %v1569 = vadd.f32 %v1568, 1.0
    %v1570 = vrcp.pop %v1569
    %v1571 = vmul.f32 1.0, %v1570
    %v1572 = vadd.f32 %v1553, %v488
    %v1573 = vmul.f32 %v1564, %v1572
    %v1574 = vadd.f32 %v1475, %v1573
    %v1575 = vtanh.pop %v1574
    %v1576 = vsub.f32 1.0, %v1571
    %v1577 = vmul.f32 %v1576, %v1575
    %v1578 = vmul.f32 %v1571, %v1472
    %v1579 = vadd.f32 %v1577, %v1578
    %v1580 = vld [vmem:[#allocation2 + $0xd8] sm:$0xff]
    %v1581 = vld [vmem:[#allocation2 + $0xe0] sm:$0xff]
    %v1582 = vld [vmem:[#allocation2 + $0xe8] sm:$0xff]
    %v1583 = vpack.c.bf16 %v1579, %v1579
    %1584 = vmatprep.subr.bf16.mxu0 %v574
    %1585 = vmatpush1.bf16.msra.mxu0 %v573
    %1586 = vmatprep.subr.bf16.mxu0 %v577
    %1587 = vmatpush1.bf16.msra.mxu0 %v576
    %1588 = vmatprep.subr.bf16.mxu0 %v580
    %1589 = vmatpush1.bf16.msra.mxu0 %v579
    %1590 = vmatprep.subr.bf16.mxu0 %v583
    %1591 = vmatpush1.bf16.msra.mxu0 %v582
    %1592 = vmatprep.subr.bf16.mxu0 %v586
    %1593 = vmatpush1.bf16.msra.mxu0 %v585
    %1594 = vmatprep.subr.bf16.mxu0 %v589
    %1595 = vmatpush1.bf16.msra.mxu0 %v588
    %1596 = vmatprep.subr.bf16.mxu0 %v592
    %1597 = vmatpush1.bf16.msra.mxu0 %v591
    %1598 = vmatprep.subr.bf16.mxu0 %v595
    %1599 = vmatpush1.bf16.msra.mxu0 %v594
    %1600 = vmatprep.subr.bf16.mxu0 0
    %1601 = vmatpush1.bf16.msra.mxu0 0
    %1602 = vmatprep.subr.bf16.mxu0 0
    %1603 = vmatpush1.bf16.msra.mxu0 0
    %1604 = vmatprep.subr.bf16.mxu0 0
    %1605 = vmatpush1.bf16.msra.mxu0 0
    %1606 = vmatprep.subr.bf16.mxu0 0
    %1607 = vmatpush1.bf16.msra.mxu0 0
    %1608 = vmatprep.subr.bf16.mxu0 0
    %1609 = vmatpush1.bf16.msra.mxu0 0
    %1610 = vmatprep.subr.bf16.mxu0 0
    %1611 = vmatpush1.bf16.msra.mxu0 0
    %1612 = vmatprep.subr.bf16.mxu0 0
    %1613 = vmatpush1.bf16.msra.mxu0 0
    %1614 = vmatprep.subr.bf16.mxu0 0
    %1615 = vmatpush1.bf16.msra.mxu0 0
    %1616 = vmatprep.mubr.bf16.mxu0 0
    %1617 = vmatmul.mubr.bf16.gmra.mrb[0].mxu0 %v1583
    %v1618 = vpop.f32.mrb[0].mxu0
    %v1619 = vadd.f32 0.0, %v1618
    %v1620 = vpop.f32.mrb[0].mxu0
    %v1621 = vadd.f32 0.0, %v1620
    %v1622 = vpop.f32.mrb[0].mxu0
    %v1623 = vpop.f32.mrb[0].mxu0
    %1624 = vdwg.mxu0
    %1625 = vmatprep.subr.bf16.mxu0 0
    %1626 = vmatpush1.bf16.msra.mxu0 %v575
    %1627 = vmatprep.subr.bf16.mxu0 0
    %1628 = vmatpush1.bf16.msra.mxu0 %v578
    %1629 = vmatprep.subr.bf16.mxu0 0
    %1630 = vmatpush1.bf16.msra.mxu0 %v581
    %1631 = vmatprep.subr.bf16.mxu0 0
    %1632 = vmatpush1.bf16.msra.mxu0 %v584
    %1633 = vmatprep.subr.bf16.mxu0 0
    %1634 = vmatpush1.bf16.msra.mxu0 %v587
    %1635 = vmatprep.subr.bf16.mxu0 0
    %1636 = vmatpush1.bf16.msra.mxu0 %v590
    %1637 = vmatprep.subr.bf16.mxu0 0
    %1638 = vmatpush1.bf16.msra.mxu0 %v593
    %1639 = vmatprep.subr.bf16.mxu0 0
    %1640 = vmatpush1.bf16.msra.mxu0 %v596
    %1641 = vmatprep.subr.bf16.mxu0 0
    %1642 = vmatpush1.bf16.msra.mxu0 0
    %1643 = vmatprep.subr.bf16.mxu0 0
    %1644 = vmatpush1.bf16.msra.mxu0 0
    %1645 = vmatprep.subr.bf16.mxu0 0
    %1646 = vmatpush1.bf16.msra.mxu0 0
    %1647 = vmatprep.subr.bf16.mxu0 0
    %1648 = vmatpush1.bf16.msra.mxu0 0
    %1649 = vmatprep.subr.bf16.mxu0 0
    %1650 = vmatpush1.bf16.msra.mxu0 0
    %1651 = vmatprep.subr.bf16.mxu0 0
    %1652 = vmatpush1.bf16.msra.mxu0 0
    %1653 = vmatprep.subr.bf16.mxu0 0
    %1654 = vmatpush1.bf16.msra.mxu0 0
    %1655 = vmatprep.subr.bf16.mxu0 0
    %1656 = vmatpush1.bf16.msra.mxu0 0
    %1657 = vmatprep.mubr.bf16.mxu0 0
    %1658 = vmatmul.mubr.bf16.gmra.mrb[0].mxu0 %v1583
    %v1659 = vpop.f32.mrb[0].mxu0
    %v1660 = vadd.f32 0.0, %v1659
    %v1661 = vpop.f32.mrb[0].mxu0
    %v1662 = vpop.f32.mrb[0].mxu0
    %v1663 = vpop.f32.mrb[0].mxu0
    %1664 = vdwg.mxu0
    %v1665 = vadd.f32 %v1580, %v1619
    %v1666 = vxor.u32 %v1665, 2147483648
    %v1667 = vmul.f32 %v1666, 1.442695
    %v1668 = vpow.pop %v1667
    %v1669 = vadd.f32 %v1668, 1.0
    %v1670 = vrcp.pop %v1669
    %v1671 = vmul.f32 1.0, %v1670
    %v1672 = vadd.f32 %v1581, %v1621
    %v1673 = vxor.u32 %v1672, 2147483648
    %v1674 = vmul.f32 %v1673, 1.442695
    %v1675 = vpow.pop %v1674
    %v1676 = vadd.f32 %v1675, 1.0
    %v1677 = vrcp.pop %v1676
    %v1678 = vmul.f32 1.0, %v1677
    %v1679 = vadd.f32 %v1660, %v488
    %v1680 = vmul.f32 %v1671, %v1679
    %v1681 = vadd.f32 %v1582, %v1680
    %v1682 = vtanh.pop %v1681
    %v1683 = vsub.f32 1.0, %v1678
    %v1684 = vmul.f32 %v1683, %v1682
    %v1685 = vmul.f32 %v1678, %v1579
    %v1686 = vadd.f32 %v1684, %v1685
    %v1687 = vld [vmem:[#allocation2 + $0xf0] sm:$0xff]
    %v1688 = vld [vmem:[#allocation2 + $0xf8] sm:$0xff]
    %v1689 = vld [vmem:[#allocation2 + $0x100] sm:$0xff]
    %v1690 = vpack.c.bf16 %v1686, %v1686
    %1691 = vmatprep.subr.bf16.mxu0 %v574
    %1692 = vmatpush1.bf16.msra.mxu0 %v573
    %1693 = vmatprep.subr.bf16.mxu0 %v577
    %1694 = vmatpush1.bf16.msra.mxu0 %v576
    %1695 = vmatprep.subr.bf16.mxu0 %v580
    %1696 = vmatpush1.bf16.msra.mxu0 %v579
    %1697 = vmatprep.subr.bf16.mxu0 %v583
    %1698 = vmatpush1.bf16.msra.mxu0 %v582
    %1699 = vmatprep.subr.bf16.mxu0 %v586
    %1700 = vmatpush1.bf16.msra.mxu0 %v585
    %1701 = vmatprep.subr.bf16.mxu0 %v589
    %1702 = vmatpush1.bf16.msra.mxu0 %v588
    %1703 = vmatprep.subr.bf16.mxu0 %v592
    %1704 = vmatpush1.bf16.msra.mxu0 %v591
    %1705 = vmatprep.subr.bf16.mxu0 %v595
    %1706 = vmatpush1.bf16.msra.mxu0 %v594
    %1707 = vmatprep.subr.bf16.mxu0 0
    %1708 = vmatpush1.bf16.msra.mxu0 0
    %1709 = vmatprep.subr.bf16.mxu0 0
    %1710 = vmatpush1.bf16.msra.mxu0 0
    %1711 = vmatprep.subr.bf16.mxu0 0
    %1712 = vmatpush1.bf16.msra.mxu0 0
    %1713 = vmatprep.subr.bf16.mxu0 0
    %1714 = vmatpush1.bf16.msra.mxu0 0
    %1715 = vmatprep.subr.bf16.mxu0 0
    %1716 = vmatpush1.bf16.msra.mxu0 0
    %1717 = vmatprep.subr.bf16.mxu0 0
    %1718 = vmatpush1.bf16.msra.mxu0 0
    %1719 = vmatprep.subr.bf16.mxu0 0
    %1720 = vmatpush1.bf16.msra.mxu0 0
    %1721 = vmatprep.subr.bf16.mxu0 0
    %1722 = vmatpush1.bf16.msra.mxu0 0
    %1723 = vmatprep.mubr.bf16.mxu0 0
    %1724 = vmatmul.mubr.bf16.gmra.mrb[0].mxu0 %v1690
    %v1725 = vpop.f32.mrb[0].mxu0
    %v1726 = vadd.f32 0.0, %v1725
    %v1727 = vpop.f32.mrb[0].mxu0
    %v1728 = vadd.f32 0.0, %v1727
    %v1729 = vpop.f32.mrb[0].mxu0
    %v1730 = vpop.f32.mrb[0].mxu0
    %1731 = vdwg.mxu0
    %1732 = vmatprep.subr.bf16.mxu0 0
    %1733 = vmatpush1.bf16.msra.mxu0 %v575
    %1734 = vmatprep.subr.bf16.mxu0 0
    %1735 = vmatpush1.bf16.msra.mxu0 %v578
    %1736 = vmatprep.subr.bf16.mxu0 0
    %1737 = vmatpush1.bf16.msra.mxu0 %v581
    %1738 = vmatprep.subr.bf16.mxu0 0
    %1739 = vmatpush1.bf16.msra.mxu0 %v584
    %1740 = vmatprep.subr.bf16.mxu0 0
    %1741 = vmatpush1.bf16.msra.mxu0 %v587
    %1742 = vmatprep.subr.bf16.mxu0 0
    %1743 = vmatpush1.bf16.msra.mxu0 %v590
    %1744 = vmatprep.subr.bf16.mxu0 0
    %1745 = vmatpush1.bf16.msra.mxu0 %v593
    %1746 = vmatprep.subr.bf16.mxu0 0
    %1747 = vmatpush1.bf16.msra.mxu0 %v596
    %1748 = vmatprep.subr.bf16.mxu0 0
    %1749 = vmatpush1.bf16.msra.mxu0 0
    %1750 = vmatprep.subr.bf16.mxu0 0
    %1751 = vmatpush1.bf16.msra.mxu0 0
    %1752 = vmatprep.subr.bf16.mxu0 0
    %1753 = vmatpush1.bf16.msra.mxu0 0
    %1754 = vmatprep.subr.bf16.mxu0 0
    %1755 = vmatpush1.bf16.msra.mxu0 0
    %1756 = vmatprep.subr.bf16.mxu0 0
    %1757 = vmatpush1.bf16.msra.mxu0 0
    %1758 = vmatprep.subr.bf16.mxu0 0
    %1759 = vmatpush1.bf16.msra.mxu0 0
    %1760 = vmatprep.subr.bf16.mxu0 0
    %1761 = vmatpush1.bf16.msra.mxu0 0
    %1762 = vmatprep.subr.bf16.mxu0 0
    %1763 = vmatpush1.bf16.msra.mxu0 0
    %1764 = vmatprep.mubr.bf16.mxu0 0
    %1765 = vmatmul.mubr.bf16.gmra.mrb[0].mxu0 %v1690
    %v1766 = vpop.f32.mrb[0].mxu0
    %v1767 = vadd.f32 0.0, %v1766
    %v1768 = vpop.f32.mrb[0].mxu0
    %v1769 = vpop.f32.mrb[0].mxu0
    %v1770 = vpop.f32.mrb[0].mxu0
    %1771 = vdwg.mxu0
    %v1772 = vadd.f32 %v1687, %v1726
    %v1773 = vxor.u32 %v1772, 2147483648
    %v1774 = vmul.f32 %v1773, 1.442695
    %v1775 = vpow.pop %v1774
    %v1776 = vadd.f32 %v1775, 1.0
    %v1777 = vrcp.pop %v1776
    %v1778 = vmul.f32 1.0, %v1777
    %v1779 = vadd.f32 %v1688, %v1728
    %v1780 = vxor.u32 %v1779, 2147483648
    %v1781 = vmul.f32 %v1780, 1.442695
    %v1782 = vpow.pop %v1781
    %v1783 = vadd.f32 %v1782, 1.0
    %v1784 = vrcp.pop %v1783
    %v1785 = vmul.f32 1.0, %v1784
    %v1786 = vadd.f32 %v1767, %v488
    %v1787 = vmul.f32 %v1778, %v1786
    %v1788 = vadd.f32 %v1689, %v1787
    %v1789 = vtanh.pop %v1788
    %v1790 = vsub.f32 1.0, %v1785
    %v1791 = vmul.f32 %v1790, %v1789
    %v1792 = vmul.f32 %v1785, %v1686
    %v1793 = vadd.f32 %v1791, %v1792
    %v1794 = vld [vmem:[#allocation2 + $0x108] sm:$0xff]
    %v1795 = vld [vmem:[#allocation2 + $0x110] sm:$0xff]
    %v1796 = vld [vmem:[#allocation2 + $0x118] sm:$0xff]
    %v1797 = vpack.c.bf16 %v1793, %v1793
    %1798 = vmatprep.subr.bf16.mxu0 %v574
    %1799 = vmatpush1.bf16.msra.mxu0 %v573
    %1800 = vmatprep.subr.bf16.mxu0 %v577
    %1801 = vmatpush1.bf16.msra.mxu0 %v576
    %1802 = vmatprep.subr.bf16.mxu0 %v580
    %1803 = vmatpush1.bf16.msra.mxu0 %v579
    %1804 = vmatprep.subr.bf16.mxu0 %v583
    %1805 = vmatpush1.bf16.msra.mxu0 %v582
    %1806 = vmatprep.subr.bf16.mxu0 %v586
    %1807 = vmatpush1.bf16.msra.mxu0 %v585
    %1808 = vmatprep.subr.bf16.mxu0 %v589
    %1809 = vmatpush1.bf16.msra.mxu0 %v588
    %1810 = vmatprep.subr.bf16.mxu0 %v592
    %1811 = vmatpush1.bf16.msra.mxu0 %v591
    %1812 = vmatprep.subr.bf16.mxu0 %v595
    %1813 = vmatpush1.bf16.msra.mxu0 %v594
    %1814 = vmatprep.subr.bf16.mxu0 0
    %1815 = vmatpush1.bf16.msra.mxu0 0
    %1816 = vmatprep.subr.bf16.mxu0 0
    %1817 = vmatpush1.bf16.msra.mxu0 0
    %1818 = vmatprep.subr.bf16.mxu0 0
    %1819 = vmatpush1.bf16.msra.mxu0 0
    %1820 = vmatprep.subr.bf16.mxu0 0
    %1821 = vmatpush1.bf16.msra.mxu0 0
    %1822 = vmatprep.subr.bf16.mxu0 0
    %1823 = vmatpush1.bf16.msra.mxu0 0
    %1824 = vmatprep.subr.bf16.mxu0 0
    %1825 = vmatpush1.bf16.msra.mxu0 0
    %1826 = vmatprep.subr.bf16.mxu0 0
    %1827 = vmatpush1.bf16.msra.mxu0 0
    %1828 = vmatprep.subr.bf16.mxu0 0
    %1829 = vmatpush1.bf16.msra.mxu0 0
    %1830 = vmatprep.mubr.bf16.mxu0 0
    %1831 = vmatmul.mubr.bf16.gmra.mrb[0].mxu0 %v1797
    %v1832 = vpop.f32.mrb[0].mxu0
    %v1833 = vadd.f32 0.0, %v1832
    %v1834 = vpop.f32.mrb[0].mxu0
    %v1835 = vadd.f32 0.0, %v1834
    %v1836 = vpop.f32.mrb[0].mxu0
    %v1837 = vpop.f32.mrb[0].mxu0
    %1838 = vdwg.mxu0
    %1839 = vmatprep.subr.bf16.mxu0 0
    %1840 = vmatpush1.bf16.msra.mxu0 %v575
    %1841 = vmatprep.subr.bf16.mxu0 0
    %1842 = vmatpush1.bf16.msra.mxu0 %v578
    %1843 = vmatprep.subr.bf16.mxu0 0
    %1844 = vmatpush1.bf16.msra.mxu0 %v581
    %1845 = vmatprep.subr.bf16.mxu0 0
    %1846 = vmatpush1.bf16.msra.mxu0 %v584
    %1847 = vmatprep.subr.bf16.mxu0 0
    %1848 = vmatpush1.bf16.msra.mxu0 %v587
    %1849 = vmatprep.subr.bf16.mxu0 0
    %1850 = vmatpush1.bf16.msra.mxu0 %v590
    %1851 = vmatprep.subr.bf16.mxu0 0
    %1852 = vmatpush1.bf16.msra.mxu0 %v593
    %1853 = vmatprep.subr.bf16.mxu0 0
    %1854 = vmatpush1.bf16.msra.mxu0 %v596
    %1855 = vmatprep.subr.bf16.mxu0 0
    %1856 = vmatpush1.bf16.msra.mxu0 0
    %1857 = vmatprep.subr.bf16.mxu0 0
    %1858 = vmatpush1.bf16.msra.mxu0 0
    %1859 = vmatprep.subr.bf16.mxu0 0
    %1860 = vmatpush1.bf16.msra.mxu0 0
    %1861 = vmatprep.subr.bf16.mxu0 0
    %1862 = vmatpush1.bf16.msra.mxu0 0
    %1863 = vmatprep.subr.bf16.mxu0 0
    %1864 = vmatpush1.bf16.msra.mxu0 0
    %1865 = vmatprep.subr.bf16.mxu0 0
    %1866 = vmatpush1.bf16.msra.mxu0 0
    %1867 = vmatprep.subr.bf16.mxu0 0
    %1868 = vmatpush1.bf16.msra.mxu0 0
    %1869 = vmatprep.subr.bf16.mxu0 0
    %1870 = vmatpush1.bf16.msra.mxu0 0
    %1871 = vmatprep.mubr.bf16.mxu0 0
    %1872 = vmatmul.mubr.bf16.gmra.mrb[0].mxu0 %v1797
    %v1873 = vpop.f32.mrb[0].mxu0
    %v1874 = vadd.f32 0.0, %v1873
    %v1875 = vpop.f32.mrb[0].mxu0
    %v1876 = vpop.f32.mrb[0].mxu0
    %v1877 = vpop.f32.mrb[0].mxu0
    %1878 = vdwg.mxu0
    %v1879 = vadd.f32 %v1794, %v1833
    %v1880 = vxor.u32 %v1879, 2147483648
    %v1881 = vmul.f32 %v1880, 1.442695
    %v1882 = vpow.pop %v1881
    %v1883 = vadd.f32 %v1882, 1.0
    %v1884 = vrcp.pop %v1883
    %v1885 = vmul.f32 1.0, %v1884
    %v1886 = vadd.f32 %v1795, %v1835
    %v1887 = vxor.u32 %v1886, 2147483648
    %v1888 = vmul.f32 %v1887, 1.442695
    %v1889 = vpow.pop %v1888
    %v1890 = vadd.f32 %v1889, 1.0
    %v1891 = vrcp.pop %v1890
    %v1892 = vmul.f32 1.0, %v1891
    %v1893 = vadd.f32 %v1874, %v488
    %v1894 = vmul.f32 %v1885, %v1893
    %v1895 = vadd.f32 %v1796, %v1894
    %v1896 = vtanh.pop %v1895
    %v1897 = vsub.f32 1.0, %v1892
    %v1898 = vmul.f32 %v1897, %v1896
    %v1899 = vmul.f32 %v1892, %v1793
    %v1900 = vadd.f32 %v1898, %v1899
    %v1901 = vld [vmem:[#allocation2 + $0x120] sm:$0xff]
    %v1902 = vld [vmem:[#allocation2 + $0x128] sm:$0xff]
    %v1903 = vld [vmem:[#allocation2 + $0x130] sm:$0xff]
    %v1904 = vpack.c.bf16 %v1900, %v1900
    %1905 = vmatprep.subr.bf16.mxu0 %v574
    %1906 = vmatpush1.bf16.msra.mxu0 %v573
    %1907 = vmatprep.subr.bf16.mxu0 %v577
    %1908 = vmatpush1.bf16.msra.mxu0 %v576
    %1909 = vmatprep.subr.bf16.mxu0 %v580
    %1910 = vmatpush1.bf16.msra.mxu0 %v579
    %1911 = vmatprep.subr.bf16.mxu0 %v583
    %1912 = vmatpush1.bf16.msra.mxu0 %v582
    %1913 = vmatprep.subr.bf16.mxu0 %v586
    %1914 = vmatpush1.bf16.msra.mxu0 %v585
    %1915 = vmatprep.subr.bf16.mxu0 %v589
    %1916 = vmatpush1.bf16.msra.mxu0 %v588
    %1917 = vmatprep.subr.bf16.mxu0 %v592
    %1918 = vmatpush1.bf16.msra.mxu0 %v591
    %1919 = vmatprep.subr.bf16.mxu0 %v595
    %1920 = vmatpush1.bf16.msra.mxu0 %v594
    %1921 = vmatprep.subr.bf16.mxu0 0
    %1922 = vmatpush1.bf16.msra.mxu0 0
    %1923 = vmatprep.subr.bf16.mxu0 0
    %1924 = vmatpush1.bf16.msra.mxu0 0
    %1925 = vmatprep.subr.bf16.mxu0 0
    %1926 = vmatpush1.bf16.msra.mxu0 0
    %1927 = vmatprep.subr.bf16.mxu0 0
    %1928 = vmatpush1.bf16.msra.mxu0 0
    %1929 = vmatprep.subr.bf16.mxu0 0
    %1930 = vmatpush1.bf16.msra.mxu0 0
    %1931 = vmatprep.subr.bf16.mxu0 0
    %1932 = vmatpush1.bf16.msra.mxu0 0
    %1933 = vmatprep.subr.bf16.mxu0 0
    %1934 = vmatpush1.bf16.msra.mxu0 0
    %1935 = vmatprep.subr.bf16.mxu0 0
    %1936 = vmatpush1.bf16.msra.mxu0 0
    %1937 = vmatprep.mubr.bf16.mxu0 0
    %1938 = vmatmul.mubr.bf16.gmra.mrb[0].mxu0 %v1904
    %v1939 = vpop.f32.mrb[0].mxu0
    %v1940 = vadd.f32 0.0, %v1939
    %v1941 = vpop.f32.mrb[0].mxu0
    %v1942 = vadd.f32 0.0, %v1941
    %v1943 = vpop.f32.mrb[0].mxu0
    %v1944 = vpop.f32.mrb[0].mxu0
    %1945 = vdwg.mxu0
    %1946 = vmatprep.subr.bf16.mxu0 0
    %1947 = vmatpush1.bf16.msra.mxu0 %v575
    %1948 = vmatprep.subr.bf16.mxu0 0
    %1949 = vmatpush1.bf16.msra.mxu0 %v578
    %1950 = vmatprep.subr.bf16.mxu0 0
    %1951 = vmatpush1.bf16.msra.mxu0 %v581
    %1952 = vmatprep.subr.bf16.mxu0 0
    %1953 = vmatpush1.bf16.msra.mxu0 %v584
    %1954 = vmatprep.subr.bf16.mxu0 0
    %1955 = vmatpush1.bf16.msra.mxu0 %v587
    %1956 = vmatprep.subr.bf16.mxu0 0
    %1957 = vmatpush1.bf16.msra.mxu0 %v590
    %1958 = vmatprep.subr.bf16.mxu0 0
    %1959 = vmatpush1.bf16.msra.mxu0 %v593
    %1960 = vmatprep.subr.bf16.mxu0 0
    %1961 = vmatpush1.bf16.msra.mxu0 %v596
    %1962 = vmatprep.subr.bf16.mxu0 0
    %1963 = vmatpush1.bf16.msra.mxu0 0
    %1964 = vmatprep.subr.bf16.mxu0 0
    %1965 = vmatpush1.bf16.msra.mxu0 0
    %1966 = vmatprep.subr.bf16.mxu0 0
    %1967 = vmatpush1.bf16.msra.mxu0 0
    %1968 = vmatprep.subr.bf16.mxu0 0
    %1969 = vmatpush1.bf16.msra.mxu0 0
    %1970 = vmatprep.subr.bf16.mxu0 0
    %1971 = vmatpush1.bf16.msra.mxu0 0
    %1972 = vmatprep.subr.bf16.mxu0 0
    %1973 = vmatpush1.bf16.msra.mxu0 0
    %1974 = vmatprep.subr.bf16.mxu0 0
    %1975 = vmatpush1.bf16.msra.mxu0 0
    %1976 = vmatprep.subr.bf16.mxu0 0
    %1977 = vmatpush1.bf16.msra.mxu0 0
    %1978 = vmatprep.mubr.bf16.mxu0 0
    %1979 = vmatmul.mubr.bf16.gmra.mrb[0].mxu0 %v1904
    %v1980 = vpop.f32.mrb[0].mxu0
    %v1981 = vadd.f32 0.0, %v1980
    %v1982 = vpop.f32.mrb[0].mxu0
    %v1983 = vpop.f32.mrb[0].mxu0
    %v1984 = vpop.f32.mrb[0].mxu0
    %1985 = vdwg.mxu0
    %v1986 = vadd.f32 %v1901, %v1940
    %v1987 = vxor.u32 %v1986, 2147483648
    %v1988 = vmul.f32 %v1987, 1.442695
    %v1989 = vpow.pop %v1988
    %v1990 = vadd.f32 %v1989, 1.0
    %v1991 = vrcp.pop %v1990
    %v1992 = vmul.f32 1.0, %v1991
    %v1993 = vadd.f32 %v1902, %v1942
    %v1994 = vxor.u32 %v1993, 2147483648
    %v1995 = vmul.f32 %v1994, 1.442695
    %v1996 = vpow.pop %v1995
    %v1997 = vadd.f32 %v1996, 1.0
    %v1998 = vrcp.pop %v1997
    %v1999 = vmul.f32 1.0, %v1998
    %v2000 = vadd.f32 %v1981, %v488
    %v2001 = vmul.f32 %v1992, %v2000
    %v2002 = vadd.f32 %v1903, %v2001
    %v2003 = vtanh.pop %v2002
    %v2004 = vsub.f32 1.0, %v1999
    %v2005 = vmul.f32 %v2004, %v2003
    %v2006 = vmul.f32 %v1999, %v1900
    %v2007 = vadd.f32 %v2005, %v2006
    %v2008 = vld [vmem:[#allocation2 + $0x138] sm:$0xff]
    %v2009 = vld [vmem:[#allocation2 + $0x140] sm:$0xff]
    %v2010 = vld [vmem:[#allocation2 + $0x148] sm:$0xff]
    %v2011 = vpack.c.bf16 %v2007, %v2007
    %2012 = vmatprep.subr.bf16.mxu0 %v574
    %2013 = vmatpush1.bf16.msra.mxu0 %v573
    %2014 = vmatprep.subr.bf16.mxu0 %v577
    %2015 = vmatpush1.bf16.msra.mxu0 %v576
    %2016 = vmatprep.subr.bf16.mxu0 %v580
    %2017 = vmatpush1.bf16.msra.mxu0 %v579
    %2018 = vmatprep.subr.bf16.mxu0 %v583
    %2019 = vmatpush1.bf16.msra.mxu0 %v582
    %2020 = vmatprep.subr.bf16.mxu0 %v586
    %2021 = vmatpush1.bf16.msra.mxu0 %v585
    %2022 = vmatprep.subr.bf16.mxu0 %v589
    %2023 = vmatpush1.bf16.msra.mxu0 %v588
    %2024 = vmatprep.subr.bf16.mxu0 %v592
    %2025 = vmatpush1.bf16.msra.mxu0 %v591
    %2026 = vmatprep.subr.bf16.mxu0 %v595
    %2027 = vmatpush1.bf16.msra.mxu0 %v594
    %2028 = vmatprep.subr.bf16.mxu0 0
    %2029 = vmatpush1.bf16.msra.mxu0 0
    %2030 = vmatprep.subr.bf16.mxu0 0
    %2031 = vmatpush1.bf16.msra.mxu0 0
    %2032 = vmatprep.subr.bf16.mxu0 0
    %2033 = vmatpush1.bf16.msra.mxu0 0
    %2034 = vmatprep.subr.bf16.mxu0 0
    %2035 = vmatpush1.bf16.msra.mxu0 0
    %2036 = vmatprep.subr.bf16.mxu0 0
    %2037 = vmatpush1.bf16.msra.mxu0 0
    %2038 = vmatprep.subr.bf16.mxu0 0
    %2039 = vmatpush1.bf16.msra.mxu0 0
    %2040 = vmatprep.subr.bf16.mxu0 0
    %2041 = vmatpush1.bf16.msra.mxu0 0
    %2042 = vmatprep.subr.bf16.mxu0 0
    %2043 = vmatpush1.bf16.msra.mxu0 0
    %2044 = vmatprep.mubr.bf16.mxu0 0
    %2045 = vmatmul.mubr.bf16.gmra.mrb[0].mxu0 %v2011
    %v2046 = vpop.f32.mrb[0].mxu0
    %v2047 = vadd.f32 0.0, %v2046
    %v2048 = vpop.f32.mrb[0].mxu0
    %v2049 = vadd.f32 0.0, %v2048
    %v2050 = vpop.f32.mrb[0].mxu0
    %v2051 = vpop.f32.mrb[0].mxu0
    %2052 = vdwg.mxu0
    %2053 = vmatprep.subr.bf16.mxu0 0
    %2054 = vmatpush1.bf16.msra.mxu0 %v575
    %2055 = vmatprep.subr.bf16.mxu0 0
    %2056 = vmatpush1.bf16.msra.mxu0 %v578
    %2057 = vmatprep.subr.bf16.mxu0 0
    %2058 = vmatpush1.bf16.msra.mxu0 %v581
    %2059 = vmatprep.subr.bf16.mxu0 0
    %2060 = vmatpush1.bf16.msra.mxu0 %v584
    %2061 = vmatprep.subr.bf16.mxu0 0
    %2062 = vmatpush1.bf16.msra.mxu0 %v587
    %2063 = vmatprep.subr.bf16.mxu0 0
    %2064 = vmatpush1.bf16.msra.mxu0 %v590
    %2065 = vmatprep.subr.bf16.mxu0 0
    %2066 = vmatpush1.bf16.msra.mxu0 %v593
    %2067 = vmatprep.subr.bf16.mxu0 0
    %2068 = vmatpush1.bf16.msra.mxu0 %v596
    %2069 = vmatprep.subr.bf16.mxu0 0
    %2070 = vmatpush1.bf16.msra.mxu0 0
    %2071 = vmatprep.subr.bf16.mxu0 0
    %2072 = vmatpush1.bf16.msra.mxu0 0
    %2073 = vmatprep.subr.bf16.mxu0 0
    %2074 = vmatpush1.bf16.msra.mxu0 0
    %2075 = vmatprep.subr.bf16.mxu0 0
    %2076 = vmatpush1.bf16.msra.mxu0 0
    %2077 = vmatprep.subr.bf16.mxu0 0
    %2078 = vmatpush1.bf16.msra.mxu0 0
    %2079 = vmatprep.subr.bf16.mxu0 0
    %2080 = vmatpush1.bf16.msra.mxu0 0
    %2081 = vmatprep.subr.bf16.mxu0 0
    %2082 = vmatpush1.bf16.msra.mxu0 0
    %2083 = vmatprep.subr.bf16.mxu0 0
    %2084 = vmatpush1.bf16.msra.mxu0 0
    %2085 = vmatprep.mubr.bf16.mxu0 0
    %2086 = vmatmul.mubr.bf16.gmra.mrb[0].mxu0 %v2011
    %v2087 = vpop.f32.mrb[0].mxu0
    %v2088 = vadd.f32 0.0, %v2087
    %v2089 = vpop.f32.mrb[0].mxu0
    %v2090 = vpop.f32.mrb[0].mxu0
    %v2091 = vpop.f32.mrb[0].mxu0
    %2092 = vdwg.mxu0
    %v2093 = vadd.f32 %v2008, %v2047
    %v2094 = vxor.u32 %v2093, 2147483648
    %v2095 = vmul.f32 %v2094, 1.442695
    %v2096 = vpow.pop %v2095
    %v2097 = vadd.f32 %v2096, 1.0
    %v2098 = vrcp.pop %v2097
    %v2099 = vmul.f32 1.0, %v2098
    %v2100 = vadd.f32 %v2009, %v2049
    %v2101 = vxor.u32 %v2100, 2147483648
    %v2102 = vmul.f32 %v2101, 1.442695
    %v2103 = vpow.pop %v2102
    %v2104 = vadd.f32 %v2103, 1.0
    %v2105 = vrcp.pop %v2104
    %v2106 = vmul.f32 1.0, %v2105
    %v2107 = vadd.f32 %v2088, %v488
    %v2108 = vmul.f32 %v2099, %v2107
    %v2109 = vadd.f32 %v2010, %v2108
    %v2110 = vtanh.pop %v2109
    %v2111 = vsub.f32 1.0, %v2106
    %v2112 = vmul.f32 %v2111, %v2110
    %v2113 = vmul.f32 %v2106, %v2007
    %v2114 = vadd.f32 %v2112, %v2113
    %v2115 = vld [vmem:[#allocation2 + $0x150] sm:$0xff]
    %v2116 = vld [vmem:[#allocation2 + $0x158] sm:$0xff]
    %v2117 = vld [vmem:[#allocation2 + $0x160] sm:$0xff]
    %v2118 = vpack.c.bf16 %v2114, %v2114
    %2119 = vmatprep.subr.bf16.mxu0 %v574
    %2120 = vmatpush1.bf16.msra.mxu0 %v573
    %2121 = vmatprep.subr.bf16.mxu0 %v577
    %2122 = vmatpush1.bf16.msra.mxu0 %v576
    %2123 = vmatprep.subr.bf16.mxu0 %v580
    %2124 = vmatpush1.bf16.msra.mxu0 %v579
    %2125 = vmatprep.subr.bf16.mxu0 %v583
    %2126 = vmatpush1.bf16.msra.mxu0 %v582
    %2127 = vmatprep.subr.bf16.mxu0 %v586
    %2128 = vmatpush1.bf16.msra.mxu0 %v585
    %2129 = vmatprep.subr.bf16.mxu0 %v589
    %2130 = vmatpush1.bf16.msra.mxu0 %v588
    %2131 = vmatprep.subr.bf16.mxu0 %v592
    %2132 = vmatpush1.bf16.msra.mxu0 %v591
    %2133 = vmatprep.subr.bf16.mxu0 %v595
    %2134 = vmatpush1.bf16.msra.mxu0 %v594
    %2135 = vmatprep.subr.bf16.mxu0 0
    %2136 = vmatpush1.bf16.msra.mxu0 0
    %2137 = vmatprep.subr.bf16.mxu0 0
    %2138 = vmatpush1.bf16.msra.mxu0 0
    %2139 = vmatprep.subr.bf16.mxu0 0
    %2140 = vmatpush1.bf16.msra.mxu0 0
    %2141 = vmatprep.subr.bf16.mxu0 0
    %2142 = vmatpush1.bf16.msra.mxu0 0
    %2143 = vmatprep.subr.bf16.mxu0 0
    %2144 = vmatpush1.bf16.msra.mxu0 0
    %2145 = vmatprep.subr.bf16.mxu0 0
    %2146 = vmatpush1.bf16.msra.mxu0 0
    %2147 = vmatprep.subr.bf16.mxu0 0
    %2148 = vmatpush1.bf16.msra.mxu0 0
    %2149 = vmatprep.subr.bf16.mxu0 0
    %2150 = vmatpush1.bf16.msra.mxu0 0
    %2151 = vmatprep.mubr.bf16.mxu0 0
    %2152 = vmatmul.mubr.bf16.gmra.mrb[0].mxu0 %v2118
    %v2153 = vpop.f32.mrb[0].mxu0
    %v2154 = vadd.f32 0.0, %v2153
    %v2155 = vpop.f32.mrb[0].mxu0
    %v2156 = vadd.f32 0.0, %v2155
    %v2157 = vpop.f32.mrb[0].mxu0
    %v2158 = vpop.f32.mrb[0].mxu0
    %2159 = vdwg.mxu0
    %2160 = vmatprep.subr.bf16.mxu0 0
    %2161 = vmatpush1.bf16.msra.mxu0 %v575
    %2162 = vmatprep.subr.bf16.mxu0 0
    %2163 = vmatpush1.bf16.msra.mxu0 %v578
    %2164 = vmatprep.subr.bf16.mxu0 0
    %2165 = vmatpush1.bf16.msra.mxu0 %v581
    %2166 = vmatprep.subr.bf16.mxu0 0
    %2167 = vmatpush1.bf16.msra.mxu0 %v584
    %2168 = vmatprep.subr.bf16.mxu0 0
    %2169 = vmatpush1.bf16.msra.mxu0 %v587
    %2170 = vmatprep.subr.bf16.mxu0 0
    %2171 = vmatpush1.bf16.msra.mxu0 %v590
    %2172 = vmatprep.subr.bf16.mxu0 0
    %2173 = vmatpush1.bf16.msra.mxu0 %v593
    %2174 = vmatprep.subr.bf16.mxu0 0
    %2175 = vmatpush1.bf16.msra.mxu0 %v596
    %2176 = vmatprep.subr.bf16.mxu0 0
    %2177 = vmatpush1.bf16.msra.mxu0 0
    %2178 = vmatprep.subr.bf16.mxu0 0
    %2179 = vmatpush1.bf16.msra.mxu0 0
    %2180 = vmatprep.subr.bf16.mxu0 0
    %2181 = vmatpush1.bf16.msra.mxu0 0
    %2182 = vmatprep.subr.bf16.mxu0 0
    %2183 = vmatpush1.bf16.msra.mxu0 0
    %2184 = vmatprep.subr.bf16.mxu0 0
    %2185 = vmatpush1.bf16.msra.mxu0 0
    %2186 = vmatprep.subr.bf16.mxu0 0
    %2187 = vmatpush1.bf16.msra.mxu0 0
    %2188 = vmatprep.subr.bf16.mxu0 0
    %2189 = vmatpush1.bf16.msra.mxu0 0
    %2190 = vmatprep.subr.bf16.mxu0 0
    %2191 = vmatpush1.bf16.msra.mxu0 0
    %2192 = vmatprep.mubr.bf16.mxu0 0
    %2193 = vmatmul.mubr.bf16.gmra.mrb[0].mxu0 %v2118
    %v2194 = vpop.f32.mrb[0].mxu0
    %v2195 = vadd.f32 0.0, %v2194
    %v2196 = vpop.f32.mrb[0].mxu0
    %v2197 = vpop.f32.mrb[0].mxu0
    %v2198 = vpop.f32.mrb[0].mxu0
    %2199 = vdwg.mxu0
    %v2200 = vadd.f32 %v2115, %v2154
    %v2201 = vxor.u32 %v2200, 2147483648
    %v2202 = vmul.f32 %v2201, 1.442695
    %v2203 = vpow.pop %v2202
    %v2204 = vadd.f32 %v2203, 1.0
    %v2205 = vrcp.pop %v2204
    %v2206 = vmul.f32 1.0, %v2205
    %v2207 = vadd.f32 %v2116, %v2156
    %v2208 = vxor.u32 %v2207, 2147483648
    %v2209 = vmul.f32 %v2208, 1.442695
    %v2210 = vpow.pop %v2209
    %v2211 = vadd.f32 %v2210, 1.0
    %v2212 = vrcp.pop %v2211
    %v2213 = vmul.f32 1.0, %v2212
    %v2214 = vadd.f32 %v2195, %v488
    %v2215 = vmul.f32 %v2206, %v2214
    %v2216 = vadd.f32 %v2117, %v2215
    %v2217 = vtanh.pop %v2216
    %v2218 = vsub.f32 1.0, %v2213
    %v2219 = vmul.f32 %v2218, %v2217
    %v2220 = vmul.f32 %v2213, %v2114
    %v2221 = vadd.f32 %v2219, %v2220
    %v2222 = vld [vmem:[#allocation2 + $0x168] sm:$0xff]
    %v2223 = vld [vmem:[#allocation2 + $0x170] sm:$0xff]
    %v2224 = vld [vmem:[#allocation2 + $0x178] sm:$0xff]
    %v2225 = vpack.c.bf16 %v2221, %v2221
    %2226 = vmatprep.subr.bf16.mxu0 %v574
    %2227 = vmatpush1.bf16.msra.mxu0 %v573
    %2228 = vmatprep.subr.bf16.mxu0 %v577
    %2229 = vmatpush1.bf16.msra.mxu0 %v576
    %2230 = vmatprep.subr.bf16.mxu0 %v580
    %2231 = vmatpush1.bf16.msra.mxu0 %v579
    %2232 = vmatprep.subr.bf16.mxu0 %v583
    %2233 = vmatpush1.bf16.msra.mxu0 %v582
    %2234 = vmatprep.subr.bf16.mxu0 %v586
    %2235 = vmatpush1.bf16.msra.mxu0 %v585
    %2236 = vmatprep.subr.bf16.mxu0 %v589
    %2237 = vmatpush1.bf16.msra.mxu0 %v588
    %2238 = vmatprep.subr.bf16.mxu0 %v592
    %2239 = vmatpush1.bf16.msra.mxu0 %v591
    %2240 = vmatprep.subr.bf16.mxu0 %v595
    %2241 = vmatpush1.bf16.msra.mxu0 %v594
    %2242 = vmatprep.subr.bf16.mxu0 0
    %2243 = vmatpush1.bf16.msra.mxu0 0
    %2244 = vmatprep.subr.bf16.mxu0 0
    %2245 = vmatpush1.bf16.msra.mxu0 0
    %2246 = vmatprep.subr.bf16.mxu0 0
    %2247 = vmatpush1.bf16.msra.mxu0 0
    %2248 = vmatprep.subr.bf16.mxu0 0
    %2249 = vmatpush1.bf16.msra.mxu0 0
    %2250 = vmatprep.subr.bf16.mxu0 0
    %2251 = vmatpush1.bf16.msra.mxu0 0
    %2252 = vmatprep.subr.bf16.mxu0 0
    %2253 = vmatpush1.bf16.msra.mxu0 0
    %2254 = vmatprep.subr.bf16.mxu0 0
    %2255 = vmatpush1.bf16.msra.mxu0 0
    %2256 = vmatprep.subr.bf16.mxu0 0
    %2257 = vmatpush1.bf16.msra.mxu0 0
    %2258 = vmatprep.mubr.bf16.mxu0 0
    %2259 = vmatmul.mubr.bf16.gmra.mrb[0].mxu0 %v2225
    %v2260 = vpop.f32.mrb[0].mxu0
    %v2261 = vadd.f32 0.0, %v2260
    %v2262 = vpop.f32.mrb[0].mxu0
    %v2263 = vadd.f32 0.0, %v2262
    %v2264 = vpop.f32.mrb[0].mxu0
    %v2265 = vpop.f32.mrb[0].mxu0
    %2266 = vdwg.mxu0
    %2267 = vmatprep.subr.bf16.mxu0 0
    %2268 = vmatpush1.bf16.msra.mxu0 %v575
    %2269 = vmatprep.subr.bf16.mxu0 0
    %2270 = vmatpush1.bf16.msra.mxu0 %v578
    %2271 = vmatprep.subr.bf16.mxu0 0
    %2272 = vmatpush1.bf16.msra.mxu0 %v581
    %2273 = vmatprep.subr.bf16.mxu0 0
    %2274 = vmatpush1.bf16.msra.mxu0 %v584
    %2275 = vmatprep.subr.bf16.mxu0 0
    %2276 = vmatpush1.bf16.msra.mxu0 %v587
    %2277 = vmatprep.subr.bf16.mxu0 0
    %2278 = vmatpush1.bf16.msra.mxu0 %v590
    %2279 = vmatprep.subr.bf16.mxu0 0
    %2280 = vmatpush1.bf16.msra.mxu0 %v593
    %2281 = vmatprep.subr.bf16.mxu0 0
    %2282 = vmatpush1.bf16.msra.mxu0 %v596
    %2283 = vmatprep.subr.bf16.mxu0 0
    %2284 = vmatpush1.bf16.msra.mxu0 0
    %2285 = vmatprep.subr.bf16.mxu0 0
    %2286 = vmatpush1.bf16.msra.mxu0 0
    %2287 = vmatprep.subr.bf16.mxu0 0
    %2288 = vmatpush1.bf16.msra.mxu0 0
    %2289 = vmatprep.subr.bf16.mxu0 0
    %2290 = vmatpush1.bf16.msra.mxu0 0
    %2291 = vmatprep.subr.bf16.mxu0 0
    %2292 = vmatpush1.bf16.msra.mxu0 0
    %2293 = vmatprep.subr.bf16.mxu0 0
    %2294 = vmatpush1.bf16.msra.mxu0 0
    %2295 = vmatprep.subr.bf16.mxu0 0
    %2296 = vmatpush1.bf16.msra.mxu0 0
    %2297 = vmatprep.subr.bf16.mxu0 0
    %2298 = vmatpush1.bf16.msra.mxu0 0
    %2299 = vmatprep.mubr.bf16.mxu0 0
    %2300 = vmatmul.mubr.bf16.gmra.mrb[0].mxu0 %v2225
    %v2301 = vpop.f32.mrb[0].mxu0
    %v2302 = vadd.f32 0.0, %v2301
    %v2303 = vpop.f32.mrb[0].mxu0
    %v2304 = vpop.f32.mrb[0].mxu0
    %v2305 = vpop.f32.mrb[0].mxu0
    %2306 = vdwg.mxu0
    %v2307 = vadd.f32 %v2222, %v2261
    %v2308 = vxor.u32 %v2307, 2147483648
    %v2309 = vmul.f32 %v2308, 1.442695
    %v2310 = vpow.pop %v2309
    %v2311 = vadd.f32 %v2310, 1.0
    %v2312 = vrcp.pop %v2311
    %v2313 = vmul.f32 1.0, %v2312
    %v2314 = vadd.f32 %v2223, %v2263
    %v2315 = vxor.u32 %v2314, 2147483648
    %v2316 = vmul.f32 %v2315, 1.442695
    %v2317 = vpow.pop %v2316
    %v2318 = vadd.f32 %v2317, 1.0
    %v2319 = vrcp.pop %v2318
    %v2320 = vmul.f32 1.0, %v2319
    %v2321 = vadd.f32 %v2302, %v488
    %v2322 = vmul.f32 %v2313, %v2321
    %v2323 = vadd.f32 %v2224, %v2322
    %v2324 = vtanh.pop %v2323
    %v2325 = vsub.f32 1.0, %v2320
    %v2326 = vmul.f32 %v2325, %v2324
    %v2327 = vmul.f32 %v2320, %v2221
    %v2328 = vadd.f32 %v2326, %v2327
    %v2329 = vld [vmem:[%s5] sm:$0xff]
    %v2330 = vld [vmem:[%s5 + $0x8] sm:$0xf]
    %v2331 = vld [vmem:[%s5 + $0xc] sm:$0xff]
    %v2332 = vld [vmem:[%s5 + $0x14] sm:$0xf]
    %v2333 = vld [vmem:[%s5 + $0x18] sm:$0x77]
    %v2334 = vld [vmem:[%s5 + $0x20] sm:$0x7]
    %v2335 = vld [vmem:[%s6] sm:$0x7]
    %v2337 = vlaneseq
    %v2338 = vshrl.u32 %v2337, 7
    %v2339 = vsub.s32 0, %v2338
    %v2340 = vrot.slane %v2335, %v2339
    %v2341 = vlaneseq
    %v2342 = vshrl.u32 %v2341, 7
    %v2343 = vsub.s32 1, %v2342
    %v2344 = vrot.slane %v2335, %v2343
    %v2345 = vlaneseq
    %v2346 = vshrl.u32 %v2345, 7
    %v2347 = vsub.s32 2, %v2346
    %v2348 = vrot.slane %v2335, %v2347
    %v2358 = vunpack.c.l.b16 %v2329
    %v2359 = vunpack.c.h.b16 %v2329
    %v2360 = vunpack.c.l.b16 %v2330
    %v2361 = vunpack.c.l.b16 %v2331
    %v2362 = vunpack.c.h.b16 %v2331
    %v2363 = vunpack.c.l.b16 %v2332
    %v2364 = vunpack.c.l.b16 %v2333
    %v2365 = vunpack.c.h.b16 %v2333
    %v2366 = vunpack.c.l.b16 %v2334
    %v2367 = vpack.c.b16 %v2361, %v2358
    %v2368 = vpack.c.b16 %v2362, %v2359
    %v2369 = vpack.c.b16 %v2363, %v2360
    %v2370 = vpack.c.b16 %v2364, %v2364
    %v2371 = vpack.c.b16 %v2365, %v2365
    %v2372 = vpack.c.b16 %v2366, %v2366
    %v2377 = vsel %vm158, %v70, 0
    %v2380 = vsel %vm183, %v2370, 0
    %v2383 = vsel %vm183, %v2371, 0
    %v2386 = vsel %vm183, %v2372, 0
    %2388 = vmatprep.subr.bf16.mxu0 %v2368
    %2389 = vmatpush1.bf16.msra.mxu0 %v2367
    %2390 = vmatprep.subr.bf16.mxu0 %v2383
    %2391 = vmatpush1.bf16.msra.mxu0 %v2380
    %2392 = vmatprep.subr.bf16.mxu0 0
    %2393 = vmatpush1.bf16.msra.mxu0 0
    %2394 = vmatprep.subr.bf16.mxu0 0
    %2395 = vmatpush1.bf16.msra.mxu0 0
    %2396 = vmatprep.subr.bf16.mxu0 0
    %2397 = vmatpush1.bf16.msra.mxu0 0
    %2398 = vmatprep.subr.bf16.mxu0 0
    %2399 = vmatpush1.bf16.msra.mxu0 0
    %2400 = vmatprep.subr.bf16.mxu0 0
    %2401 = vmatpush1.bf16.msra.mxu0 0
    %2402 = vmatprep.subr.bf16.mxu0 0
    %2403 = vmatpush1.bf16.msra.mxu0 0
    %2404 = vmatprep.subr.bf16.mxu0 0
    %2405 = vmatpush1.bf16.msra.mxu0 0
    %2406 = vmatprep.subr.bf16.mxu0 0
    %2407 = vmatpush1.bf16.msra.mxu0 0
    %2408 = vmatprep.subr.bf16.mxu0 0
    %2409 = vmatpush1.bf16.msra.mxu0 0
    %2410 = vmatprep.subr.bf16.mxu0 0
    %2411 = vmatpush1.bf16.msra.mxu0 0
    %2412 = vmatprep.subr.bf16.mxu0 0
    %2413 = vmatpush1.bf16.msra.mxu0 0
    %2414 = vmatprep.subr.bf16.mxu0 0
    %2415 = vmatpush1.bf16.msra.mxu0 0
    %2416 = vmatprep.subr.bf16.mxu0 0
    %2417 = vmatpush1.bf16.msra.mxu0 0
    %2418 = vmatprep.subr.bf16.mxu0 0
    %2419 = vmatpush1.bf16.msra.mxu0 0
    %2420 = vmatprep.mubr.bf16.mxu0 0
    %2421 = vmatmul.mubr.bf16.gmra.mrb[0].mxu0 %v2377
    %v2422 = vpop.f32.mrb[0].mxu0
    %v2423 = vadd.f32 %v2340, %v2422
    %v2424 = vpop.f32.mrb[0].mxu0
    %v2425 = vadd.f32 %v2344, %v2424
    %v2426 = vpop.f32.mrb[0].mxu0
    %v2427 = vpop.f32.mrb[0].mxu0
    %2428 = vdwg.mxu0
    %2429 = vmatprep.subr.bf16.mxu0 0
    %2430 = vmatpush1.bf16.msra.mxu0 %v2369
    %2431 = vmatprep.subr.bf16.mxu0 0
    %2432 = vmatpush1.bf16.msra.mxu0 %v2386
    %2433 = vmatprep.subr.bf16.mxu0 0
    %2434 = vmatpush1.bf16.msra.mxu0 0
    %2435 = vmatprep.subr.bf16.mxu0 0
    %2436 = vmatpush1.bf16.msra.mxu0 0
    %2437 = vmatprep.subr.bf16.mxu0 0
    %2438 = vmatpush1.bf16.msra.mxu0 0
    %2439 = vmatprep.subr.bf16.mxu0 0
    %2440 = vmatpush1.bf16.msra.mxu0 0
    %2441 = vmatprep.subr.bf16.mxu0 0
    %2442 = vmatpush1.bf16.msra.mxu0 0
    %2443 = vmatprep.subr.bf16.mxu0 0
    %2444 = vmatpush1.bf16.msra.mxu0 0
    %2445 = vmatprep.subr.bf16.mxu0 0
    %2446 = vmatpush1.bf16.msra.mxu0 0
    %2447 = vmatprep.subr.bf16.mxu0 0
    %2448 = vmatpush1.bf16.msra.mxu0 0
    %2449 = vmatprep.subr.bf16.mxu0 0
    %2450 = vmatpush1.bf16.msra.mxu0 0
    %2451 = vmatprep.subr.bf16.mxu0 0
    %2452 = vmatpush1.bf16.msra.mxu0 0
    %2453 = vmatprep.subr.bf16.mxu0 0
    %2454 = vmatpush1.bf16.msra.mxu0 0
    %2455 = vmatprep.subr.bf16.mxu0 0
    %2456 = vmatpush1.bf16.msra.mxu0 0
    %2457 = vmatprep.subr.bf16.mxu0 0
    %2458 = vmatpush1.bf16.msra.mxu0 0
    %2459 = vmatprep.subr.bf16.mxu0 0
    %2460 = vmatpush1.bf16.msra.mxu0 0
    %2461 = vmatprep.mubr.bf16.mxu0 0
    %2462 = vmatmul.mubr.bf16.gmra.mrb[0].mxu0 %v2377
    %v2463 = vpop.f32.mrb[0].mxu0
    %v2464 = vadd.f32 %v2348, %v2463
    %v2465 = vpop.f32.mrb[0].mxu0
    %v2466 = vpop.f32.mrb[0].mxu0
    %v2467 = vpop.f32.mrb[0].mxu0
    %2468 = vdwg.mxu0
    %v2469 = vxor.u32 %v2423, 2147483648
    %v2470 = vmul.f32 %v2469, 1.442695
    %v2471 = vpow.pop %v2470
    %v2472 = vadd.f32 %v2471, 1.0
    %v2473 = vrcp.pop %v2472
    %v2474 = vmul.f32 1.0, %v2473
    %v2475 = vxor.u32 %v2425, 2147483648
    %v2476 = vmul.f32 %v2475, 1.442695
    %v2477 = vpow.pop %v2476
    %v2478 = vadd.f32 %v2477, 1.0
    %v2479 = vrcp.pop %v2478
    %v2480 = vmul.f32 1.0, %v2479
    %v2481 = vld [vmem:[%s7] sm:$0x1]
    %v2483 = vlaneseq
    %v2484 = vshrl.u32 %v2483, 7
    %v2485 = vsub.s32 0, %v2484
    %v2486 = vrot.slane %v2481, %v2485
    %v2488 = vmul.f32 %v2474, %v2486
    %v2489 = vadd.f32 %v2464, %v2488
    %v2490 = vtanh.pop %v2489
    %v2491 = vsub.f32 1.0, %v2480
    %v2492 = vmul.f32 %v2491, %v2490
    %v2493 = vpack.c.bf16 %v2328, %v2328
    %v2494 = vld [vmem:[%s8] sm:$0xf]
    %v2495 = vld [vmem:[%s8 + $0x4] sm:$0xf]
    %v2496 = vld [vmem:[%s8 + $0x8] sm:$0xf]
    %v2497 = vld [vmem:[%s8 + $0xc] sm:$0xf]
    %v2498 = vld [vmem:[%s8 + $0x10] sm:$0xf]
    %v2499 = vld [vmem:[%s8 + $0x14] sm:$0xf]
    %v2500 = vld [vmem:[%s8 + $0x18] sm:$0xf]
    %v2501 = vld [vmem:[%s8 + $0x1c] sm:$0xf]
    %v2502 = vld [vmem:[%s8 + $0x20] sm:$0xf]
    %v2503 = vld [vmem:[%s8 + $0x24] sm:$0xf]
    %v2504 = vld [vmem:[%s8 + $0x28] sm:$0xf]
    %v2505 = vld [vmem:[%s8 + $0x2c] sm:$0xf]
    %v2506 = vld [vmem:[%s8 + $0x30] sm:$0xf]
    %v2507 = vld [vmem:[%s8 + $0x34] sm:$0xf]
    %v2508 = vld [vmem:[%s8 + $0x38] sm:$0xf]
    %v2509 = vld [vmem:[%s8 + $0x3c] sm:$0xf]
    %v2510 = vpack.c.bf16 %v2492, %v2492
    %s2511 = scalar_lea.vmem %s8, 64
    %v2512 = vld [vmem:[%s2511] sm:$0xf]
    %v2513 = vld [vmem:[%s2511 + $0x4] sm:$0xf]
    %v2514 = vld [vmem:[%s2511 + $0x8] sm:$0xf]
    %v2515 = vld [vmem:[%s2511 + $0xc] sm:$0xf]
    %v2516 = vld [vmem:[%s2511 + $0x10] sm:$0xf]
    %v2517 = vld [vmem:[%s2511 + $0x14] sm:$0xf]
    %v2518 = vld [vmem:[%s2511 + $0x18] sm:$0xf]
    %v2519 = vld [vmem:[%s2511 + $0x1c] sm:$0xf]
    %v2520 = vld [vmem:[%s2511 + $0x20] sm:$0xf]
    %v2521 = vld [vmem:[%s2511 + $0x24] sm:$0xf]
    %v2522 = vld [vmem:[%s2511 + $0x28] sm:$0xf]
    %v2523 = vld [vmem:[%s2511 + $0x2c] sm:$0xf]
    %v2524 = vld [vmem:[%s2511 + $0x30] sm:$0xf]
    %v2525 = vld [vmem:[%s2511 + $0x34] sm:$0xf]
    %v2526 = vld [vmem:[%s2511 + $0x38] sm:$0xf]
    %v2527 = vld [vmem:[%s2511 + $0x3c] sm:$0xf]
    %v2544 = vunpack.c.l.b16 %v2512
    %v2545 = vunpack.c.l.b16 %v2513
    %v2546 = vunpack.c.l.b16 %v2514
    %v2547 = vunpack.c.l.b16 %v2515
    %v2548 = vunpack.c.l.b16 %v2516
    %v2549 = vunpack.c.l.b16 %v2517
    %v2550 = vunpack.c.l.b16 %v2518
    %v2551 = vunpack.c.l.b16 %v2519
    %v2552 = vunpack.c.l.b16 %v2520
    %v2553 = vunpack.c.l.b16 %v2521
    %v2554 = vunpack.c.l.b16 %v2522
    %v2555 = vunpack.c.l.b16 %v2523
    %v2556 = vunpack.c.l.b16 %v2524
    %v2557 = vunpack.c.l.b16 %v2525
    %v2558 = vunpack.c.l.b16 %v2526
    %v2559 = vunpack.c.l.b16 %v2527
    %v2560 = vpack.c.b16 %v2545, %v2544
    %v2561 = vpack.c.b16 %v2547, %v2546
    %v2562 = vpack.c.b16 %v2549, %v2548
    %v2563 = vpack.c.b16 %v2551, %v2550
    %v2564 = vpack.c.b16 %v2553, %v2552
    %v2565 = vpack.c.b16 %v2555, %v2554
    %v2566 = vpack.c.b16 %v2557, %v2556
    %v2567 = vpack.c.b16 %v2559, %v2558
    %2576 = vmatprep.subr.bf16.mxu0 0
    %2577 = vmatpush1.bf16.msra.mxu0 %v2560
    %2578 = vmatprep.subr.bf16.mxu0 0
    %2579 = vmatpush1.bf16.msra.mxu0 %v2561
    %2580 = vmatprep.subr.bf16.mxu0 0
    %2581 = vmatpush1.bf16.msra.mxu0 %v2562
    %2582 = vmatprep.subr.bf16.mxu0 0
    %2583 = vmatpush1.bf16.msra.mxu0 %v2563
    %2584 = vmatprep.subr.bf16.mxu0 0
    %2585 = vmatpush1.bf16.msra.mxu0 %v2564
    %2586 = vmatprep.subr.bf16.mxu0 0
    %2587 = vmatpush1.bf16.msra.mxu0 %v2565
    %2588 = vmatprep.subr.bf16.mxu0 0
    %2589 = vmatpush1.bf16.msra.mxu0 %v2566
    %2590 = vmatprep.subr.bf16.mxu0 0
    %2591 = vmatpush1.bf16.msra.mxu0 %v2567
    %2592 = vmatprep.subr.bf16.mxu0 0
    %2593 = vmatpush1.bf16.msra.mxu0 0
    %2594 = vmatprep.subr.bf16.mxu0 0
    %2595 = vmatpush1.bf16.msra.mxu0 0
    %2596 = vmatprep.subr.bf16.mxu0 0
    %2597 = vmatpush1.bf16.msra.mxu0 0
    %2598 = vmatprep.subr.bf16.mxu0 0
    %2599 = vmatpush1.bf16.msra.mxu0 0
    %2600 = vmatprep.subr.bf16.mxu0 0
    %2601 = vmatpush1.bf16.msra.mxu0 0
    %2602 = vmatprep.subr.bf16.mxu0 0
    %2603 = vmatpush1.bf16.msra.mxu0 0
    %2604 = vmatprep.subr.bf16.mxu0 0
    %2605 = vmatpush1.bf16.msra.mxu0 0
    %2606 = vmatprep.subr.bf16.mxu0 0
    %2607 = vmatpush1.bf16.msra.mxu0 0
    %2608 = vmatprep.mubr.bf16.mxu0 0
    %2609 = vmatmul.mubr.bf16.gmra.mrb[0].mxu0 %v2510
    %v2610 = vpop.f32.mrb[0].mxu0
    %v2611 = vadd.f32 0.0, %v2610
    %v2612 = vpop.f32.mrb[0].mxu0
    %v2613 = vpop.f32.mrb[0].mxu0
    %v2614 = vpop.f32.mrb[0].mxu0
    %2615 = vdwg.mxu0
    %v2632 = vunpack.c.l.b16 %v2494
    %v2633 = vunpack.c.l.b16 %v2495
    %v2634 = vunpack.c.l.b16 %v2496
    %v2635 = vunpack.c.l.b16 %v2497
    %v2636 = vunpack.c.l.b16 %v2498
    %v2637 = vunpack.c.l.b16 %v2499
    %v2638 = vunpack.c.l.b16 %v2500
    %v2639 = vunpack.c.l.b16 %v2501
    %v2640 = vunpack.c.l.b16 %v2502
    %v2641 = vunpack.c.l.b16 %v2503
    %v2642 = vunpack.c.l.b16 %v2504
    %v2643 = vunpack.c.l.b16 %v2505
    %v2644 = vunpack.c.l.b16 %v2506
    %v2645 = vunpack.c.l.b16 %v2507
    %v2646 = vunpack.c.l.b16 %v2508
    %v2647 = vunpack.c.l.b16 %v2509
    %v2648 = vpack.c.b16 %v2633, %v2632
    %v2649 = vpack.c.b16 %v2635, %v2634
    %v2650 = vpack.c.b16 %v2637, %v2636
    %v2651 = vpack.c.b16 %v2639, %v2638
    %v2652 = vpack.c.b16 %v2641, %v2640
    %v2653 = vpack.c.b16 %v2643, %v2642
    %v2654 = vpack.c.b16 %v2645, %v2644
    %v2655 = vpack.c.b16 %v2647, %v2646
    %2664 = vmatprep.subr.bf16.mxu0 0
    %2665 = vmatpush1.bf16.msra.mxu0 %v2648
    %2666 = vmatprep.subr.bf16.mxu0 0
    %2667 = vmatpush1.bf16.msra.mxu0 %v2649
    %2668 = vmatprep.subr.bf16.mxu0 0
    %2669 = vmatpush1.bf16.msra.mxu0 %v2650
    %2670 = vmatprep.subr.bf16.mxu0 0
    %2671 = vmatpush1.bf16.msra.mxu0 %v2651
    %2672 = vmatprep.subr.bf16.mxu0 0
    %2673 = vmatpush1.bf16.msra.mxu0 %v2652
    %2674 = vmatprep.subr.bf16.mxu0 0
    %2675 = vmatpush1.bf16.msra.mxu0 %v2653
    %2676 = vmatprep.subr.bf16.mxu0 0
    %2677 = vmatpush1.bf16.msra.mxu0 %v2654
    %2678 = vmatprep.subr.bf16.mxu0 0
    %2679 = vmatpush1.bf16.msra.mxu0 %v2655
    %2680 = vmatprep.subr.bf16.mxu0 0
    %2681 = vmatpush1.bf16.msra.mxu0 0
    %2682 = vmatprep.subr.bf16.mxu0 0
    %2683 = vmatpush1.bf16.msra.mxu0 0
    %2684 = vmatprep.subr.bf16.mxu0 0
    %2685 = vmatpush1.bf16.msra.mxu0 0
    %2686 = vmatprep.subr.bf16.mxu0 0
    %2687 = vmatpush1.bf16.msra.mxu0 0
    %2688 = vmatprep.subr.bf16.mxu0 0
    %2689 = vmatpush1.bf16.msra.mxu0 0
    %2690 = vmatprep.subr.bf16.mxu0 0
    %2691 = vmatpush1.bf16.msra.mxu0 0
    %2692 = vmatprep.subr.bf16.mxu0 0
    %2693 = vmatpush1.bf16.msra.mxu0 0
    %2694 = vmatprep.subr.bf16.mxu0 0
    %2695 = vmatpush1.bf16.msra.mxu0 0
    %2696 = vmatprep.mubr.bf16.mxu0 0
    %2697 = vmatmul.mubr.bf16.gmra.mrb[0].mxu0 %v2493
    %v2698 = vpop.f32.mrb[0].mxu0
    %v2699 = vadd.f32 %v2611, %v2698
    %v2700 = vpop.f32.mrb[0].mxu0
    %v2701 = vpop.f32.mrb[0].mxu0
    %v2702 = vpop.f32.mrb[0].mxu0
    %2703 = vdwg.mxu0
    %v2704 = vld [vmem:[%s9] sm:$0x1]
    %v2706 = vlaneseq
    %v2707 = vshrl.u32 %v2706, 7
    %v2708 = vsub.s32 0, %v2707
    %v2709 = vrot.slane %v2704, %v2708
    %v2711 = vadd.f32 %v2699, %v2709
    %v2712 = vmax.f32 %v2711, 0.0
    %v2713 = vpack.c.bf16 %v2712, %v2712
    %v2714 = vld [vmem:[%s10] sm:$0xf]
    %v2715 = vld [vmem:[%s10 + $0x4] sm:$0xf]
    %v2716 = vld [vmem:[%s10 + $0x8] sm:$0xf]
    %v2717 = vld [vmem:[%s10 + $0xc] sm:$0xf]
    %v2718 = vld [vmem:[%s11] sm:$0x1]
    %v2720 = vlaneseq
    %v2721 = vshrl.u32 %v2720, 7
    %v2722 = vsub.s32 0, %v2721
    %v2723 = vrot.slane %v2718, %v2722
    %v2729 = vunpack.c.l.b16 %v2714
    %v2730 = vunpack.c.l.b16 %v2715
    %v2731 = vunpack.c.l.b16 %v2716
    %v2732 = vunpack.c.l.b16 %v2717
    %v2733 = vpack.c.b16 %v2730, %v2729
    %v2734 = vpack.c.b16 %v2732, %v2731
    %vm2737 = vcmask 261120
    %v2739 = vsel %vm2737, %v2713, 0
    %2741 = vmatprep.subr.bf16.mxu0 0
    %2742 = vmatpush1.bf16.msra.mxu0 %v2733
    %2743 = vmatprep.subr.bf16.mxu0 0
    %2744 = vmatpush1.bf16.msra.mxu0 %v2734
    %2745 = vmatprep.subr.bf16.mxu0 0
    %2746 = vmatpush1.bf16.msra.mxu0 0
    %2747 = vmatprep.subr.bf16.mxu0 0
    %2748 = vmatpush1.bf16.msra.mxu0 0
    %2749 = vmatprep.subr.bf16.mxu0 0
    %2750 = vmatpush1.bf16.msra.mxu0 0
    %2751 = vmatprep.subr.bf16.mxu0 0
    %2752 = vmatpush1.bf16.msra.mxu0 0
    %2753 = vmatprep.subr.bf16.mxu0 0
    %2754 = vmatpush1.bf16.msra.mxu0 0
    %2755 = vmatprep.subr.bf16.mxu0 0
    %2756 = vmatpush1.bf16.msra.mxu0 0
    %2757 = vmatprep.subr.bf16.mxu0 0
    %2758 = vmatpush1.bf16.msra.mxu0 0
    %2759 = vmatprep.subr.bf16.mxu0 0
    %2760 = vmatpush1.bf16.msra.mxu0 0
    %2761 = vmatprep.subr.bf16.mxu0 0
    %2762 = vmatpush1.bf16.msra.mxu0 0
    %2763 = vmatprep.subr.bf16.mxu0 0
    %2764 = vmatpush1.bf16.msra.mxu0 0
    %2765 = vmatprep.subr.bf16.mxu0 0
    %2766 = vmatpush1.bf16.msra.mxu0 0
    %2767 = vmatprep.subr.bf16.mxu0 0
    %2768 = vmatpush1.bf16.msra.mxu0 0
    %2769 = vmatprep.subr.bf16.mxu0 0
    %2770 = vmatpush1.bf16.msra.mxu0 0
    %2771 = vmatprep.subr.bf16.mxu0 0
    %2772 = vmatpush1.bf16.msra.mxu0 0
    %2773 = vmatprep.mubr.bf16.mxu0 0
    %2774 = vmatmul.mubr.bf16.gmra.mrb[0].mxu0 %v2739
    %v2775 = vpop.f32.mrb[0].mxu0
    %v2776 = vadd.f32 %v2723, %v2775
    %v2777 = vpop.f32.mrb[0].mxu0
    %v2778 = vpop.f32.mrb[0].mxu0
    %v2779 = vpop.f32.mrb[0].mxu0
    %2780 = vdwg.mxu0
    %vm2781 = vcmask 39936
    %2782 = vst.msk [vmem:[#allocation6] sm:$0xff] %vm2781, %v2776
    // Predicated region
    $region54: #{tpu_custom_call.1} parent=1 // pred_check
      _
    $region55: #{tpu_custom_call.1} parent=1 // pred_check_branch
      %2784 = sbr.rel (0) target = $region57
    $region56: #{tpu_custom_call.1} parent=1 // pred_region
      %s2786 = ssub.s32 128, 128
      %2787 = vsyncadd [#allocation5], %s2786
      %s2789 = sshll.u32 [#allocation6], 4
      %s2790 = int_to_ptr.vmem [resolvable:$true] %s2789
      %2792 = dma.vmem_to_hbm [thread:$0]  %s2790, 128, %s12, [#allocation5]
    $region57: #{tpu_custom_call.1} parent=1 // pred_fallthru
      _
    // Predicated region
    $region58: #{tpu_custom_call.1} parent=1 // pred_check
      _
    $region59: #{tpu_custom_call.1} parent=1 // pred_check_branch
      %2794 = sbr.rel (0) target = $region61
    $region60: #{tpu_custom_call.1} parent=1 // pred_region
      %2795 = dma.done [#allocation5], 128
    $region61: #{tpu_custom_call.1} parent=1 // pred_fallthru
      _
    %2796 = vsyncpa [#allocation4], 1
    %2797 = vsyncpa [#allocation5], 1

</llo_original>
